<compile_context>
chip_gen: v7x
topology: tpu7x:2x2x1
jax: 0.10.0
libtpu: 0.0.40
codegen_flags: <defaults>
</compile_context>

<pallas_src>
import math
import functools

import jax
import jax.numpy as jnp
from jax.experimental import pallas as pl
from jax.experimental.pallas import tpu as pltpu


# ----------------------------------------------------------------------------- kernel

def _layernorm(x, g, b, eps):
    mu = jnp.mean(x, axis=-1, keepdims=True)
    var = jnp.mean(jnp.square(x - mu), axis=-1, keepdims=True)
    return (x - mu) * jax.lax.rsqrt(var + eps) * g + b


def _encoder_kernel(
    ilens_ref,                                                   # scalar prefetch (SMEM)
    xs_ref, pe_ref, emb_w_ref, emb_b_ref, emb_g_ref, emb_beta_ref,
    ln1_g_ref, ln1_b_ref,
    wq_ref, bq_ref, wk_ref, bk_ref, wv_ref, bv_ref, wo_ref, bo_ref,
    ln2_g_ref, ln2_b_ref,
    ff_w1_ref, ff_b1_ref, ff_w2_ref, ff_b2_ref,
    after_g_ref, after_b_ref, kw_ref, kb_ref, query_ref,
    pred_w_ref, pred_b_ref,
    pooled_ref, logits_ref,
    x_scratch,
    *, B, T, num_heads, eps_embed, eps_ln,
):
    l = pl.program_id(0)
    D = pe_ref.shape[1]
    dk = D // num_heads
    att_scale = 1.0 / math.sqrt(dk)

    # ---- grid step 0: fused embed (Linear -> LayerNorm -> ReLU -> x*sqrt(D)+PE) ----
    @pl.when(l == 0)
    def _embed():
        h = jnp.dot(xs_ref[...], emb_w_ref[...],
                    preferred_element_type=jnp.float32) + emb_b_ref[...]
        h = _layernorm(h, emb_g_ref[...], emb_beta_ref[...], eps_embed)
        h = jnp.maximum(h, 0.0)
        pe = jnp.concatenate([pe_ref[...]] * B, axis=0)          # (B*T, D)
        x_scratch[...] = h * math.sqrt(D) + pe

    x = x_scratch[...]                                           # (B*T, D) f32

    # ---- self-attention sublayer (pre-norm, residual added) ----
    y = _layernorm(x, ln1_g_ref[0], ln1_b_ref[0], eps_ln)
    yb = y.astype(jnp.bfloat16)
    q_all = jnp.dot(yb, wq_ref[0], preferred_element_type=jnp.float32) + bq_ref[0]
    k_all = jnp.dot(yb, wk_ref[0], preferred_element_type=jnp.float32) + bk_ref[0]
    v_all = jnp.dot(yb, wv_ref[0], preferred_element_type=jnp.float32) + bv_ref[0]

    key_iota = jax.lax.broadcasted_iota(jnp.int32, (T, T), 1)    # key position index
    ctx_rows = []
    for b in range(B):                                           # static, small batch loop
        lb = ilens_ref[b]
        kmask = key_iota < lb                                    # (T, T) bool, True = attend
        kmask_f = kmask.astype(jnp.float32)
        q_b = q_all[b * T:(b + 1) * T].astype(jnp.bfloat16)
        k_b = k_all[b * T:(b + 1) * T].astype(jnp.bfloat16)
        v_b = v_all[b * T:(b + 1) * T].astype(jnp.bfloat16)
        head_ctx = []
        for h in range(num_heads):                               # static head loop
            sl = slice(h * dk, (h + 1) * dk)
            s = jax.lax.dot_general(
                q_b[:, sl], k_b[:, sl], (((1,), (1,)), ((), ())),
                preferred_element_type=jnp.float32) * att_scale  # (T, T) f32
            s = jnp.where(kmask, s, -1e30)
            m = jnp.max(s, axis=-1, keepdims=True)
            e = jnp.exp(s - m)
            p = e * pl.reciprocal(jnp.sum(e, axis=-1, keepdims=True), approx=True)
            p = p * kmask_f
            head_ctx.append(
                jnp.dot(p.astype(jnp.bfloat16), v_b[:, sl],
                        preferred_element_type=jnp.float32))     # (T, dk)
        ctx_rows.append(jnp.concatenate(head_ctx, axis=-1))      # (T, D)
    ctx_all = jnp.concatenate(ctx_rows, axis=0)                  # (B*T, D)
    # single output projection over all heads and batches, bias added once
    x = x + jnp.dot(ctx_all.astype(jnp.bfloat16), wo_ref[0],
                    preferred_element_type=jnp.float32) + bo_ref[0]

    # ---- position-wise feed-forward sublayer (pre-norm, residual added) ----
    y = _layernorm(x, ln2_g_ref[0], ln2_b_ref[0], eps_ln)
    hmid = jnp.maximum(
        jnp.dot(y.astype(jnp.bfloat16), ff_w1_ref[0],
                preferred_element_type=jnp.float32) + ff_b1_ref[0], 0.0)
    x = x + jnp.dot(hmid.astype(jnp.bfloat16), ff_w2_ref[0],
                    preferred_element_type=jnp.float32) + ff_b2_ref[0]
    x_scratch[...] = x

    # ---- last step: after_norm + query-attention pooling + pred projection ----
    @pl.when(l == pl.num_programs(0) - 1)
    def _final():
        xs_out = _layernorm(x, after_g_ref[...], after_b_ref[...], eps_ln)   # (B*T, D)
        keys = jnp.tanh(
            jnp.dot(xs_out.astype(jnp.bfloat16), kw_ref[...],
                    preferred_element_type=jnp.float32) + kb_ref[...])
        logit_t = jnp.sum(keys * query_ref[...], axis=-1, keepdims=True)     # (B*T, 1)
        pos_iota = jax.lax.broadcasted_iota(jnp.int32, (T, 1), 0)
        pooled_rows = []
        for b in range(B):
            lb = ilens_ref[b]
            mb = pos_iota < lb                                               # (T, 1) bool
            lg = jnp.where(mb, logit_t[b * T:(b + 1) * T], -1e30)
            mmax = jnp.max(lg, axis=0, keepdims=True)
            e = jnp.exp(lg - mmax)
            sc = e * pl.reciprocal(jnp.sum(e, axis=0, keepdims=True), approx=True)
            sc = sc * mb.astype(jnp.float32)
            pooled_rows.append(
                jnp.sum(sc * xs_out[b * T:(b + 1) * T], axis=0, keepdims=True))
        pooled = jnp.concatenate(pooled_rows, axis=0)                        # (B, D)
        pooled_ref[...] = pooled                                             # one dense store
        logits_ref[...] = (
            jnp.dot(pooled, pred_w_ref[...], preferred_element_type=jnp.float32)
            + pred_b_ref[...])


# ----------------------------------------------------------------------------- params / glue

def _linear_init(key, fan_in, fan_out):
    kw, kb = jax.random.split(key)
    bound = 1.0 / math.sqrt(fan_in)
    w = jax.random.uniform(kw, (fan_in, fan_out), jnp.float32, -bound, bound)
    b = jax.random.uniform(kb, (1, fan_out), jnp.float32, -bound, bound)
    return w, b


def init_params(key, idim, adim, heads, ffdim, nblocks, ntypes):
    keys = jax.random.split(key, 4 + nblocks)
    p = {}
    p["embed_w"], p["embed_b"] = _linear_init(keys[0], idim, adim)
    p["embed_g"], p["embed_beta"] = jnp.ones((1, adim)), jnp.zeros((1, adim))
    layers = []
    for i in range(nblocks):
        lk = jax.random.split(keys[4 + i], 6)
        layer = {
            "ln1_g": jnp.ones((1, adim)), "ln1_b": jnp.zeros((1, adim)),
            "ln2_g": jnp.ones((1, adim)), "ln2_b": jnp.zeros((1, adim)),
        }
        layer["wq"], layer["bq"] = _linear_init(lk[0], adim, adim)
        layer["wk"], layer["bk"] = _linear_init(lk[1], adim, adim)
        layer["wv"], layer["bv"] = _linear_init(lk[2], adim, adim)
        layer["wo"], layer["bo"] = _linear_init(lk[3], adim, adim)
        layer["ff_w1"], layer["ff_b1"] = _linear_init(lk[4], adim, ffdim)
        layer["ff_w2"], layer["ff_b2"] = _linear_init(lk[5], ffdim, adim)
        layers.append(layer)
    p["layers"] = layers
    p["after_g"], p["after_b"] = jnp.ones((1, adim)), jnp.zeros((1, adim))
    p["K_w"], p["K_b"] = _linear_init(keys[1], adim, adim)
    p["query"] = jax.random.uniform(keys[2], (1, adim), jnp.float32, 0.0, 1.0)
    p["pred_w"], p["pred_b"] = _linear_init(keys[3], adim, ntypes)
    return p


def _positional_encoding(T, d):
    pos = jnp.arange(T, dtype=jnp.float32)[:, None]
    div = jnp.exp(jnp.arange(0, d, 2, dtype=jnp.float32) * -(math.log(10000.0) / d))
    pe = jnp.zeros((T, d), jnp.float32)
    pe = pe.at[:, 0::2].set(jnp.sin(pos * div))
    pe = pe.at[:, 1::2].set(jnp.cos(pos * div))
    return pe


def sentence_encoder_forward(params, xs, ilens, *, num_heads):
    """reduce_character_embedding=True, pred_into_type=True path:
    returns (pooled_embedding (B, D), None, intotype_logits (B, ntypes))."""
    B, T, idim = xs.shape
    D = params["embed_w"].shape[1]
    L = len(params["layers"])
    ntypes = params["pred_w"].shape[1]
    bf16 = jnp.bfloat16

    def stack(name, dtype=jnp.float32):
        return jnp.stack([lyr[name] for lyr in params["layers"]], axis=0).astype(dtype)

    inputs = [
        xs.reshape(B * T, idim).astype(bf16),            # 1  activations (bf16 for MXU)
        _positional_encoding(T, D),                      # 2  PE, single (T, D) copy
        params["embed_w"].astype(bf16), params["embed_b"],
        params["embed_g"], params["embed_beta"],         # 3-6
        stack("ln1_g"), stack("ln1_b"),                  # 7-8   stacked per-layer params
        stack("wq", bf16), stack("bq"),                  # 9-10
        stack("wk", bf16), stack("bk"),                  # 11-12
        stack("wv", bf16), stack("bv"),                  # 13-14
        stack("wo", bf16), stack("bo"),                  # 15-16
        stack("ln2_g"), stack("ln2_b"),                  # 17-18
        stack("ff_w1", bf16), stack("ff_b1"),            # 19-20
        stack("ff_w2", bf16), stack("ff_b2"),            # 21-22
        params["after_g"], params["after_b"],            # 23-24
        params["K_w"].astype(bf16), params["K_b"],       # 25-26
        params["query"],                                 # 27
        params["pred_w"], params["pred_b"],              # 28-29
    ]

    def const_spec(arr):
        n = arr.ndim
        return pl.BlockSpec(arr.shape, lambda l, ilens_ref, n=n: (0,) * n)

    def layer_spec(arr):
        return pl.BlockSpec((1,) + arr.shape[1:], lambda l, ilens_ref: (l, 0, 0))

    n_head, n_layer = 6, 16
    in_specs = (
        [const_spec(a) for a in inputs[:n_head]]
        + [layer_spec(a) for a in inputs[n_head:n_head + n_layer]]
        + [const_spec(a) for a in inputs[n_head + n_layer:]]
    )

    grid_spec = pltpu.PrefetchScalarGridSpec(
        num_scalar_prefetch=1,
        grid=(L,),
        in_specs=in_specs,
        out_specs=[
            pl.BlockSpec((B, D), lambda l, ilens_ref: (0, 0)),
            pl.BlockSpec((B, ntypes), lambda l, ilens_ref: (0, 0)),
        ],
        scratch_shapes=[pltpu.VMEM((B * T, D), jnp.float32)],
    )

    kernel = functools.partial(
        _encoder_kernel, B=B, T=T, num_heads=num_heads,
        eps_embed=1e-5, eps_ln=1e-12)

    pooled, logits = pl.pallas_call(
        kernel,
        grid_spec=grid_spec,
        out_shape=(
            jax.ShapeDtypeStruct((B, D), jnp.float32),
            jax.ShapeDtypeStruct((B, ntypes), jnp.float32),
        ),
        compiler_params=pltpu.CompilerParams(
            dimension_semantics=("arbitrary",)),      # layer axis is sequential
    )(ilens.astype(jnp.int32), *inputs)

    return pooled, None, logits


# ----------------------------------------------------------------------------- main

if __name__ == "__main__":
    B, T, IDIM, ADIM, HEADS, FF, NBLOCKS, NTYPES = 2, 8, 16, 32, 4, 64, 2, 5
    key = jax.random.PRNGKey(0)
    kx, kp = jax.random.split(key)
    xs = jax.random.normal(kx, (B, T, IDIM), dtype=jnp.float32)
    ilens = jnp.array([8, 5], dtype=jnp.int32)
    params = init_params(kp, IDIM, ADIM, HEADS, FF, NBLOCKS, NTYPES)

    pooled, _, logits = sentence_encoder_forward(params, xs, ilens, num_heads=HEADS)
    jax.block_until_ready((pooled, logits))
    assert pooled.shape == (B, ADIM) and logits.shape == (B, NTYPES)
    print("KERNEL_OK")
</pallas_src>

<mosaic_0001>
module attributes {stable_mosaic.version = 11 : i64} {
  func.func @_encoder_kernel(%arg0: i32, %arg1: memref<2xi32, #tpu.memory_space<smem>>, %arg2: memref<16x16xbf16, #tpu.memory_space<vmem>>, %arg3: memref<8x32xf32, #tpu.memory_space<vmem>>, %arg4: memref<16x32xbf16, #tpu.memory_space<vmem>>, %arg5: memref<1x32xf32, #tpu.memory_space<vmem>>, %arg6: memref<1x32xf32, #tpu.memory_space<vmem>>, %arg7: memref<1x32xf32, #tpu.memory_space<vmem>>, %arg8: memref<1x1x32xf32, #tpu.memory_space<vmem>>, %arg9: memref<1x1x32xf32, #tpu.memory_space<vmem>>, %arg10: memref<1x32x32xbf16, #tpu.memory_space<vmem>>, %arg11: memref<1x1x32xf32, #tpu.memory_space<vmem>>, %arg12: memref<1x32x32xbf16, #tpu.memory_space<vmem>>, %arg13: memref<1x1x32xf32, #tpu.memory_space<vmem>>, %arg14: memref<1x32x32xbf16, #tpu.memory_space<vmem>>, %arg15: memref<1x1x32xf32, #tpu.memory_space<vmem>>, %arg16: memref<1x32x32xbf16, #tpu.memory_space<vmem>>, %arg17: memref<1x1x32xf32, #tpu.memory_space<vmem>>, %arg18: memref<1x1x32xf32, #tpu.memory_space<vmem>>, %arg19: memref<1x1x32xf32, #tpu.memory_space<vmem>>, %arg20: memref<1x32x64xbf16, #tpu.memory_space<vmem>>, %arg21: memref<1x1x64xf32, #tpu.memory_space<vmem>>, %arg22: memref<1x64x32xbf16, #tpu.memory_space<vmem>>, %arg23: memref<1x1x32xf32, #tpu.memory_space<vmem>>, %arg24: memref<1x32xf32, #tpu.memory_space<vmem>>, %arg25: memref<1x32xf32, #tpu.memory_space<vmem>>, %arg26: memref<32x32xbf16, #tpu.memory_space<vmem>>, %arg27: memref<1x32xf32, #tpu.memory_space<vmem>>, %arg28: memref<1x32xf32, #tpu.memory_space<vmem>>, %arg29: memref<32x5xf32, #tpu.memory_space<vmem>>, %arg30: memref<1x5xf32, #tpu.memory_space<vmem>>, %arg31: memref<2x32xf32, #tpu.memory_space<vmem>>, %arg32: memref<2x5xf32, #tpu.memory_space<vmem>>, %arg33: memref<16x32xf32, #tpu.memory_space<vmem>>) attributes {dimension_semantics = [#tpu.dimension_semantics<arbitrary>], iteration_bounds = array<i64: 2>, scalar_prefetch = 1 : i64, scratch_operands = 1 : i64, tpu.core_type = #tpu.core_type<tc>, window_params = [{pipeline_mode = #tpu.pipeline_mode<synchronous>, transform_indices = @transform_0, window_bounds = array<i64: 16, 16>}, {pipeline_mode = #tpu.pipeline_mode<synchronous>, transform_indices = @transform_1, window_bounds = array<i64: 8, 32>}, {pipeline_mode = #tpu.pipeline_mode<synchronous>, transform_indices = @transform_2, window_bounds = array<i64: 16, 32>}, {pipeline_mode = #tpu.pipeline_mode<synchronous>, transform_indices = @transform_3, window_bounds = array<i64: 1, 32>}, {pipeline_mode = #tpu.pipeline_mode<synchronous>, transform_indices = @transform_4, window_bounds = array<i64: 1, 32>}, {pipeline_mode = #tpu.pipeline_mode<synchronous>, transform_indices = @transform_5, window_bounds = array<i64: 1, 32>}, {transform_indices = @transform_6, window_bounds = array<i64: 1, 1, 32>}, {transform_indices = @transform_7, window_bounds = array<i64: 1, 1, 32>}, {transform_indices = @transform_8, window_bounds = array<i64: 1, 32, 32>}, {transform_indices = @transform_9, window_bounds = array<i64: 1, 1, 32>}, {transform_indices = @transform_10, window_bounds = array<i64: 1, 32, 32>}, {transform_indices = @transform_11, window_bounds = array<i64: 1, 1, 32>}, {transform_indices = @transform_12, window_bounds = array<i64: 1, 32, 32>}, {transform_indices = @transform_13, window_bounds = array<i64: 1, 1, 32>}, {transform_indices = @transform_14, window_bounds = array<i64: 1, 32, 32>}, {transform_indices = @transform_15, window_bounds = array<i64: 1, 1, 32>}, {transform_indices = @transform_16, window_bounds = array<i64: 1, 1, 32>}, {transform_indices = @transform_17, window_bounds = array<i64: 1, 1, 32>}, {transform_indices = @transform_18, window_bounds = array<i64: 1, 32, 64>}, {transform_indices = @transform_19, window_bounds = array<i64: 1, 1, 64>}, {transform_indices = @transform_20, window_bounds = array<i64: 1, 64, 32>}, {transform_indices = @transform_21, window_bounds = array<i64: 1, 1, 32>}, {pipeline_mode = #tpu.pipeline_mode<synchronous>, transform_indices = @transform_22, window_bounds = array<i64: 1, 32>}, {pipeline_mode = #tpu.pipeline_mode<synchronous>, transform_indices = @transform_23, window_bounds = array<i64: 1, 32>}, {pipeline_mode = #tpu.pipeline_mode<synchronous>, transform_indices = @transform_24, window_bounds = array<i64: 32, 32>}, {pipeline_mode = #tpu.pipeline_mode<synchronous>, transform_indices = @transform_25, window_bounds = array<i64: 1, 32>}, {pipeline_mode = #tpu.pipeline_mode<synchronous>, transform_indices = @transform_26, window_bounds = array<i64: 1, 32>}, {pipeline_mode = #tpu.pipeline_mode<synchronous>, transform_indices = @transform_27, window_bounds = array<i64: 32, 5>}, {pipeline_mode = #tpu.pipeline_mode<synchronous>, transform_indices = @transform_28, window_bounds = array<i64: 1, 5>}, {pipeline_mode = #tpu.pipeline_mode<synchronous>, transform_indices = @transform_29, window_bounds = array<i64: 2, 32>}, {pipeline_mode = #tpu.pipeline_mode<synchronous>, transform_indices = @transform_30, window_bounds = array<i64: 2, 5>}]} {
    %c0_i32 = arith.constant 0 : i32
    %0 = arith.cmpi eq, %arg0, %c0_i32 : i32
    %1 = arith.extui %0 : i1 to i32
    %c0_i32_0 = arith.constant 0 : i32
    %2 = arith.cmpi ne, %1, %c0_i32_0 : i32
    scf.if %2 {
      %c0_118 = arith.constant 0 : index
      %c0_119 = arith.constant 0 : index
      %304 = vector.load %arg2[%c0_118, %c0_119] : memref<16x16xbf16, #tpu.memory_space<vmem>>, vector<16x16xbf16>
      %c0_120 = arith.constant 0 : index
      %c0_121 = arith.constant 0 : index
      %305 = vector.load %arg4[%c0_120, %c0_121] : memref<16x32xbf16, #tpu.memory_space<vmem>>, vector<16x32xbf16>
      %cst_122 = arith.constant dense<0.000000e+00> : vector<16x32xf32>
      %306 = tpu.matmul %304, %305, %cst_122 {dimension_numbers = #tpu.dot_dimension_numbers<[1], [0], [0], [1], [0, 0, 1, 1], [], []>} : vector<16x16xbf16>, vector<16x32xbf16>, vector<16x32xf32> -> vector<16x32xf32>
      %c0_123 = arith.constant 0 : index
      %c0_124 = arith.constant 0 : index
      %307 = vector.load %arg5[%c0_123, %c0_124] : memref<1x32xf32, #tpu.memory_space<vmem>>, vector<1x32xf32>
      %308 = vector.broadcast %307 : vector<1x32xf32> to vector<16x32xf32>
      %309 = arith.addf %306, %308 : vector<16x32xf32>
      %c0_125 = arith.constant 0 : index
      %c0_126 = arith.constant 0 : index
      %310 = vector.load %arg6[%c0_125, %c0_126] : memref<1x32xf32, #tpu.memory_space<vmem>>, vector<1x32xf32>
      %c0_127 = arith.constant 0 : index
      %c0_128 = arith.constant 0 : index
      %311 = vector.load %arg7[%c0_127, %c0_128] : memref<1x32xf32, #tpu.memory_space<vmem>>, vector<1x32xf32>
      %cst_129 = arith.constant dense<0.000000e+00> : vector<16xf32>
      %312 = vector.multi_reduction <add>, %309, %cst_129 [1] : vector<16x32xf32> to vector<16xf32>
      %313 = vector.shape_cast %312 : vector<16xf32> to vector<16x1xf32>
      %cst_130 = arith.constant 3.200000e+01 : f32
      %314 = vector.broadcast %cst_130 : f32 to vector<16x1xf32>
      %315 = arith.divf %313, %314 : vector<16x1xf32>
      %316 = vector.broadcast %315 : vector<16x1xf32> to vector<16x32xf32>
      %317 = arith.subf %309, %316 : vector<16x32xf32>
      %318 = arith.mulf %317, %317 : vector<16x32xf32>
      %cst_131 = arith.constant dense<0.000000e+00> : vector<16xf32>
      %319 = vector.multi_reduction <add>, %318, %cst_131 [1] : vector<16x32xf32> to vector<16xf32>
      %320 = vector.shape_cast %319 : vector<16xf32> to vector<16x1xf32>
      %cst_132 = arith.constant 3.200000e+01 : f32
      %321 = vector.broadcast %cst_132 : f32 to vector<16x1xf32>
      %322 = arith.divf %320, %321 : vector<16x1xf32>
      %323 = vector.broadcast %315 : vector<16x1xf32> to vector<16x32xf32>
      %324 = arith.subf %309, %323 : vector<16x32xf32>
      %cst_133 = arith.constant 9.99999974E-6 : f32
      %325 = vector.broadcast %cst_133 : f32 to vector<16x1xf32>
      %326 = arith.addf %322, %325 : vector<16x1xf32>
      %327 = math.rsqrt %326 : vector<16x1xf32>
      %328 = vector.broadcast %327 : vector<16x1xf32> to vector<16x32xf32>
      %329 = arith.mulf %324, %328 : vector<16x32xf32>
      %330 = vector.broadcast %310 : vector<1x32xf32> to vector<16x32xf32>
      %331 = arith.mulf %329, %330 : vector<16x32xf32>
      %332 = vector.broadcast %311 : vector<1x32xf32> to vector<16x32xf32>
      %333 = arith.addf %331, %332 : vector<16x32xf32>
      %cst_134 = arith.constant 0.000000e+00 : f32
      %334 = vector.broadcast %cst_134 : f32 to vector<16x32xf32>
      %335 = arith.maximumf %333, %334 : vector<16x32xf32>
      %c0_135 = arith.constant 0 : index
      %c0_136 = arith.constant 0 : index
      %336 = vector.load %arg3[%c0_135, %c0_136] : memref<8x32xf32, #tpu.memory_space<vmem>>, vector<8x32xf32>
      %337 = tpu.concatenate %336, %336 in 0 : vector<8x32xf32>, vector<8x32xf32> -> vector<16x32xf32>
      %cst_137 = arith.constant 5.65685415 : f32
      %338 = vector.broadcast %cst_137 : f32 to vector<16x32xf32>
      %339 = arith.mulf %335, %338 : vector<16x32xf32>
      %340 = arith.addf %339, %337 : vector<16x32xf32>
      %c0_138 = arith.constant 0 : index
      %c0_139 = arith.constant 0 : index
      %341 = vector.load %arg33[%c0_138, %c0_139] : memref<16x32xf32, #tpu.memory_space<vmem>>, vector<16x32xf32>
      tpu.vector_store %arg33[%c0_138, %c0_139], %340 {strides = array<i32>} : memref<16x32xf32, #tpu.memory_space<vmem>>, vector<16x32xf32>,
    } else {
    }
    %c0 = arith.constant 0 : index
    %c0_1 = arith.constant 0 : index
    %3 = vector.load %arg33[%c0, %c0_1] : memref<16x32xf32, #tpu.memory_space<vmem>>, vector<16x32xf32>
    %c0_2 = arith.constant 0 : index
    %c0_3 = arith.constant 0 : index
    %c0_4 = arith.constant 0 : index
    %4 = vector.load %arg8[%c0_2, %c0_3, %c0_4] : memref<1x1x32xf32, #tpu.memory_space<vmem>>, vector<1x1x32xf32>
    %5 = vector.shape_cast %4 : vector<1x1x32xf32> to vector<1x32xf32>
    %c0_5 = arith.constant 0 : index
    %c0_6 = arith.constant 0 : index
    %c0_7 = arith.constant 0 : index
    %6 = vector.load %arg9[%c0_5, %c0_6, %c0_7] : memref<1x1x32xf32, #tpu.memory_space<vmem>>, vector<1x1x32xf32>
    %7 = vector.shape_cast %6 : vector<1x1x32xf32> to vector<1x32xf32>
    %cst = arith.constant dense<0.000000e+00> : vector<16xf32>
    %8 = vector.multi_reduction <add>, %3, %cst [1] : vector<16x32xf32> to vector<16xf32>
    %9 = vector.shape_cast %8 : vector<16xf32> to vector<16x1xf32>
    %cst_8 = arith.constant 3.200000e+01 : f32
    %10 = vector.broadcast %cst_8 : f32 to vector<16x1xf32>
    %11 = arith.divf %9, %10 : vector<16x1xf32>
    %12 = vector.broadcast %11 : vector<16x1xf32> to vector<16x32xf32>
    %13 = arith.subf %3, %12 : vector<16x32xf32>
    %14 = arith.mulf %13, %13 : vector<16x32xf32>
    %cst_9 = arith.constant dense<0.000000e+00> : vector<16xf32>
    %15 = vector.multi_reduction <add>, %14, %cst_9 [1] : vector<16x32xf32> to vector<16xf32>
    %16 = vector.shape_cast %15 : vector<16xf32> to vector<16x1xf32>
    %cst_10 = arith.constant 3.200000e+01 : f32
    %17 = vector.broadcast %cst_10 : f32 to vector<16x1xf32>
    %18 = arith.divf %16, %17 : vector<16x1xf32>
    %19 = vector.broadcast %11 : vector<16x1xf32> to vector<16x32xf32>
    %20 = arith.subf %3, %19 : vector<16x32xf32>
    %cst_11 = arith.constant 9.99999996E-13 : f32
    %21 = vector.broadcast %cst_11 : f32 to vector<16x1xf32>
    %22 = arith.addf %18, %21 : vector<16x1xf32>
    %23 = math.rsqrt %22 : vector<16x1xf32>
    %24 = vector.broadcast %23 : vector<16x1xf32> to vector<16x32xf32>
    %25 = arith.mulf %20, %24 : vector<16x32xf32>
    %26 = vector.broadcast %5 : vector<1x32xf32> to vector<16x32xf32>
    %27 = arith.mulf %25, %26 : vector<16x32xf32>
    %28 = vector.broadcast %7 : vector<1x32xf32> to vector<16x32xf32>
    %29 = arith.addf %27, %28 : vector<16x32xf32>
    %30 = arith.truncf %29 : vector<16x32xf32> to vector<16x32xbf16>
    %c0_12 = arith.constant 0 : index
    %c0_13 = arith.constant 0 : index
    %c0_14 = arith.constant 0 : index
    %31 = vector.load %arg10[%c0_12, %c0_13, %c0_14] : memref<1x32x32xbf16, #tpu.memory_space<vmem>>, vector<1x32x32xbf16>
    %32 = vector.shape_cast %31 : vector<1x32x32xbf16> to vector<32x32xbf16>
    %cst_15 = arith.constant dense<0.000000e+00> : vector<16x32xf32>
    %33 = tpu.matmul %30, %32, %cst_15 {dimension_numbers = #tpu.dot_dimension_numbers<[1], [0], [0], [1], [0, 0, 1, 1], [], []>} : vector<16x32xbf16>, vector<32x32xbf16>, vector<16x32xf32> -> vector<16x32xf32>
    %c0_16 = arith.constant 0 : index
    %c0_17 = arith.constant 0 : index
    %c0_18 = arith.constant 0 : index
    %34 = vector.load %arg11[%c0_16, %c0_17, %c0_18] : memref<1x1x32xf32, #tpu.memory_space<vmem>>, vector<1x1x32xf32>
    %35 = vector.shape_cast %34 : vector<1x1x32xf32> to vector<1x32xf32>
    %36 = vector.broadcast %35 : vector<1x32xf32> to vector<16x32xf32>
    %37 = arith.addf %33, %36 : vector<16x32xf32>
    %c0_19 = arith.constant 0 : index
    %c0_20 = arith.constant 0 : index
    %c0_21 = arith.constant 0 : index
    %38 = vector.load %arg12[%c0_19, %c0_20, %c0_21] : memref<1x32x32xbf16, #tpu.memory_space<vmem>>, vector<1x32x32xbf16>
    %39 = vector.shape_cast %38 : vector<1x32x32xbf16> to vector<32x32xbf16>
    %cst_22 = arith.constant dense<0.000000e+00> : vector<16x32xf32>
    %40 = tpu.matmul %30, %39, %cst_22 {dimension_numbers = #tpu.dot_dimension_numbers<[1], [0], [0], [1], [0, 0, 1, 1], [], []>} : vector<16x32xbf16>, vector<32x32xbf16>, vector<16x32xf32> -> vector<16x32xf32>
    %c0_23 = arith.constant 0 : index
    %c0_24 = arith.constant 0 : index
    %c0_25 = arith.constant 0 : index
    %41 = vector.load %arg13[%c0_23, %c0_24, %c0_25] : memref<1x1x32xf32, #tpu.memory_space<vmem>>, vector<1x1x32xf32>
    %42 = vector.shape_cast %41 : vector<1x1x32xf32> to vector<1x32xf32>
    %43 = vector.broadcast %42 : vector<1x32xf32> to vector<16x32xf32>
    %44 = arith.addf %40, %43 : vector<16x32xf32>
    %c0_26 = arith.constant 0 : index
    %c0_27 = arith.constant 0 : index
    %c0_28 = arith.constant 0 : index
    %45 = vector.load %arg14[%c0_26, %c0_27, %c0_28] : memref<1x32x32xbf16, #tpu.memory_space<vmem>>, vector<1x32x32xbf16>
    %46 = vector.shape_cast %45 : vector<1x32x32xbf16> to vector<32x32xbf16>
    %cst_29 = arith.constant dense<0.000000e+00> : vector<16x32xf32>
    %47 = tpu.matmul %30, %46, %cst_29 {dimension_numbers = #tpu.dot_dimension_numbers<[1], [0], [0], [1], [0, 0, 1, 1], [], []>} : vector<16x32xbf16>, vector<32x32xbf16>, vector<16x32xf32> -> vector<16x32xf32>
    %c0_30 = arith.constant 0 : index
    %c0_31 = arith.constant 0 : index
    %c0_32 = arith.constant 0 : index
    %48 = vector.load %arg15[%c0_30, %c0_31, %c0_32] : memref<1x1x32xf32, #tpu.memory_space<vmem>>, vector<1x1x32xf32>
    %49 = vector.shape_cast %48 : vector<1x1x32xf32> to vector<1x32xf32>
    %50 = vector.broadcast %49 : vector<1x32xf32> to vector<16x32xf32>
    %51 = arith.addf %47, %50 : vector<16x32xf32>
    %52 = tpu.iota {dimensions = array<i32: 1>} : vector<8x8xi32>
    %c0_33 = arith.constant 0 : index
    %53 = memref.load %arg1[%c0_33] : memref<2xi32, #tpu.memory_space<smem>>
    %54 = vector.broadcast %53 : i32 to vector<8x8xi32>
    %55 = arith.cmpi slt, %52, %54 : vector<8x8xi32>
    %56 = arith.extui %55 : vector<8x8xi1> to vector<8x8xi32>
    %57 = arith.sitofp %56 : vector<8x8xi32> to vector<8x8xf32>
    %58 = vector.extract_strided_slice %37 {offsets = [0, 0], sizes = [8, 32], strides = [1, 1]} : vector<16x32xf32> to vector<8x32xf32>
    %59 = arith.truncf %58 : vector<8x32xf32> to vector<8x32xbf16>
    %60 = vector.extract_strided_slice %44 {offsets = [0, 0], sizes = [8, 32], strides = [1, 1]} : vector<16x32xf32> to vector<8x32xf32>
    %61 = arith.truncf %60 : vector<8x32xf32> to vector<8x32xbf16>
    %62 = vector.extract_strided_slice %51 {offsets = [0, 0], sizes = [8, 32], strides = [1, 1]} : vector<16x32xf32> to vector<8x32xf32>
    %63 = arith.truncf %62 : vector<8x32xf32> to vector<8x32xbf16>
    %64 = vector.extract_strided_slice %59 {offsets = [0, 0], sizes = [8, 8], strides = [1, 1]} : vector<8x32xbf16> to vector<8x8xbf16>
    %65 = vector.extract_strided_slice %61 {offsets = [0, 0], sizes = [8, 8], strides = [1, 1]} : vector<8x32xbf16> to vector<8x8xbf16>
    %cst_34 = arith.constant dense<0.000000e+00> : vector<8x8xf32>
    %66 = tpu.matmul %64, %65, %cst_34 {dimension_numbers = #tpu.dot_dimension_numbers<[1], [1], [0], [0], [0, 0, 1, 0], [], []>} : vector<8x8xbf16>, vector<8x8xbf16>, vector<8x8xf32> -> vector<8x8xf32>
    %cst_35 = arith.constant 0.353553385 : f32
    %67 = vector.broadcast %cst_35 : f32 to vector<8x8xf32>
    %68 = arith.mulf %66, %67 : vector<8x8xf32>
    %cst_36 = arith.constant -1.000000e+30 : f32
    %69 = vector.broadcast %cst_36 : f32 to vector<8x8xf32>
    %70 = arith.select %55, %68, %69 : vector<8x8xi1>, vector<8x8xf32>
    %cst_37 = arith.constant dense<0xFF800000> : vector<8xf32>
    %71 = vector.multi_reduction <maximumf>, %70, %cst_37 [1] : vector<8x8xf32> to vector<8xf32>
    %72 = vector.shape_cast %71 : vector<8xf32> to vector<8x1xf32>
    %73 = vector.broadcast %72 : vector<8x1xf32> to vector<8x8xf32>
    %74 = arith.subf %70, %73 : vector<8x8xf32>
    %75 = math.exp %74 : vector<8x8xf32>
    %cst_38 = arith.constant dense<0.000000e+00> : vector<8xf32>
    %76 = vector.multi_reduction <add>, %75, %cst_38 [1] : vector<8x8xf32> to vector<8xf32>
    %77 = vector.shape_cast %76 : vector<8xf32> to vector<8x1xf32>
    %78 = tpu.reciprocal %77 {approx = true} : vector<8x1xf32> -> vector<8x1xf32>
    %79 = vector.broadcast %78 : vector<8x1xf32> to vector<8x8xf32>
    %80 = arith.mulf %75, %79 : vector<8x8xf32>
    %81 = arith.mulf %80, %57 : vector<8x8xf32>
    %82 = arith.truncf %81 : vector<8x8xf32> to vector<8x8xbf16>
    %83 = vector.extract_strided_slice %63 {offsets = [0, 0], sizes = [8, 8], strides = [1, 1]} : vector<8x32xbf16> to vector<8x8xbf16>
    %cst_39 = arith.constant dense<0.000000e+00> : vector<8x8xf32>
    %84 = tpu.matmul %82, %83, %cst_39 {dimension_numbers = #tpu.dot_dimension_numbers<[1], [0], [0], [1], [0, 0, 1, 1], [], []>} : vector<8x8xbf16>, vector<8x8xbf16>, vector<8x8xf32> -> vector<8x8xf32>
    %85 = vector.extract_strided_slice %59 {offsets = [0, 8], sizes = [8, 8], strides = [1, 1]} : vector<8x32xbf16> to vector<8x8xbf16>
    %86 = vector.extract_strided_slice %61 {offsets = [0, 8], sizes = [8, 8], strides = [1, 1]} : vector<8x32xbf16> to vector<8x8xbf16>
    %cst_40 = arith.constant dense<0.000000e+00> : vector<8x8xf32>
    %87 = tpu.matmul %85, %86, %cst_40 {dimension_numbers = #tpu.dot_dimension_numbers<[1], [1], [0], [0], [0, 0, 1, 0], [], []>} : vector<8x8xbf16>, vector<8x8xbf16>, vector<8x8xf32> -> vector<8x8xf32>
    %cst_41 = arith.constant 0.353553385 : f32
    %88 = vector.broadcast %cst_41 : f32 to vector<8x8xf32>
    %89 = arith.mulf %87, %88 : vector<8x8xf32>
    %cst_42 = arith.constant -1.000000e+30 : f32
    %90 = vector.broadcast %cst_42 : f32 to vector<8x8xf32>
    %91 = arith.select %55, %89, %90 : vector<8x8xi1>, vector<8x8xf32>
    %cst_43 = arith.constant dense<0xFF800000> : vector<8xf32>
    %92 = vector.multi_reduction <maximumf>, %91, %cst_43 [1] : vector<8x8xf32> to vector<8xf32>
    %93 = vector.shape_cast %92 : vector<8xf32> to vector<8x1xf32>
    %94 = vector.broadcast %93 : vector<8x1xf32> to vector<8x8xf32>
    %95 = arith.subf %91, %94 : vector<8x8xf32>
    %96 = math.exp %95 : vector<8x8xf32>
    %cst_44 = arith.constant dense<0.000000e+00> : vector<8xf32>
    %97 = vector.multi_reduction <add>, %96, %cst_44 [1] : vector<8x8xf32> to vector<8xf32>
    %98 = vector.shape_cast %97 : vector<8xf32> to vector<8x1xf32>
    %99 = tpu.reciprocal %98 {approx = true} : vector<8x1xf32> -> vector<8x1xf32>
    %100 = vector.broadcast %99 : vector<8x1xf32> to vector<8x8xf32>
    %101 = arith.mulf %96, %100 : vector<8x8xf32>
    %102 = arith.mulf %101, %57 : vector<8x8xf32>
    %103 = arith.truncf %102 : vector<8x8xf32> to vector<8x8xbf16>
    %104 = vector.extract_strided_slice %63 {offsets = [0, 8], sizes = [8, 8], strides = [1, 1]} : vector<8x32xbf16> to vector<8x8xbf16>
    %cst_45 = arith.constant dense<0.000000e+00> : vector<8x8xf32>
    %105 = tpu.matmul %103, %104, %cst_45 {dimension_numbers = #tpu.dot_dimension_numbers<[1], [0], [0], [1], [0, 0, 1, 1], [], []>} : vector<8x8xbf16>, vector<8x8xbf16>, vector<8x8xf32> -> vector<8x8xf32>
    %106 = vector.extract_strided_slice %59 {offsets = [0, 16], sizes = [8, 8], strides = [1, 1]} : vector<8x32xbf16> to vector<8x8xbf16>
    %107 = vector.extract_strided_slice %61 {offsets = [0, 16], sizes = [8, 8], strides = [1, 1]} : vector<8x32xbf16> to vector<8x8xbf16>
    %cst_46 = arith.constant dense<0.000000e+00> : vector<8x8xf32>
    %108 = tpu.matmul %106, %107, %cst_46 {dimension_numbers = #tpu.dot_dimension_numbers<[1], [1], [0], [0], [0, 0, 1, 0], [], []>} : vector<8x8xbf16>, vector<8x8xbf16>, vector<8x8xf32> -> vector<8x8xf32>
    %cst_47 = arith.constant 0.353553385 : f32
    %109 = vector.broadcast %cst_47 : f32 to vector<8x8xf32>
    %110 = arith.mulf %108, %109 : vector<8x8xf32>
    %cst_48 = arith.constant -1.000000e+30 : f32
    %111 = vector.broadcast %cst_48 : f32 to vector<8x8xf32>
    %112 = arith.select %55, %110, %111 : vector<8x8xi1>, vector<8x8xf32>
    %cst_49 = arith.constant dense<0xFF800000> : vector<8xf32>
    %113 = vector.multi_reduction <maximumf>, %112, %cst_49 [1] : vector<8x8xf32> to vector<8xf32>
    %114 = vector.shape_cast %113 : vector<8xf32> to vector<8x1xf32>
    %115 = vector.broadcast %114 : vector<8x1xf32> to vector<8x8xf32>
    %116 = arith.subf %112, %115 : vector<8x8xf32>
    %117 = math.exp %116 : vector<8x8xf32>
    %cst_50 = arith.constant dense<0.000000e+00> : vector<8xf32>
    %118 = vector.multi_reduction <add>, %117, %cst_50 [1] : vector<8x8xf32> to vector<8xf32>
    %119 = vector.shape_cast %118 : vector<8xf32> to vector<8x1xf32>
    %120 = tpu.reciprocal %119 {approx = true} : vector<8x1xf32> -> vector<8x1xf32>
    %121 = vector.broadcast %120 : vector<8x1xf32> to vector<8x8xf32>
    %122 = arith.mulf %117, %121 : vector<8x8xf32>
    %123 = arith.mulf %122, %57 : vector<8x8xf32>
    %124 = arith.truncf %123 : vector<8x8xf32> to vector<8x8xbf16>
    %125 = vector.extract_strided_slice %63 {offsets = [0, 16], sizes = [8, 8], strides = [1, 1]} : vector<8x32xbf16> to vector<8x8xbf16>
    %cst_51 = arith.constant dense<0.000000e+00> : vector<8x8xf32>
    %126 = tpu.matmul %124, %125, %cst_51 {dimension_numbers = #tpu.dot_dimension_numbers<[1], [0], [0], [1], [0, 0, 1, 1], [], []>} : vector<8x8xbf16>, vector<8x8xbf16>, vector<8x8xf32> -> vector<8x8xf32>
    %127 = vector.extract_strided_slice %59 {offsets = [0, 24], sizes = [8, 8], strides = [1, 1]} : vector<8x32xbf16> to vector<8x8xbf16>
    %128 = vector.extract_strided_slice %61 {offsets = [0, 24], sizes = [8, 8], strides = [1, 1]} : vector<8x32xbf16> to vector<8x8xbf16>
    %cst_52 = arith.constant dense<0.000000e+00> : vector<8x8xf32>
    %129 = tpu.matmul %127, %128, %cst_52 {dimension_numbers = #tpu.dot_dimension_numbers<[1], [1], [0], [0], [0, 0, 1, 0], [], []>} : vector<8x8xbf16>, vector<8x8xbf16>, vector<8x8xf32> -> vector<8x8xf32>
    %cst_53 = arith.constant 0.353553385 : f32
    %130 = vector.broadcast %cst_53 : f32 to vector<8x8xf32>
    %131 = arith.mulf %129, %130 : vector<8x8xf32>
    %cst_54 = arith.constant -1.000000e+30 : f32
    %132 = vector.broadcast %cst_54 : f32 to vector<8x8xf32>
    %133 = arith.select %55, %131, %132 : vector<8x8xi1>, vector<8x8xf32>
    %cst_55 = arith.constant dense<0xFF800000> : vector<8xf32>
    %134 = vector.multi_reduction <maximumf>, %133, %cst_55 [1] : vector<8x8xf32> to vector<8xf32>
    %135 = vector.shape_cast %134 : vector<8xf32> to vector<8x1xf32>
    %136 = vector.broadcast %135 : vector<8x1xf32> to vector<8x8xf32>
    %137 = arith.subf %133, %136 : vector<8x8xf32>
    %138 = math.exp %137 : vector<8x8xf32>
    %cst_56 = arith.constant dense<0.000000e+00> : vector<8xf32>
    %139 = vector.multi_reduction <add>, %138, %cst_56 [1] : vector<8x8xf32> to vector<8xf32>
    %140 = vector.shape_cast %139 : vector<8xf32> to vector<8x1xf32>
    %141 = tpu.reciprocal %140 {approx = true} : vector<8x1xf32> -> vector<8x1xf32>
    %142 = vector.broadcast %141 : vector<8x1xf32> to vector<8x8xf32>
    %143 = arith.mulf %138, %142 : vector<8x8xf32>
    %144 = arith.mulf %143, %57 : vector<8x8xf32>
    %145 = arith.truncf %144 : vector<8x8xf32> to vector<8x8xbf16>
    %146 = vector.extract_strided_slice %63 {offsets = [0, 24], sizes = [8, 8], strides = [1, 1]} : vector<8x32xbf16> to vector<8x8xbf16>
    %cst_57 = arith.constant dense<0.000000e+00> : vector<8x8xf32>
    %147 = tpu.matmul %145, %146, %cst_57 {dimension_numbers = #tpu.dot_dimension_numbers<[1], [0], [0], [1], [0, 0, 1, 1], [], []>} : vector<8x8xbf16>, vector<8x8xbf16>, vector<8x8xf32> -> vector<8x8xf32>
    %148 = tpu.concatenate %84, %105, %126, %147 in 1 : vector<8x8xf32>, vector<8x8xf32>, vector<8x8xf32>, vector<8x8xf32> -> vector<8x32xf32>
    %c1 = arith.constant 1 : index
    %149 = memref.load %arg1[%c1] : memref<2xi32, #tpu.memory_space<smem>>
    %150 = vector.broadcast %149 : i32 to vector<8x8xi32>
    %151 = arith.cmpi slt, %52, %150 : vector<8x8xi32>
    %152 = arith.extui %151 : vector<8x8xi1> to vector<8x8xi32>
    %153 = arith.sitofp %152 : vector<8x8xi32> to vector<8x8xf32>
    %154 = vector.extract_strided_slice %37 {offsets = [8, 0], sizes = [8, 32], strides = [1, 1]} : vector<16x32xf32> to vector<8x32xf32>
    %155 = arith.truncf %154 : vector<8x32xf32> to vector<8x32xbf16>
    %156 = vector.extract_strided_slice %44 {offsets = [8, 0], sizes = [8, 32], strides = [1, 1]} : vector<16x32xf32> to vector<8x32xf32>
    %157 = arith.truncf %156 : vector<8x32xf32> to vector<8x32xbf16>
    %158 = vector.extract_strided_slice %51 {offsets = [8, 0], sizes = [8, 32], strides = [1, 1]} : vector<16x32xf32> to vector<8x32xf32>
    %159 = arith.truncf %158 : vector<8x32xf32> to vector<8x32xbf16>
    %160 = vector.extract_strided_slice %155 {offsets = [0, 0], sizes = [8, 8], strides = [1, 1]} : vector<8x32xbf16> to vector<8x8xbf16>
    %161 = vector.extract_strided_slice %157 {offsets = [0, 0], sizes = [8, 8], strides = [1, 1]} : vector<8x32xbf16> to vector<8x8xbf16>
    %cst_58 = arith.constant dense<0.000000e+00> : vector<8x8xf32>
    %162 = tpu.matmul %160, %161, %cst_58 {dimension_numbers = #tpu.dot_dimension_numbers<[1], [1], [0], [0], [0, 0, 1, 0], [], []>} : vector<8x8xbf16>, vector<8x8xbf16>, vector<8x8xf32> -> vector<8x8xf32>
    %cst_59 = arith.constant 0.353553385 : f32
    %163 = vector.broadcast %cst_59 : f32 to vector<8x8xf32>
    %164 = arith.mulf %162, %163 : vector<8x8xf32>
    %cst_60 = arith.constant -1.000000e+30 : f32
    %165 = vector.broadcast %cst_60 : f32 to vector<8x8xf32>
    %166 = arith.select %151, %164, %165 : vector<8x8xi1>, vector<8x8xf32>
    %cst_61 = arith.constant dense<0xFF800000> : vector<8xf32>
    %167 = vector.multi_reduction <maximumf>, %166, %cst_61 [1] : vector<8x8xf32> to vector<8xf32>
    %168 = vector.shape_cast %167 : vector<8xf32> to vector<8x1xf32>
    %169 = vector.broadcast %168 : vector<8x1xf32> to vector<8x8xf32>
    %170 = arith.subf %166, %169 : vector<8x8xf32>
    %171 = math.exp %170 : vector<8x8xf32>
    %cst_62 = arith.constant dense<0.000000e+00> : vector<8xf32>
    %172 = vector.multi_reduction <add>, %171, %cst_62 [1] : vector<8x8xf32> to vector<8xf32>
    %173 = vector.shape_cast %172 : vector<8xf32> to vector<8x1xf32>
    %174 = tpu.reciprocal %173 {approx = true} : vector<8x1xf32> -> vector<8x1xf32>
    %175 = vector.broadcast %174 : vector<8x1xf32> to vector<8x8xf32>
    %176 = arith.mulf %171, %175 : vector<8x8xf32>
    %177 = arith.mulf %176, %153 : vector<8x8xf32>
    %178 = arith.truncf %177 : vector<8x8xf32> to vector<8x8xbf16>
    %179 = vector.extract_strided_slice %159 {offsets = [0, 0], sizes = [8, 8], strides = [1, 1]} : vector<8x32xbf16> to vector<8x8xbf16>
    %cst_63 = arith.constant dense<0.000000e+00> : vector<8x8xf32>
    %180 = tpu.matmul %178, %179, %cst_63 {dimension_numbers = #tpu.dot_dimension_numbers<[1], [0], [0], [1], [0, 0, 1, 1], [], []>} : vector<8x8xbf16>, vector<8x8xbf16>, vector<8x8xf32> -> vector<8x8xf32>
    %181 = vector.extract_strided_slice %155 {offsets = [0, 8], sizes = [8, 8], strides = [1, 1]} : vector<8x32xbf16> to vector<8x8xbf16>
    %182 = vector.extract_strided_slice %157 {offsets = [0, 8], sizes = [8, 8], strides = [1, 1]} : vector<8x32xbf16> to vector<8x8xbf16>
    %cst_64 = arith.constant dense<0.000000e+00> : vector<8x8xf32>
    %183 = tpu.matmul %181, %182, %cst_64 {dimension_numbers = #tpu.dot_dimension_numbers<[1], [1], [0], [0], [0, 0, 1, 0], [], []>} : vector<8x8xbf16>, vector<8x8xbf16>, vector<8x8xf32> -> vector<8x8xf32>
    %cst_65 = arith.constant 0.353553385 : f32
    %184 = vector.broadcast %cst_65 : f32 to vector<8x8xf32>
    %185 = arith.mulf %183, %184 : vector<8x8xf32>
    %cst_66 = arith.constant -1.000000e+30 : f32
    %186 = vector.broadcast %cst_66 : f32 to vector<8x8xf32>
    %187 = arith.select %151, %185, %186 : vector<8x8xi1>, vector<8x8xf32>
    %cst_67 = arith.constant dense<0xFF800000> : vector<8xf32>
    %188 = vector.multi_reduction <maximumf>, %187, %cst_67 [1] : vector<8x8xf32> to vector<8xf32>
    %189 = vector.shape_cast %188 : vector<8xf32> to vector<8x1xf32>
    %190 = vector.broadcast %189 : vector<8x1xf32> to vector<8x8xf32>
    %191 = arith.subf %187, %190 : vector<8x8xf32>
    %192 = math.exp %191 : vector<8x8xf32>
    %cst_68 = arith.constant dense<0.000000e+00> : vector<8xf32>
    %193 = vector.multi_reduction <add>, %192, %cst_68 [1] : vector<8x8xf32> to vector<8xf32>
    %194 = vector.shape_cast %193 : vector<8xf32> to vector<8x1xf32>
    %195 = tpu.reciprocal %194 {approx = true} : vector<8x1xf32> -> vector<8x1xf32>
    %196 = vector.broadcast %195 : vector<8x1xf32> to vector<8x8xf32>
    %197 = arith.mulf %192, %196 : vector<8x8xf32>
    %198 = arith.mulf %197, %153 : vector<8x8xf32>
    %199 = arith.truncf %198 : vector<8x8xf32> to vector<8x8xbf16>
    %200 = vector.extract_strided_slice %159 {offsets = [0, 8], sizes = [8, 8], strides = [1, 1]} : vector<8x32xbf16> to vector<8x8xbf16>
    %cst_69 = arith.constant dense<0.000000e+00> : vector<8x8xf32>
    %201 = tpu.matmul %199, %200, %cst_69 {dimension_numbers = #tpu.dot_dimension_numbers<[1], [0], [0], [1], [0, 0, 1, 1], [], []>} : vector<8x8xbf16>, vector<8x8xbf16>, vector<8x8xf32> -> vector<8x8xf32>
    %202 = vector.extract_strided_slice %155 {offsets = [0, 16], sizes = [8, 8], strides = [1, 1]} : vector<8x32xbf16> to vector<8x8xbf16>
    %203 = vector.extract_strided_slice %157 {offsets = [0, 16], sizes = [8, 8], strides = [1, 1]} : vector<8x32xbf16> to vector<8x8xbf16>
    %cst_70 = arith.constant dense<0.000000e+00> : vector<8x8xf32>
    %204 = tpu.matmul %202, %203, %cst_70 {dimension_numbers = #tpu.dot_dimension_numbers<[1], [1], [0], [0], [0, 0, 1, 0], [], []>} : vector<8x8xbf16>, vector<8x8xbf16>, vector<8x8xf32> -> vector<8x8xf32>
    %cst_71 = arith.constant 0.353553385 : f32
    %205 = vector.broadcast %cst_71 : f32 to vector<8x8xf32>
    %206 = arith.mulf %204, %205 : vector<8x8xf32>
    %cst_72 = arith.constant -1.000000e+30 : f32
    %207 = vector.broadcast %cst_72 : f32 to vector<8x8xf32>
    %208 = arith.select %151, %206, %207 : vector<8x8xi1>, vector<8x8xf32>
    %cst_73 = arith.constant dense<0xFF800000> : vector<8xf32>
    %209 = vector.multi_reduction <maximumf>, %208, %cst_73 [1] : vector<8x8xf32> to vector<8xf32>
    %210 = vector.shape_cast %209 : vector<8xf32> to vector<8x1xf32>
    %211 = vector.broadcast %210 : vector<8x1xf32> to vector<8x8xf32>
    %212 = arith.subf %208, %211 : vector<8x8xf32>
    %213 = math.exp %212 : vector<8x8xf32>
    %cst_74 = arith.constant dense<0.000000e+00> : vector<8xf32>
    %214 = vector.multi_reduction <add>, %213, %cst_74 [1] : vector<8x8xf32> to vector<8xf32>
    %215 = vector.shape_cast %214 : vector<8xf32> to vector<8x1xf32>
    %216 = tpu.reciprocal %215 {approx = true} : vector<8x1xf32> -> vector<8x1xf32>
    %217 = vector.broadcast %216 : vector<8x1xf32> to vector<8x8xf32>
    %218 = arith.mulf %213, %217 : vector<8x8xf32>
    %219 = arith.mulf %218, %153 : vector<8x8xf32>
    %220 = arith.truncf %219 : vector<8x8xf32> to vector<8x8xbf16>
    %221 = vector.extract_strided_slice %159 {offsets = [0, 16], sizes = [8, 8], strides = [1, 1]} : vector<8x32xbf16> to vector<8x8xbf16>
    %cst_75 = arith.constant dense<0.000000e+00> : vector<8x8xf32>
    %222 = tpu.matmul %220, %221, %cst_75 {dimension_numbers = #tpu.dot_dimension_numbers<[1], [0], [0], [1], [0, 0, 1, 1], [], []>} : vector<8x8xbf16>, vector<8x8xbf16>, vector<8x8xf32> -> vector<8x8xf32>
    %223 = vector.extract_strided_slice %155 {offsets = [0, 24], sizes = [8, 8], strides = [1, 1]} : vector<8x32xbf16> to vector<8x8xbf16>
    %224 = vector.extract_strided_slice %157 {offsets = [0, 24], sizes = [8, 8], strides = [1, 1]} : vector<8x32xbf16> to vector<8x8xbf16>
    %cst_76 = arith.constant dense<0.000000e+00> : vector<8x8xf32>
    %225 = tpu.matmul %223, %224, %cst_76 {dimension_numbers = #tpu.dot_dimension_numbers<[1], [1], [0], [0], [0, 0, 1, 0], [], []>} : vector<8x8xbf16>, vector<8x8xbf16>, vector<8x8xf32> -> vector<8x8xf32>
    %cst_77 = arith.constant 0.353553385 : f32
    %226 = vector.broadcast %cst_77 : f32 to vector<8x8xf32>
    %227 = arith.mulf %225, %226 : vector<8x8xf32>
    %cst_78 = arith.constant -1.000000e+30 : f32
    %228 = vector.broadcast %cst_78 : f32 to vector<8x8xf32>
    %229 = arith.select %151, %227, %228 : vector<8x8xi1>, vector<8x8xf32>
    %cst_79 = arith.constant dense<0xFF800000> : vector<8xf32>
    %230 = vector.multi_reduction <maximumf>, %229, %cst_79 [1] : vector<8x8xf32> to vector<8xf32>
    %231 = vector.shape_cast %230 : vector<8xf32> to vector<8x1xf32>
    %232 = vector.broadcast %231 : vector<8x1xf32> to vector<8x8xf32>
    %233 = arith.subf %229, %232 : vector<8x8xf32>
    %234 = math.exp %233 : vector<8x8xf32>
    %cst_80 = arith.constant dense<0.000000e+00> : vector<8xf32>
    %235 = vector.multi_reduction <add>, %234, %cst_80 [1] : vector<8x8xf32> to vector<8xf32>
    %236 = vector.shape_cast %235 : vector<8xf32> to vector<8x1xf32>
    %237 = tpu.reciprocal %236 {approx = true} : vector<8x1xf32> -> vector<8x1xf32>
    %238 = vector.broadcast %237 : vector<8x1xf32> to vector<8x8xf32>
    %239 = arith.mulf %234, %238 : vector<8x8xf32>
    %240 = arith.mulf %239, %153 : vector<8x8xf32>
    %241 = arith.truncf %240 : vector<8x8xf32> to vector<8x8xbf16>
    %242 = vector.extract_strided_slice %159 {offsets = [0, 24], sizes = [8, 8], strides = [1, 1]} : vector<8x32xbf16> to vector<8x8xbf16>
    %cst_81 = arith.constant dense<0.000000e+00> : vector<8x8xf32>
    %243 = tpu.matmul %241, %242, %cst_81 {dimension_numbers = #tpu.dot_dimension_numbers<[1], [0], [0], [1], [0, 0, 1, 1], [], []>} : vector<8x8xbf16>, vector<8x8xbf16>, vector<8x8xf32> -> vector<8x8xf32>
    %244 = tpu.concatenate %180, %201, %222, %243 in 1 : vector<8x8xf32>, vector<8x8xf32>, vector<8x8xf32>, vector<8x8xf32> -> vector<8x32xf32>
    %245 = tpu.concatenate %148, %244 in 0 : vector<8x32xf32>, vector<8x32xf32> -> vector<16x32xf32>
    %246 = arith.truncf %245 : vector<16x32xf32> to vector<16x32xbf16>
    %c0_82 = arith.constant 0 : index
    %c0_83 = arith.constant 0 : index
    %c0_84 = arith.constant 0 : index
    %247 = vector.load %arg16[%c0_82, %c0_83, %c0_84] : memref<1x32x32xbf16, #tpu.memory_space<vmem>>, vector<1x32x32xbf16>
    %248 = vector.shape_cast %247 : vector<1x32x32xbf16> to vector<32x32xbf16>
    %cst_85 = arith.constant dense<0.000000e+00> : vector<16x32xf32>
    %249 = tpu.matmul %246, %248, %cst_85 {dimension_numbers = #tpu.dot_dimension_numbers<[1], [0], [0], [1], [0, 0, 1, 1], [], []>} : vector<16x32xbf16>, vector<32x32xbf16>, vector<16x32xf32> -> vector<16x32xf32>
    %250 = arith.addf %3, %249 : vector<16x32xf32>
    %c0_86 = arith.constant 0 : index
    %c0_87 = arith.constant 0 : index
    %c0_88 = arith.constant 0 : index
    %251 = vector.load %arg17[%c0_86, %c0_87, %c0_88] : memref<1x1x32xf32, #tpu.memory_space<vmem>>, vector<1x1x32xf32>
    %252 = vector.shape_cast %251 : vector<1x1x32xf32> to vector<1x32xf32>
    %253 = vector.broadcast %252 : vector<1x32xf32> to vector<16x32xf32>
    %254 = arith.addf %250, %253 : vector<16x32xf32>
    %c0_89 = arith.constant 0 : index
    %c0_90 = arith.constant 0 : index
    %c0_91 = arith.constant 0 : index
    %255 = vector.load %arg18[%c0_89, %c0_90, %c0_91] : memref<1x1x32xf32, #tpu.memory_space<vmem>>, vector<1x1x32xf32>
    %256 = vector.shape_cast %255 : vector<1x1x32xf32> to vector<1x32xf32>
    %c0_92 = arith.constant 0 : index
    %c0_93 = arith.constant 0 : index
    %c0_94 = arith.constant 0 : index
    %257 = vector.load %arg19[%c0_92, %c0_93, %c0_94] : memref<1x1x32xf32, #tpu.memory_space<vmem>>, vector<1x1x32xf32>
    %258 = vector.shape_cast %257 : vector<1x1x32xf32> to vector<1x32xf32>
    %cst_95 = arith.constant dense<0.000000e+00> : vector<16xf32>
    %259 = vector.multi_reduction <add>, %254, %cst_95 [1] : vector<16x32xf32> to vector<16xf32>
    %260 = vector.shape_cast %259 : vector<16xf32> to vector<16x1xf32>
    %cst_96 = arith.constant 3.200000e+01 : f32
    %261 = vector.broadcast %cst_96 : f32 to vector<16x1xf32>
    %262 = arith.divf %260, %261 : vector<16x1xf32>
    %263 = vector.broadcast %262 : vector<16x1xf32> to vector<16x32xf32>
    %264 = arith.subf %254, %263 : vector<16x32xf32>
    %265 = arith.mulf %264, %264 : vector<16x32xf32>
    %cst_97 = arith.constant dense<0.000000e+00> : vector<16xf32>
    %266 = vector.multi_reduction <add>, %265, %cst_97 [1] : vector<16x32xf32> to vector<16xf32>
    %267 = vector.shape_cast %266 : vector<16xf32> to vector<16x1xf32>
    %cst_98 = arith.constant 3.200000e+01 : f32
    %268 = vector.broadcast %cst_98 : f32 to vector<16x1xf32>
    %269 = arith.divf %267, %268 : vector<16x1xf32>
    %270 = vector.broadcast %262 : vector<16x1xf32> to vector<16x32xf32>
    %271 = arith.subf %254, %270 : vector<16x32xf32>
    %cst_99 = arith.constant 9.99999996E-13 : f32
    %272 = vector.broadcast %cst_99 : f32 to vector<16x1xf32>
    %273 = arith.addf %269, %272 : vector<16x1xf32>
    %274 = math.rsqrt %273 : vector<16x1xf32>
    %275 = vector.broadcast %274 : vector<16x1xf32> to vector<16x32xf32>
    %276 = arith.mulf %271, %275 : vector<16x32xf32>
    %277 = vector.broadcast %256 : vector<1x32xf32> to vector<16x32xf32>
    %278 = arith.mulf %276, %277 : vector<16x32xf32>
    %279 = vector.broadcast %258 : vector<1x32xf32> to vector<16x32xf32>
    %280 = arith.addf %278, %279 : vector<16x32xf32>
    %281 = arith.truncf %280 : vector<16x32xf32> to vector<16x32xbf16>
    %c0_100 = arith.constant 0 : index
    %c0_101 = arith.constant 0 : index
    %c0_102 = arith.constant 0 : index
    %282 = vector.load %arg20[%c0_100, %c0_101, %c0_102] : memref<1x32x64xbf16, #tpu.memory_space<vmem>>, vector<1x32x64xbf16>
    %283 = vector.shape_cast %282 : vector<1x32x64xbf16> to vector<32x64xbf16>
    %cst_103 = arith.constant dense<0.000000e+00> : vector<16x64xf32>
    %284 = tpu.matmul %281, %283, %cst_103 {dimension_numbers = #tpu.dot_dimension_numbers<[1], [0], [0], [1], [0, 0, 1, 1], [], []>} : vector<16x32xbf16>, vector<32x64xbf16>, vector<16x64xf32> -> vector<16x64xf32>
    %c0_104 = arith.constant 0 : index
    %c0_105 = arith.constant 0 : index
    %c0_106 = arith.constant 0 : index
    %285 = vector.load %arg21[%c0_104, %c0_105, %c0_106] : memref<1x1x64xf32, #tpu.memory_space<vmem>>, vector<1x1x64xf32>
    %286 = vector.shape_cast %285 : vector<1x1x64xf32> to vector<1x64xf32>
    %287 = vector.broadcast %286 : vector<1x64xf32> to vector<16x64xf32>
    %288 = arith.addf %284, %287 : vector<16x64xf32>
    %cst_107 = arith.constant 0.000000e+00 : f32
    %289 = vector.broadcast %cst_107 : f32 to vector<16x64xf32>
    %290 = arith.maximumf %288, %289 : vector<16x64xf32>
    %291 = arith.truncf %290 : vector<16x64xf32> to vector<16x64xbf16>
    %c0_108 = arith.constant 0 : index
    %c0_109 = arith.constant 0 : index
    %c0_110 = arith.constant 0 : index
    %292 = vector.load %arg22[%c0_108, %c0_109, %c0_110] : memref<1x64x32xbf16, #tpu.memory_space<vmem>>, vector<1x64x32xbf16>
    %293 = vector.shape_cast %292 : vector<1x64x32xbf16> to vector<64x32xbf16>
    %cst_111 = arith.constant dense<0.000000e+00> : vector<16x32xf32>
    %294 = tpu.matmul %291, %293, %cst_111 {dimension_numbers = #tpu.dot_dimension_numbers<[1], [0], [0], [1], [0, 0, 1, 1], [], []>} : vector<16x64xbf16>, vector<64x32xbf16>, vector<16x32xf32> -> vector<16x32xf32>
    %295 = arith.addf %254, %294 : vector<16x32xf32>
    %c0_112 = arith.constant 0 : index
    %c0_113 = arith.constant 0 : index
    %c0_114 = arith.constant 0 : index
    %296 = vector.load %arg23[%c0_112, %c0_113, %c0_114] : memref<1x1x32xf32, #tpu.memory_space<vmem>>, vector<1x1x32xf32>
    %297 = vector.shape_cast %296 : vector<1x1x32xf32> to vector<1x32xf32>
    %298 = vector.broadcast %297 : vector<1x32xf32> to vector<16x32xf32>
    %299 = arith.addf %295, %298 : vector<16x32xf32>
    %c0_115 = arith.constant 0 : index
    %c0_116 = arith.constant 0 : index
    %300 = vector.load %arg33[%c0_115, %c0_116] : memref<16x32xf32, #tpu.memory_space<vmem>>, vector<16x32xf32>
    tpu.vector_store %arg33[%c0_115, %c0_116], %299 {strides = array<i32>} : memref<16x32xf32, #tpu.memory_space<vmem>>, vector<16x32xf32>,
    %c1_i32 = arith.constant 1 : i32
    %301 = arith.cmpi eq, %arg0, %c1_i32 : i32
    %302 = arith.extui %301 : i1 to i32
    %c0_i32_117 = arith.constant 0 : i32
    %303 = arith.cmpi ne, %302, %c0_i32_117 : i32
    scf.if %303 {
      %c0_118 = arith.constant 0 : index
      %c0_119 = arith.constant 0 : index
      %304 = vector.load %arg24[%c0_118, %c0_119] : memref<1x32xf32, #tpu.memory_space<vmem>>, vector<1x32xf32>
      %c0_120 = arith.constant 0 : index
      %c0_121 = arith.constant 0 : index
      %305 = vector.load %arg25[%c0_120, %c0_121] : memref<1x32xf32, #tpu.memory_space<vmem>>, vector<1x32xf32>
      %cst_122 = arith.constant dense<0.000000e+00> : vector<16xf32>
      %306 = vector.multi_reduction <add>, %299, %cst_122 [1] : vector<16x32xf32> to vector<16xf32>
      %307 = vector.shape_cast %306 : vector<16xf32> to vector<16x1xf32>
      %cst_123 = arith.constant 3.200000e+01 : f32
      %308 = vector.broadcast %cst_123 : f32 to vector<16x1xf32>
      %309 = arith.divf %307, %308 : vector<16x1xf32>
      %310 = vector.broadcast %309 : vector<16x1xf32> to vector<16x32xf32>
      %311 = arith.subf %299, %310 : vector<16x32xf32>
      %312 = arith.mulf %311, %311 : vector<16x32xf32>
      %cst_124 = arith.constant dense<0.000000e+00> : vector<16xf32>
      %313 = vector.multi_reduction <add>, %312, %cst_124 [1] : vector<16x32xf32> to vector<16xf32>
      %314 = vector.shape_cast %313 : vector<16xf32> to vector<16x1xf32>
      %cst_125 = arith.constant 3.200000e+01 : f32
      %315 = vector.broadcast %cst_125 : f32 to vector<16x1xf32>
      %316 = arith.divf %314, %315 : vector<16x1xf32>
      %317 = vector.broadcast %309 : vector<16x1xf32> to vector<16x32xf32>
      %318 = arith.subf %299, %317 : vector<16x32xf32>
      %cst_126 = arith.constant 9.99999996E-13 : f32
      %319 = vector.broadcast %cst_126 : f32 to vector<16x1xf32>
      %320 = arith.addf %316, %319 : vector<16x1xf32>
      %321 = math.rsqrt %320 : vector<16x1xf32>
      %322 = vector.broadcast %321 : vector<16x1xf32> to vector<16x32xf32>
      %323 = arith.mulf %318, %322 : vector<16x32xf32>
      %324 = vector.broadcast %304 : vector<1x32xf32> to vector<16x32xf32>
      %325 = arith.mulf %323, %324 : vector<16x32xf32>
      %326 = vector.broadcast %305 : vector<1x32xf32> to vector<16x32xf32>
      %327 = arith.addf %325, %326 : vector<16x32xf32>
      %328 = arith.truncf %327 : vector<16x32xf32> to vector<16x32xbf16>
      %c0_127 = arith.constant 0 : index
      %c0_128 = arith.constant 0 : index
      %329 = vector.load %arg26[%c0_127, %c0_128] : memref<32x32xbf16, #tpu.memory_space<vmem>>, vector<32x32xbf16>
      %cst_129 = arith.constant dense<0.000000e+00> : vector<16x32xf32>
      %330 = tpu.matmul %328, %329, %cst_129 {dimension_numbers = #tpu.dot_dimension_numbers<[1], [0], [0], [1], [0, 0, 1, 1], [], []>} : vector<16x32xbf16>, vector<32x32xbf16>, vector<16x32xf32> -> vector<16x32xf32>
      %c0_130 = arith.constant 0 : index
      %c0_131 = arith.constant 0 : index
      %331 = vector.load %arg27[%c0_130, %c0_131] : memref<1x32xf32, #tpu.memory_space<vmem>>, vector<1x32xf32>
      %332 = vector.broadcast %331 : vector<1x32xf32> to vector<16x32xf32>
      %333 = arith.addf %330, %332 : vector<16x32xf32>
      %334 = math.tanh %333 : vector<16x32xf32>
      %c0_132 = arith.constant 0 : index
      %c0_133 = arith.constant 0 : index
      %335 = vector.load %arg28[%c0_132, %c0_133] : memref<1x32xf32, #tpu.memory_space<vmem>>, vector<1x32xf32>
      %336 = vector.broadcast %335 : vector<1x32xf32> to vector<16x32xf32>
      %337 = arith.mulf %334, %336 : vector<16x32xf32>
      %cst_134 = arith.constant dense<0.000000e+00> : vector<16xf32>
      %338 = vector.multi_reduction <add>, %337, %cst_134 [1] : vector<16x32xf32> to vector<16xf32>
      %339 = vector.shape_cast %338 : vector<16xf32> to vector<16x1xf32>
      %340 = tpu.iota {dimensions = array<i32: 0>} : vector<8x1xi32>
      %c0_135 = arith.constant 0 : index
      %341 = memref.load %arg1[%c0_135] : memref<2xi32, #tpu.memory_space<smem>>
      %342 = vector.broadcast %341 : i32 to vector<8x1xi32>
      %343 = arith.cmpi slt, %340, %342 : vector<8x1xi32>
      %344 = vector.extract_strided_slice %339 {offsets = [0, 0], sizes = [8, 1], strides = [1, 1]} : vector<16x1xf32> to vector<8x1xf32>
      %cst_136 = arith.constant -1.000000e+30 : f32
      %345 = vector.broadcast %cst_136 : f32 to vector<8x1xf32>
      %346 = arith.select %343, %344, %345 : vector<8x1xi1>, vector<8x1xf32>
      %cst_137 = arith.constant dense<0xFF800000> : vector<1xf32>
      %347 = vector.multi_reduction <maximumf>, %346, %cst_137 [0] : vector<8x1xf32> to vector<1xf32>
      %348 = vector.shape_cast %347 : vector<1xf32> to vector<1x1xf32>
      %349 = vector.broadcast %348 : vector<1x1xf32> to vector<8x1xf32>
      %350 = arith.subf %346, %349 : vector<8x1xf32>
      %351 = math.exp %350 : vector<8x1xf32>
      %cst_138 = arith.constant dense<0.000000e+00> : vector<1xf32>
      %352 = vector.multi_reduction <add>, %351, %cst_138 [0] : vector<8x1xf32> to vector<1xf32>
      %353 = vector.shape_cast %352 : vector<1xf32> to vector<1x1xf32>
      %354 = tpu.reciprocal %353 {approx = true} : vector<1x1xf32> -> vector<1x1xf32>
      %355 = vector.broadcast %354 : vector<1x1xf32> to vector<8x1xf32>
      %356 = arith.mulf %351, %355 : vector<8x1xf32>
      %357 = arith.extui %343 : vector<8x1xi1> to vector<8x1xi32>
      %358 = arith.sitofp %357 : vector<8x1xi32> to vector<8x1xf32>
      %359 = arith.mulf %356, %358 : vector<8x1xf32>
      %360 = vector.extract_strided_slice %327 {offsets = [0, 0], sizes = [8, 32], strides = [1, 1]} : vector<16x32xf32> to vector<8x32xf32>
      %361 = vector.broadcast %359 : vector<8x1xf32> to vector<8x32xf32>
      %362 = arith.mulf %361, %360 : vector<8x32xf32>
      %cst_139 = arith.constant dense<0.000000e+00> : vector<32xf32>
      %363 = vector.multi_reduction <add>, %362, %cst_139 [0] : vector<8x32xf32> to vector<32xf32>
      %364 = vector.shape_cast %363 : vector<32xf32> to vector<1x32xf32>
      %c1_140 = arith.constant 1 : index
      %365 = memref.load %arg1[%c1_140] : memref<2xi32, #tpu.memory_space<smem>>
      %366 = vector.broadcast %365 : i32 to vector<8x1xi32>
      %367 = arith.cmpi slt, %340, %366 : vector<8x1xi32>
      %368 = vector.extract_strided_slice %339 {offsets = [8, 0], sizes = [8, 1], strides = [1, 1]} : vector<16x1xf32> to vector<8x1xf32>
      %cst_141 = arith.constant -1.000000e+30 : f32
      %369 = vector.broadcast %cst_141 : f32 to vector<8x1xf32>
      %370 = arith.select %367, %368, %369 : vector<8x1xi1>, vector<8x1xf32>
      %cst_142 = arith.constant dense<0xFF800000> : vector<1xf32>
      %371 = vector.multi_reduction <maximumf>, %370, %cst_142 [0] : vector<8x1xf32> to vector<1xf32>
      %372 = vector.shape_cast %371 : vector<1xf32> to vector<1x1xf32>
      %373 = vector.broadcast %372 : vector<1x1xf32> to vector<8x1xf32>
      %374 = arith.subf %370, %373 : vector<8x1xf32>
      %375 = math.exp %374 : vector<8x1xf32>
      %cst_143 = arith.constant dense<0.000000e+00> : vector<1xf32>
      %376 = vector.multi_reduction <add>, %375, %cst_143 [0] : vector<8x1xf32> to vector<1xf32>
      %377 = vector.shape_cast %376 : vector<1xf32> to vector<1x1xf32>
      %378 = tpu.reciprocal %377 {approx = true} : vector<1x1xf32> -> vector<1x1xf32>
      %379 = vector.broadcast %378 : vector<1x1xf32> to vector<8x1xf32>
      %380 = arith.mulf %375, %379 : vector<8x1xf32>
      %381 = arith.extui %367 : vector<8x1xi1> to vector<8x1xi32>
      %382 = arith.sitofp %381 : vector<8x1xi32> to vector<8x1xf32>
      %383 = arith.mulf %380, %382 : vector<8x1xf32>
      %384 = vector.extract_strided_slice %327 {offsets = [8, 0], sizes = [8, 32], strides = [1, 1]} : vector<16x32xf32> to vector<8x32xf32>
      %385 = vector.broadcast %383 : vector<8x1xf32> to vector<8x32xf32>
      %386 = arith.mulf %385, %384 : vector<8x32xf32>
      %cst_144 = arith.constant dense<0.000000e+00> : vector<32xf32>
      %387 = vector.multi_reduction <add>, %386, %cst_144 [0] : vector<8x32xf32> to vector<32xf32>
      %388 = vector.shape_cast %387 : vector<32xf32> to vector<1x32xf32>
      %389 = tpu.concatenate %364, %388 in 0 : vector<1x32xf32>, vector<1x32xf32> -> vector<2x32xf32>
      %c0_145 = arith.constant 0 : index
      %c0_146 = arith.constant 0 : index
      %390 = vector.load %arg31[%c0_145, %c0_146] : memref<2x32xf32, #tpu.memory_space<vmem>>, vector<2x32xf32>
      tpu.vector_store %arg31[%c0_145, %c0_146], %389 {strides = array<i32>} : memref<2x32xf32, #tpu.memory_space<vmem>>, vector<2x32xf32>,
      %c0_147 = arith.constant 0 : index
      %c0_148 = arith.constant 0 : index
      %391 = vector.load %arg29[%c0_147, %c0_148] : memref<32x5xf32, #tpu.memory_space<vmem>>, vector<32x5xf32>
      %cst_149 = arith.constant dense<0.000000e+00> : vector<2x5xf32>
      %392 = tpu.matmul %389, %391, %cst_149 {dimension_numbers = #tpu.dot_dimension_numbers<[1], [0], [0], [1], [0, 0, 1, 1], [], []>} : vector<2x32xf32>, vector<32x5xf32>, vector<2x5xf32> -> vector<2x5xf32>
      %c0_150 = arith.constant 0 : index
      %c0_151 = arith.constant 0 : index
      %393 = vector.load %arg30[%c0_150, %c0_151] : memref<1x5xf32, #tpu.memory_space<vmem>>, vector<1x5xf32>
      %394 = vector.broadcast %393 : vector<1x5xf32> to vector<2x5xf32>
      %395 = arith.addf %392, %394 : vector<2x5xf32>
      %c0_152 = arith.constant 0 : index
      %c0_153 = arith.constant 0 : index
      %396 = vector.load %arg32[%c0_152, %c0_153] : memref<2x5xf32, #tpu.memory_space<vmem>>, vector<2x5xf32>
      tpu.vector_store %arg32[%c0_152, %c0_153], %395 {strides = array<i32>} : memref<2x5xf32, #tpu.memory_space<vmem>>, vector<2x5xf32>,
    } else {
    }
    return
  }
  func.func @transform_0(%arg0: i32, %arg1: memref<2xi32, #tpu.memory_space<smem>>) -> (i32, i32) {
    %c0_i32 = arith.constant 0 : i32
    %c0_i32_0 = arith.constant 0 : i32
    %c0_i32_1 = arith.constant 0 : i32
    return %c0_i32, %c0_i32_0 : i32, i32
  }
  func.func @transform_1(%arg0: i32, %arg1: memref<2xi32, #tpu.memory_space<smem>>) -> (i32, i32) {
    %c0_i32 = arith.constant 0 : i32
    %c0_i32_0 = arith.constant 0 : i32
    %c0_i32_1 = arith.constant 0 : i32
    return %c0_i32, %c0_i32_0 : i32, i32
  }
  func.func @transform_2(%arg0: i32, %arg1: memref<2xi32, #tpu.memory_space<smem>>) -> (i32, i32) {
    %c0_i32 = arith.constant 0 : i32
    %c0_i32_0 = arith.constant 0 : i32
    %c0_i32_1 = arith.constant 0 : i32
    return %c0_i32, %c0_i32_0 : i32, i32
  }
  func.func @transform_3(%arg0: i32, %arg1: memref<2xi32, #tpu.memory_space<smem>>) -> (i32, i32) {
    %c0_i32 = arith.constant 0 : i32
    %c0_i32_0 = arith.constant 0 : i32
    %c0_i32_1 = arith.constant 0 : i32
    return %c0_i32, %c0_i32_0 : i32, i32
  }
  func.func @transform_4(%arg0: i32, %arg1: memref<2xi32, #tpu.memory_space<smem>>) -> (i32, i32) {
    %c0_i32 = arith.constant 0 : i32
    %c0_i32_0 = arith.constant 0 : i32
    %c0_i32_1 = arith.constant 0 : i32
    return %c0_i32, %c0_i32_0 : i32, i32
  }
  func.func @transform_5(%arg0: i32, %arg1: memref<2xi32, #tpu.memory_space<smem>>) -> (i32, i32) {
    %c0_i32 = arith.constant 0 : i32
    %c0_i32_0 = arith.constant 0 : i32
    %c0_i32_1 = arith.constant 0 : i32
    return %c0_i32, %c0_i32_0 : i32, i32
  }
  func.func @transform_6(%arg0: i32, %arg1: memref<2xi32, #tpu.memory_space<smem>>) -> (i32, i32, i32) {
    %c0_i32 = arith.constant 0 : i32
    %c0_i32_0 = arith.constant 0 : i32
    %c0_i32_1 = arith.constant 0 : i32
    return %arg0, %c0_i32, %c0_i32_0 : i32, i32, i32
  }
  func.func @transform_7(%arg0: i32, %arg1: memref<2xi32, #tpu.memory_space<smem>>) -> (i32, i32, i32) {
    %c0_i32 = arith.constant 0 : i32
    %c0_i32_0 = arith.constant 0 : i32
    %c0_i32_1 = arith.constant 0 : i32
    return %arg0, %c0_i32, %c0_i32_0 : i32, i32, i32
  }
  func.func @transform_8(%arg0: i32, %arg1: memref<2xi32, #tpu.memory_space<smem>>) -> (i32, i32, i32) {
    %c0_i32 = arith.constant 0 : i32
    %c0_i32_0 = arith.constant 0 : i32
    %c0_i32_1 = arith.constant 0 : i32
    return %arg0, %c0_i32, %c0_i32_0 : i32, i32, i32
  }
  func.func @transform_9(%arg0: i32, %arg1: memref<2xi32, #tpu.memory_space<smem>>) -> (i32, i32, i32) {
    %c0_i32 = arith.constant 0 : i32
    %c0_i32_0 = arith.constant 0 : i32
    %c0_i32_1 = arith.constant 0 : i32
    return %arg0, %c0_i32, %c0_i32_0 : i32, i32, i32
  }
  func.func @transform_10(%arg0: i32, %arg1: memref<2xi32, #tpu.memory_space<smem>>) -> (i32, i32, i32) {
    %c0_i32 = arith.constant 0 : i32
    %c0_i32_0 = arith.constant 0 : i32
    %c0_i32_1 = arith.constant 0 : i32
    return %arg0, %c0_i32, %c0_i32_0 : i32, i32, i32
  }
  func.func @transform_11(%arg0: i32, %arg1: memref<2xi32, #tpu.memory_space<smem>>) -> (i32, i32, i32) {
    %c0_i32 = arith.constant 0 : i32
    %c0_i32_0 = arith.constant 0 : i32
    %c0_i32_1 = arith.constant 0 : i32
    return %arg0, %c0_i32, %c0_i32_0 : i32, i32, i32
  }
  func.func @transform_12(%arg0: i32, %arg1: memref<2xi32, #tpu.memory_space<smem>>) -> (i32, i32, i32) {
    %c0_i32 = arith.constant 0 : i32
    %c0_i32_0 = arith.constant 0 : i32
    %c0_i32_1 = arith.constant 0 : i32
    return %arg0, %c0_i32, %c0_i32_0 : i32, i32, i32
  }
  func.func @transform_13(%arg0: i32, %arg1: memref<2xi32, #tpu.memory_space<smem>>) -> (i32, i32, i32) {
    %c0_i32 = arith.constant 0 : i32
    %c0_i32_0 = arith.constant 0 : i32
    %c0_i32_1 = arith.constant 0 : i32
    return %arg0, %c0_i32, %c0_i32_0 : i32, i32, i32
  }
  func.func @transform_14(%arg0: i32, %arg1: memref<2xi32, #tpu.memory_space<smem>>) -> (i32, i32, i32) {
    %c0_i32 = arith.constant 0 : i32
    %c0_i32_0 = arith.constant 0 : i32
    %c0_i32_1 = arith.constant 0 : i32
    return %arg0, %c0_i32, %c0_i32_0 : i32, i32, i32
  }
  func.func @transform_15(%arg0: i32, %arg1: memref<2xi32, #tpu.memory_space<smem>>) -> (i32, i32, i32) {
    %c0_i32 = arith.constant 0 : i32
    %c0_i32_0 = arith.constant 0 : i32
    %c0_i32_1 = arith.constant 0 : i32
    return %arg0, %c0_i32, %c0_i32_0 : i32, i32, i32
  }
  func.func @transform_16(%arg0: i32, %arg1: memref<2xi32, #tpu.memory_space<smem>>) -> (i32, i32, i32) {
    %c0_i32 = arith.constant 0 : i32
    %c0_i32_0 = arith.constant 0 : i32
    %c0_i32_1 = arith.constant 0 : i32
    return %arg0, %c0_i32, %c0_i32_0 : i32, i32, i32
  }
  func.func @transform_17(%arg0: i32, %arg1: memref<2xi32, #tpu.memory_space<smem>>) -> (i32, i32, i32) {
    %c0_i32 = arith.constant 0 : i32
    %c0_i32_0 = arith.constant 0 : i32
    %c0_i32_1 = arith.constant 0 : i32
    return %arg0, %c0_i32, %c0_i32_0 : i32, i32, i32
  }
  func.func @transform_18(%arg0: i32, %arg1: memref<2xi32, #tpu.memory_space<smem>>) -> (i32, i32, i32) {
    %c0_i32 = arith.constant 0 : i32
    %c0_i32_0 = arith.constant 0 : i32
    %c0_i32_1 = arith.constant 0 : i32
    return %arg0, %c0_i32, %c0_i32_0 : i32, i32, i32
  }
  func.func @transform_19(%arg0: i32, %arg1: memref<2xi32, #tpu.memory_space<smem>>) -> (i32, i32, i32) {
    %c0_i32 = arith.constant 0 : i32
    %c0_i32_0 = arith.constant 0 : i32
    %c0_i32_1 = arith.constant 0 : i32
    return %arg0, %c0_i32, %c0_i32_0 : i32, i32, i32
  }
  func.func @transform_20(%arg0: i32, %arg1: memref<2xi32, #tpu.memory_space<smem>>) -> (i32, i32, i32) {
    %c0_i32 = arith.constant 0 : i32
    %c0_i32_0 = arith.constant 0 : i32
    %c0_i32_1 = arith.constant 0 : i32
    return %arg0, %c0_i32, %c0_i32_0 : i32, i32, i32
  }
  func.func @transform_21(%arg0: i32, %arg1: memref<2xi32, #tpu.memory_space<smem>>) -> (i32, i32, i32) {
    %c0_i32 = arith.constant 0 : i32
    %c0_i32_0 = arith.constant 0 : i32
    %c0_i32_1 = arith.constant 0 : i32
    return %arg0, %c0_i32, %c0_i32_0 : i32, i32, i32
  }
  func.func @transform_22(%arg0: i32, %arg1: memref<2xi32, #tpu.memory_space<smem>>) -> (i32, i32) {
    %c0_i32 = arith.constant 0 : i32
    %c0_i32_0 = arith.constant 0 : i32
    %c0_i32_1 = arith.constant 0 : i32
    return %c0_i32, %c0_i32_0 : i32, i32
  }
  func.func @transform_23(%arg0: i32, %arg1: memref<2xi32, #tpu.memory_space<smem>>) -> (i32, i32) {
    %c0_i32 = arith.constant 0 : i32
    %c0_i32_0 = arith.constant 0 : i32
    %c0_i32_1 = arith.constant 0 : i32
    return %c0_i32, %c0_i32_0 : i32, i32
  }
  func.func @transform_24(%arg0: i32, %arg1: memref<2xi32, #tpu.memory_space<smem>>) -> (i32, i32) {
    %c0_i32 = arith.constant 0 : i32
    %c0_i32_0 = arith.constant 0 : i32
    %c0_i32_1 = arith.constant 0 : i32
    return %c0_i32, %c0_i32_0 : i32, i32
  }
  func.func @transform_25(%arg0: i32, %arg1: memref<2xi32, #tpu.memory_space<smem>>) -> (i32, i32) {
    %c0_i32 = arith.constant 0 : i32
    %c0_i32_0 = arith.constant 0 : i32
    %c0_i32_1 = arith.constant 0 : i32
    return %c0_i32, %c0_i32_0 : i32, i32
  }
  func.func @transform_26(%arg0: i32, %arg1: memref<2xi32, #tpu.memory_space<smem>>) -> (i32, i32) {
    %c0_i32 = arith.constant 0 : i32
    %c0_i32_0 = arith.constant 0 : i32
    %c0_i32_1 = arith.constant 0 : i32
    return %c0_i32, %c0_i32_0 : i32, i32
  }
  func.func @transform_27(%arg0: i32, %arg1: memref<2xi32, #tpu.memory_space<smem>>) -> (i32, i32) {
    %c0_i32 = arith.constant 0 : i32
    %c0_i32_0 = arith.constant 0 : i32
    %c0_i32_1 = arith.constant 0 : i32
    return %c0_i32, %c0_i32_0 : i32, i32
  }
  func.func @transform_28(%arg0: i32, %arg1: memref<2xi32, #tpu.memory_space<smem>>) -> (i32, i32) {
    %c0_i32 = arith.constant 0 : i32
    %c0_i32_0 = arith.constant 0 : i32
    %c0_i32_1 = arith.constant 0 : i32
    return %c0_i32, %c0_i32_0 : i32, i32
  }
  func.func @transform_29(%arg0: i32, %arg1: memref<2xi32, #tpu.memory_space<smem>>) -> (i32, i32) {
    %c0_i32 = arith.constant 0 : i32
    %c0_i32_0 = arith.constant 0 : i32
    %c0_i32_1 = arith.constant 0 : i32
    return %c0_i32, %c0_i32_0 : i32, i32
  }
  func.func @transform_30(%arg0: i32, %arg1: memref<2xi32, #tpu.memory_space<smem>>) -> (i32, i32) {
    %c0_i32 = arith.constant 0 : i32
    %c0_i32_0 = arith.constant 0 : i32
    %c0_i32_1 = arith.constant 0 : i32
    return %c0_i32, %c0_i32_0 : i32, i32
  }
}

</mosaic_0001>

<llo_original>
// kernel: tpu_custom_call.1
$region0: #{tpu_custom_call.1}
  #allocation0 [shape = 'u32[]', space=smem, size = 0x4, offset = 0x4, fixed_abs, tag = 'smem constant byte address 0x4 - core index']
  #allocation1 [shape = 'u32[144,128]{1,0:T(1,128)}', space=vmem, size = 0x12000, scoped, tag = 'internal scratch']
  #allocation2 [shape = 'f32[16,32]{1,0:T(8,128)}', space=vmem, size = 0x2000, scoped, tag = 'scratch operand']
  #allocation3 [shape = 's32[1]{0}', space=sflag, size = 0x4, scoped, tag = 'scoped memory for tpu_custom_call.1']
  #allocation4 [shape = 'u8[512]{0}', space=smem, size = 0x200, scoped, tag = 'prefetched SMEM operand 0']
  %s0 = inlined_call_operand.smem [shape: u32[32], index: -1, kind: input, shape index: {}]
  %s1 = sld [smem:[%s0]]
  %s2 = scalar_lea.smem %s0, 1
  %s3 = sld [smem:[%s2]]
  %s4 = scalar_lea.smem %s0, 2
  %s5 = sld [smem:[%s4]]
  %s6 = scalar_lea.smem %s0, 3
  %s7 = sld [smem:[%s6]]
  %s8 = scalar_lea.smem %s0, 4
  %s9 = sld [smem:[%s8]]
  %s10 = scalar_lea.smem %s0, 5
  %s11 = sld [smem:[%s10]]
  %s12 = scalar_lea.smem %s0, 6
  %s13 = sld [smem:[%s12]]
  %s14 = scalar_lea.smem %s0, 7
  %s15 = sld [smem:[%s14]]
  %s16 = scalar_lea.smem %s0, 8
  %s17 = sld [smem:[%s16]]
  %s18 = scalar_lea.smem %s0, 9
  %s19 = sld [smem:[%s18]]
  %s20 = scalar_lea.smem %s0, 10
  %s21 = sld [smem:[%s20]]
  %s22 = scalar_lea.smem %s0, 11
  %s23 = sld [smem:[%s22]]
  %s24 = scalar_lea.smem %s0, 12
  %s25 = sld [smem:[%s24]]
  %s26 = scalar_lea.smem %s0, 13
  %s27 = sld [smem:[%s26]]
  %s28 = scalar_lea.smem %s0, 14
  %s29 = sld [smem:[%s28]]
  %s30 = scalar_lea.smem %s0, 15
  %s31 = sld [smem:[%s30]]
  %s32 = scalar_lea.smem %s0, 16
  %s33 = sld [smem:[%s32]]
  %s34 = scalar_lea.smem %s0, 17
  %s35 = sld [smem:[%s34]]
  %s36 = scalar_lea.smem %s0, 18
  %s37 = sld [smem:[%s36]]
  %s38 = scalar_lea.smem %s0, 19
  %s39 = sld [smem:[%s38]]
  %s40 = scalar_lea.smem %s0, 20
  %s41 = sld [smem:[%s40]]
  %s42 = scalar_lea.smem %s0, 21
  %s43 = sld [smem:[%s42]]
  %s44 = scalar_lea.smem %s0, 22
  %s45 = sld [smem:[%s44]]
  %s46 = scalar_lea.smem %s0, 23
  %s47 = sld [smem:[%s46]]
  %s48 = scalar_lea.smem %s0, 24
  %s49 = sld [smem:[%s48]]
  %s50 = scalar_lea.smem %s0, 25
  %s51 = sld [smem:[%s50]]
  %s52 = scalar_lea.smem %s0, 26
  %s53 = sld [smem:[%s52]]
  %s54 = scalar_lea.smem %s0, 27
  %s55 = sld [smem:[%s54]]
  %s56 = scalar_lea.smem %s0, 28
  %s57 = sld [smem:[%s56]]
  %s58 = scalar_lea.smem %s0, 29
  %s59 = sld [smem:[%s58]]
  %s60 = scalar_lea.smem %s0, 30
  %s61 = sld [smem:[%s60]]
  %s62 = scalar_lea.smem %s0, 31
  %s63 = sld [smem:[%s62]]
  %64 = xla_tuple %s61, %s63
  %s65 = sld [smem:[#allocation0]]
  $region225: #{tpu_custom_call.1} parent=0
    _
  %s67 = ssub.s32 1, %s65
  %s68 = scalar_select 0, %s67, %s65
  %70 = dma.hbm_to_smem %s1, 16, [#allocation4], [#allocation3]
  %71 = dma.done [#allocation3], 16
  %72 = sfence
  $region1: #{tpu_custom_call.1} parent=0
    #allocation5 [shape = 'u8[4096]{0}', space=vmem, size = 0x1000, scoped, tag = 'input window, operand 1, single buffered']
    #allocation6 [shape = 's32[2]{0}', space=sflag, size = 0x8, scoped, tag = 'scoped memory for tpu_custom_call.1']
    #allocation7 [shape = 's32[2]{0}', space=sflag, size = 0x8, scoped, tag = 'scoped memory for tpu_custom_call.1']
    #allocation8 [shape = 'u8[4096]{0}', space=vmem, size = 0x1000, scoped, tag = 'input window, operand 2, single buffered']
    #allocation9 [shape = 's32[1]{0}', space=sflag, size = 0x4, scoped, tag = 'scoped memory for tpu_custom_call.1']
    #allocation10 [shape = 'u8[4096]{0}', space=vmem, size = 0x1000, scoped, tag = 'input window, operand 3, single buffered']
    #allocation11 [shape = 'u8[512]{0}', space=vmem, size = 0x400, scoped, tag = 'input window, operand 4, single buffered']
    #allocation12 [shape = 's32[1]{0}', space=sflag, size = 0x4, scoped, tag = 'scoped memory for tpu_custom_call.1']
    #allocation13 [shape = 'u8[512]{0}', space=vmem, size = 0x400, scoped, tag = 'input window, operand 5, single buffered']
    #allocation14 [shape = 'u8[512]{0}', space=vmem, size = 0x400, scoped, tag = 'input window, operand 6, single buffered']
    #allocation15 [shape = 's32[1]{0}', space=sflag, size = 0x4, scoped, tag = 'scoped memory for tpu_custom_call.1']
    #allocation16 [shape = 'u8[1024]{0}', space=vmem, size = 0x400, scoped, tag = 'input window, operand 7']
    #allocation17 [shape = 'u8[1024]{0}', space=vmem, size = 0x400, scoped, tag = 'input window, operand 8']
    #allocation18 [shape = 'u8[1024]{0}', space=vmem, size = 0x400, scoped, tag = 'input window, operand 10']
    #allocation19 [shape = 'u8[1024]{0}', space=vmem, size = 0x400, scoped, tag = 'input window, operand 12']
    #allocation20 [shape = 'u8[1024]{0}', space=vmem, size = 0x400, scoped, tag = 'input window, operand 14']
    #allocation21 [shape = 'u8[1024]{0}', space=vmem, size = 0x400, scoped, tag = 'input window, operand 17']
    #allocation22 [shape = 'u8[1024]{0}', space=vmem, size = 0x400, scoped, tag = 'input window, operand 18']
    #allocation23 [shape = 'u8[1024]{0}', space=vmem, size = 0x400, scoped, tag = 'input window, operand 20']
    #allocation24 [shape = 'u8[1024]{0}', space=vmem, size = 0x400, scoped, tag = 'input window, operand 22']
    #allocation25 [shape = 'u8[1024]{0}', space=vmem, size = 0x400, scoped, tag = 'output window, operand 0, single buffered']
    #allocation26 [shape = 'u8[1024]{0}', space=vmem, size = 0x400, scoped, tag = 'output window, operand 1, single buffered']
    #allocation27 [shape = 's32[1]{0}', space=sflag, size = 0x4, scoped, tag = 'scoped memory for tpu_custom_call.1']
    %73 = vsyncpa [#allocation6], 0
    %74 = vsyncpa [#allocation9], 0
    %75 = vsyncpa [#allocation12], 0
    %76 = vsyncpa [#allocation15], 0
    %77 = vsyncpa [#allocation7], 0
    %78 = vsyncpa [#allocation27], 0
    loop: start=0, step=1, limit=4
    $region2: #{tpu_custom_call.1} parent=1 // loop_pre_header
      _
    $region3: #{tpu_custom_call.1} parent=1 // loop_header
      %s80 = sphi 0, %s84
      %p81 = scmp.ge.s32.totalorder %s80, 4
      %s88 = sphi 0, %s88
      %s90 = sphi 0, %s88
      %s91 = sphi 0, %s90
      %s105 = sphi 0, %s91
      %s109 = sphi 0, %s109
      %s111 = sphi 0, %s109
      %s112 = sphi 0, %s111
      %s126 = sphi 0, %s112
      %s130 = sphi 0, %s130
      %s132 = sphi 0, %s130
      %s133 = sphi 0, %s132
      %s147 = sphi 0, %s133
      %s151 = sphi 0, %s151
      %s153 = sphi 0, %s151
      %s154 = sphi 0, %s153
      %s168 = sphi 0, %s154
      %s172 = sphi 0, %s172
      %s174 = sphi 0, %s172
      %s175 = sphi 0, %s174
      %s189 = sphi 0, %s175
      %s193 = sphi 0, %s193
      %s195 = sphi 0, %s193
      %s196 = sphi 0, %s195
      %s210 = sphi 0, %s196
      %s216 = sphi 0, %s218
      %s219 = sphi 0, %s216
      %s220 = sphi 0, %s219
      %s236 = sphi 0, %s220
      %s242 = sphi 0, %s244
      %s245 = sphi 0, %s242
      %s246 = sphi 0, %s245
      %s262 = sphi 0, %s246
      %s268 = sphi 0, %s270
      %s271 = sphi 0, %s268
      %s272 = sphi 0, %s271
      %s288 = sphi 0, %s272
      %s294 = sphi 0, %s296
      %s297 = sphi 0, %s294
      %s298 = sphi 0, %s297
      %s314 = sphi 0, %s298
      %s320 = sphi 0, %s322
      %s323 = sphi 0, %s320
      %s324 = sphi 0, %s323
      %s340 = sphi 0, %s324
      %s346 = sphi 0, %s348
      %s349 = sphi 0, %s346
      %s350 = sphi 0, %s349
      %s366 = sphi 0, %s350
      %s372 = sphi 0, %s374
      %s375 = sphi 0, %s372
      %s376 = sphi 0, %s375
      %s392 = sphi 0, %s376
      %s398 = sphi 0, %s400
      %s401 = sphi 0, %s398
      %s402 = sphi 0, %s401
      %s418 = sphi 0, %s402
      %s424 = sphi 0, %s426
      %s427 = sphi 0, %s424
      %s428 = sphi 0, %s427
      %s444 = sphi 0, %s428
      %s450 = sphi 0, %s452
      %s453 = sphi 0, %s450
      %s454 = sphi 0, %s453
      %s470 = sphi 0, %s454
      %s476 = sphi 0, %s478
      %s479 = sphi 0, %s476
      %s480 = sphi 0, %s479
      %s496 = sphi 0, %s480
      %s502 = sphi 0, %s504
      %s505 = sphi 0, %s502
      %s506 = sphi 0, %s505
      %s522 = sphi 0, %s506
      %s528 = sphi 0, %s530
      %s531 = sphi 0, %s528
      %s532 = sphi 0, %s531
      %s548 = sphi 0, %s532
      %s554 = sphi 0, %s556
      %s557 = sphi 0, %s554
      %s558 = sphi 0, %s557
      %s574 = sphi 0, %s558
      %s580 = sphi 0, %s582
      %s583 = sphi 0, %s580
      %s584 = sphi 0, %s583
      %s600 = sphi 0, %s584
      %s606 = sphi 0, %s608
      %s609 = sphi 0, %s606
      %s610 = sphi 0, %s609
      %s626 = sphi 0, %s610
      %s630 = sphi 0, %s630
      %s632 = sphi 0, %s630
      %s633 = sphi 0, %s632
      %s647 = sphi 0, %s633
      %s651 = sphi 0, %s651
      %s653 = sphi 0, %s651
      %s654 = sphi 0, %s653
      %s668 = sphi 0, %s654
      %s672 = sphi 0, %s672
      %s674 = sphi 0, %s672
      %s675 = sphi 0, %s674
      %s689 = sphi 0, %s675
      %s693 = sphi 0, %s693
      %s695 = sphi 0, %s693
      %s696 = sphi 0, %s695
      %s710 = sphi 0, %s696
      %s714 = sphi 0, %s714
      %s716 = sphi 0, %s714
      %s717 = sphi 0, %s716
      %s731 = sphi 0, %s717
      %s735 = sphi 0, %s735
      %s737 = sphi 0, %s735
      %s738 = sphi 0, %s737
      %s752 = sphi 0, %s738
      %s756 = sphi 0, %s756
      %s758 = sphi 0, %s756
      %s759 = sphi 0, %s758
      %s773 = sphi 0, %s759
      %s777 = sphi 0, %s777
      %s779 = sphi 0, %s777
      %s780 = sphi 0, %s779
      %s794 = sphi 0, %s780
      %s798 = sphi 0, %s798
      %s800 = sphi 0, %s798
      %s801 = sphi 0, %s800
      %s815 = sphi 0, %s801
    $region4: #{tpu_custom_call.1} parent=1 // loop_header_branch
      %83 = sbr.rel (%p81) target = $region8
    $region5: #{tpu_custom_call.1} parent=1 // loop_body
      %s85 = ssub.s32 %s80, 1
      %s86 = ssub.s32 %s80, 2
      %s87 = sadd.s32 %s80, 1
      %s89 = sadd.s32 %s88, 1
      %p92 = scmp.eq.s32.totalorder %s80, 1
      %p93 = scmp.ne.s32.totalorder %s88, %s90
      %p94 = scmp.eq.s32.totalorder %s80, 0
      %p95 = por %p93, %p94
      %p96 = scmp.ne.s32.totalorder %s88, %s90
      %p97 = scmp.eq.s32.totalorder %s85, 1
      %p98 = por %p96, %p97
      %p99 = scmp.ne.s32.totalorder %s90, %s91
      %p100 = scmp.eq.s32.totalorder %s85, 0
      %p101 = por %p99, %p100
      %p102 = scmp.ne.s32.totalorder %s90, %s91
      %p103 = scmp.eq.s32.totalorder %s86, 1
      %p104 = por %p102, %p103
      %p106 = scmp.ne.s32.totalorder %s91, %s105
      %p107 = scmp.eq.s32.totalorder %s86, 0
      %p108 = por %p106, %p107
      %s110 = sadd.s32 %s109, 1
      %p113 = scmp.eq.s32.totalorder %s80, 1
      %p114 = scmp.ne.s32.totalorder %s109, %s111
      %p115 = scmp.eq.s32.totalorder %s80, 0
      %p116 = por %p114, %p115
      %p117 = scmp.ne.s32.totalorder %s109, %s111
      %p118 = scmp.eq.s32.totalorder %s85, 1
      %p119 = por %p117, %p118
      %p120 = scmp.ne.s32.totalorder %s111, %s112
      %p121 = scmp.eq.s32.totalorder %s85, 0
      %p122 = por %p120, %p121
      %p123 = scmp.ne.s32.totalorder %s111, %s112
      %p124 = scmp.eq.s32.totalorder %s86, 1
      %p125 = por %p123, %p124
      %p127 = scmp.ne.s32.totalorder %s112, %s126
      %p128 = scmp.eq.s32.totalorder %s86, 0
      %p129 = por %p127, %p128
      %s131 = sadd.s32 %s130, 1
      %p134 = scmp.eq.s32.totalorder %s80, 1
      %p135 = scmp.ne.s32.totalorder %s130, %s132
      %p136 = scmp.eq.s32.totalorder %s80, 0
      %p137 = por %p135, %p136
      %p138 = scmp.ne.s32.totalorder %s130, %s132
      %p139 = scmp.eq.s32.totalorder %s85, 1
      %p140 = por %p138, %p139
      %p141 = scmp.ne.s32.totalorder %s132, %s133
      %p142 = scmp.eq.s32.totalorder %s85, 0
      %p143 = por %p141, %p142
      %p144 = scmp.ne.s32.totalorder %s132, %s133
      %p145 = scmp.eq.s32.totalorder %s86, 1
      %p146 = por %p144, %p145
      %p148 = scmp.ne.s32.totalorder %s133, %s147
      %p149 = scmp.eq.s32.totalorder %s86, 0
      %p150 = por %p148, %p149
      %s152 = sadd.s32 %s151, 1
      %p155 = scmp.eq.s32.totalorder %s80, 1
      %p156 = scmp.ne.s32.totalorder %s151, %s153
      %p157 = scmp.eq.s32.totalorder %s80, 0
      %p158 = por %p156, %p157
      %p159 = scmp.ne.s32.totalorder %s151, %s153
      %p160 = scmp.eq.s32.totalorder %s85, 1
      %p161 = por %p159, %p160
      %p162 = scmp.ne.s32.totalorder %s153, %s154
      %p163 = scmp.eq.s32.totalorder %s85, 0
      %p164 = por %p162, %p163
      %p165 = scmp.ne.s32.totalorder %s153, %s154
      %p166 = scmp.eq.s32.totalorder %s86, 1
      %p167 = por %p165, %p166
      %p169 = scmp.ne.s32.totalorder %s154, %s168
      %p170 = scmp.eq.s32.totalorder %s86, 0
      %p171 = por %p169, %p170
      %s173 = sadd.s32 %s172, 1
      %p176 = scmp.eq.s32.totalorder %s80, 1
      %p177 = scmp.ne.s32.totalorder %s172, %s174
      %p178 = scmp.eq.s32.totalorder %s80, 0
      %p179 = por %p177, %p178
      %p180 = scmp.ne.s32.totalorder %s172, %s174
      %p181 = scmp.eq.s32.totalorder %s85, 1
      %p182 = por %p180, %p181
      %p183 = scmp.ne.s32.totalorder %s174, %s175
      %p184 = scmp.eq.s32.totalorder %s85, 0
      %p185 = por %p183, %p184
      %p186 = scmp.ne.s32.totalorder %s174, %s175
      %p187 = scmp.eq.s32.totalorder %s86, 1
      %p188 = por %p186, %p187
      %p190 = scmp.ne.s32.totalorder %s175, %s189
      %p191 = scmp.eq.s32.totalorder %s86, 0
      %p192 = por %p190, %p191
      %s194 = sadd.s32 %s193, 1
      %p197 = scmp.eq.s32.totalorder %s80, 1
      %p198 = scmp.ne.s32.totalorder %s193, %s195
      %p199 = scmp.eq.s32.totalorder %s80, 0
      %p200 = por %p198, %p199
      %p201 = scmp.ne.s32.totalorder %s193, %s195
      %p202 = scmp.eq.s32.totalorder %s85, 1
      %p203 = por %p201, %p202
      %p204 = scmp.ne.s32.totalorder %s195, %s196
      %p205 = scmp.eq.s32.totalorder %s85, 0
      %p206 = por %p204, %p205
      %p207 = scmp.ne.s32.totalorder %s195, %s196
      %p208 = scmp.eq.s32.totalorder %s86, 1
      %p209 = por %p207, %p208
      %p211 = scmp.ne.s32.totalorder %s196, %s210
      %p212 = scmp.eq.s32.totalorder %s86, 0
      %p213 = por %p211, %p212
      %s214 = ssub.s32 %s80, %s87
      %p215 = scmp.eq.s32.totalorder %s214, 0
      %s217 = sadd.s32 %s216, 1
      %s218 = scalar_select %p215, %s216, %s217
      %p221 = pneg %p215
      %p222 = scmp.eq.s32.totalorder %s80, 1
      %p223 = por %p221, %p222
      %p224 = scmp.ne.s32.totalorder %s216, %s219
      %p225 = scmp.eq.s32.totalorder %s80, 0
      %p226 = por %p224, %p225
      %p227 = scmp.ne.s32.totalorder %s216, %s219
      %p228 = scmp.eq.s32.totalorder %s85, 1
      %p229 = por %p227, %p228
      %p230 = scmp.ne.s32.totalorder %s219, %s220
      %p231 = scmp.eq.s32.totalorder %s85, 0
      %p232 = por %p230, %p231
      %p233 = scmp.ne.s32.totalorder %s219, %s220
      %p234 = scmp.eq.s32.totalorder %s86, 1
      %p235 = por %p233, %p234
      %p237 = scmp.ne.s32.totalorder %s220, %s236
      %p238 = scmp.eq.s32.totalorder %s86, 0
      %p239 = por %p237, %p238
      %s240 = ssub.s32 %s80, %s87
      %p241 = scmp.eq.s32.totalorder %s240, 0
      %s243 = sadd.s32 %s242, 1
      %s244 = scalar_select %p241, %s242, %s243
      %p247 = pneg %p241
      %p248 = scmp.eq.s32.totalorder %s80, 1
      %p249 = por %p247, %p248
      %p250 = scmp.ne.s32.totalorder %s242, %s245
      %p251 = scmp.eq.s32.totalorder %s80, 0
      %p252 = por %p250, %p251
      %p253 = scmp.ne.s32.totalorder %s242, %s245
      %p254 = scmp.eq.s32.totalorder %s85, 1
      %p255 = por %p253, %p254
      %p256 = scmp.ne.s32.totalorder %s245, %s246
      %p257 = scmp.eq.s32.totalorder %s85, 0
      %p258 = por %p256, %p257
      %p259 = scmp.ne.s32.totalorder %s245, %s246
      %p260 = scmp.eq.s32.totalorder %s86, 1
      %p261 = por %p259, %p260
      %p263 = scmp.ne.s32.totalorder %s246, %s262
      %p264 = scmp.eq.s32.totalorder %s86, 0
      %p265 = por %p263, %p264
      %s266 = ssub.s32 %s80, %s87
      %p267 = scmp.eq.s32.totalorder %s266, 0
      %s269 = sadd.s32 %s268, 1
      %s270 = scalar_select %p267, %s268, %s269
      %p273 = pneg %p267
      %p274 = scmp.eq.s32.totalorder %s80, 1
      %p275 = por %p273, %p274
      %p276 = scmp.ne.s32.totalorder %s268, %s271
      %p277 = scmp.eq.s32.totalorder %s80, 0
      %p278 = por %p276, %p277
      %p279 = scmp.ne.s32.totalorder %s268, %s271
      %p280 = scmp.eq.s32.totalorder %s85, 1
      %p281 = por %p279, %p280
      %p282 = scmp.ne.s32.totalorder %s271, %s272
      %p283 = scmp.eq.s32.totalorder %s85, 0
      %p284 = por %p282, %p283
      %p285 = scmp.ne.s32.totalorder %s271, %s272
      %p286 = scmp.eq.s32.totalorder %s86, 1
      %p287 = por %p285, %p286
      %p289 = scmp.ne.s32.totalorder %s272, %s288
      %p290 = scmp.eq.s32.totalorder %s86, 0
      %p291 = por %p289, %p290
      %s292 = ssub.s32 %s80, %s87
      %p293 = scmp.eq.s32.totalorder %s292, 0
      %s295 = sadd.s32 %s294, 1
      %s296 = scalar_select %p293, %s294, %s295
      %p299 = pneg %p293
      %p300 = scmp.eq.s32.totalorder %s80, 1
      %p301 = por %p299, %p300
      %p302 = scmp.ne.s32.totalorder %s294, %s297
      %p303 = scmp.eq.s32.totalorder %s80, 0
      %p304 = por %p302, %p303
      %p305 = scmp.ne.s32.totalorder %s294, %s297
      %p306 = scmp.eq.s32.totalorder %s85, 1
      %p307 = por %p305, %p306
      %p308 = scmp.ne.s32.totalorder %s297, %s298
      %p309 = scmp.eq.s32.totalorder %s85, 0
      %p310 = por %p308, %p309
      %p311 = scmp.ne.s32.totalorder %s297, %s298
      %p312 = scmp.eq.s32.totalorder %s86, 1
      %p313 = por %p311, %p312
      %p315 = scmp.ne.s32.totalorder %s298, %s314
      %p316 = scmp.eq.s32.totalorder %s86, 0
      %p317 = por %p315, %p316
      %s318 = ssub.s32 %s80, %s87
      %p319 = scmp.eq.s32.totalorder %s318, 0
      %s321 = sadd.s32 %s320, 1
      %s322 = scalar_select %p319, %s320, %s321
      %p325 = pneg %p319
      %p326 = scmp.eq.s32.totalorder %s80, 1
      %p327 = por %p325, %p326
      %p328 = scmp.ne.s32.totalorder %s320, %s323
      %p329 = scmp.eq.s32.totalorder %s80, 0
      %p330 = por %p328, %p329
      %p331 = scmp.ne.s32.totalorder %s320, %s323
      %p332 = scmp.eq.s32.totalorder %s85, 1
      %p333 = por %p331, %p332
      %p334 = scmp.ne.s32.totalorder %s323, %s324
      %p335 = scmp.eq.s32.totalorder %s85, 0
      %p336 = por %p334, %p335
      %p337 = scmp.ne.s32.totalorder %s323, %s324
      %p338 = scmp.eq.s32.totalorder %s86, 1
      %p339 = por %p337, %p338
      %p341 = scmp.ne.s32.totalorder %s324, %s340
      %p342 = scmp.eq.s32.totalorder %s86, 0
      %p343 = por %p341, %p342
      %s344 = ssub.s32 %s80, %s87
      %p345 = scmp.eq.s32.totalorder %s344, 0
      %s347 = sadd.s32 %s346, 1
      %s348 = scalar_select %p345, %s346, %s347
      %p351 = pneg %p345
      %p352 = scmp.eq.s32.totalorder %s80, 1
      %p353 = por %p351, %p352
      %p354 = scmp.ne.s32.totalorder %s346, %s349
      %p355 = scmp.eq.s32.totalorder %s80, 0
      %p356 = por %p354, %p355
      %p357 = scmp.ne.s32.totalorder %s346, %s349
      %p358 = scmp.eq.s32.totalorder %s85, 1
      %p359 = por %p357, %p358
      %p360 = scmp.ne.s32.totalorder %s349, %s350
      %p361 = scmp.eq.s32.totalorder %s85, 0
      %p362 = por %p360, %p361
      %p363 = scmp.ne.s32.totalorder %s349, %s350
      %p364 = scmp.eq.s32.totalorder %s86, 1
      %p365 = por %p363, %p364
      %p367 = scmp.ne.s32.totalorder %s350, %s366
      %p368 = scmp.eq.s32.totalorder %s86, 0
      %p369 = por %p367, %p368
      %s370 = ssub.s32 %s80, %s87
      %p371 = scmp.eq.s32.totalorder %s370, 0
      %s373 = sadd.s32 %s372, 1
      %s374 = scalar_select %p371, %s372, %s373
      %p377 = pneg %p371
      %p378 = scmp.eq.s32.totalorder %s80, 1
      %p379 = por %p377, %p378
      %p380 = scmp.ne.s32.totalorder %s372, %s375
      %p381 = scmp.eq.s32.totalorder %s80, 0
      %p382 = por %p380, %p381
      %p383 = scmp.ne.s32.totalorder %s372, %s375
      %p384 = scmp.eq.s32.totalorder %s85, 1
      %p385 = por %p383, %p384
      %p386 = scmp.ne.s32.totalorder %s375, %s376
      %p387 = scmp.eq.s32.totalorder %s85, 0
      %p388 = por %p386, %p387
      %p389 = scmp.ne.s32.totalorder %s375, %s376
      %p390 = scmp.eq.s32.totalorder %s86, 1
      %p391 = por %p389, %p390
      %p393 = scmp.ne.s32.totalorder %s376, %s392
      %p394 = scmp.eq.s32.totalorder %s86, 0
      %p395 = por %p393, %p394
      %s396 = ssub.s32 %s80, %s87
      %p397 = scmp.eq.s32.totalorder %s396, 0
      %s399 = sadd.s32 %s398, 1
      %s400 = scalar_select %p397, %s398, %s399
      %p403 = pneg %p397
      %p404 = scmp.eq.s32.totalorder %s80, 1
      %p405 = por %p403, %p404
      %p406 = scmp.ne.s32.totalorder %s398, %s401
      %p407 = scmp.eq.s32.totalorder %s80, 0
      %p408 = por %p406, %p407
      %p409 = scmp.ne.s32.totalorder %s398, %s401
      %p410 = scmp.eq.s32.totalorder %s85, 1
      %p411 = por %p409, %p410
      %p412 = scmp.ne.s32.totalorder %s401, %s402
      %p413 = scmp.eq.s32.totalorder %s85, 0
      %p414 = por %p412, %p413
      %p415 = scmp.ne.s32.totalorder %s401, %s402
      %p416 = scmp.eq.s32.totalorder %s86, 1
      %p417 = por %p415, %p416
      %p419 = scmp.ne.s32.totalorder %s402, %s418
      %p420 = scmp.eq.s32.totalorder %s86, 0
      %p421 = por %p419, %p420
      %s422 = ssub.s32 %s80, %s87
      %p423 = scmp.eq.s32.totalorder %s422, 0
      %s425 = sadd.s32 %s424, 1
      %s426 = scalar_select %p423, %s424, %s425
      %p429 = pneg %p423
      %p430 = scmp.eq.s32.totalorder %s80, 1
      %p431 = por %p429, %p430
      %p432 = scmp.ne.s32.totalorder %s424, %s427
      %p433 = scmp.eq.s32.totalorder %s80, 0
      %p434 = por %p432, %p433
      %p435 = scmp.ne.s32.totalorder %s424, %s427
      %p436 = scmp.eq.s32.totalorder %s85, 1
      %p437 = por %p435, %p436
      %p438 = scmp.ne.s32.totalorder %s427, %s428
      %p439 = scmp.eq.s32.totalorder %s85, 0
      %p440 = por %p438, %p439
      %p441 = scmp.ne.s32.totalorder %s427, %s428
      %p442 = scmp.eq.s32.totalorder %s86, 1
      %p443 = por %p441, %p442
      %p445 = scmp.ne.s32.totalorder %s428, %s444
      %p446 = scmp.eq.s32.totalorder %s86, 0
      %p447 = por %p445, %p446
      %s448 = ssub.s32 %s80, %s87
      %p449 = scmp.eq.s32.totalorder %s448, 0
      %s451 = sadd.s32 %s450, 1
      %s452 = scalar_select %p449, %s450, %s451
      %p455 = pneg %p449
      %p456 = scmp.eq.s32.totalorder %s80, 1
      %p457 = por %p455, %p456
      %p458 = scmp.ne.s32.totalorder %s450, %s453
      %p459 = scmp.eq.s32.totalorder %s80, 0
      %p460 = por %p458, %p459
      %p461 = scmp.ne.s32.totalorder %s450, %s453
      %p462 = scmp.eq.s32.totalorder %s85, 1
      %p463 = por %p461, %p462
      %p464 = scmp.ne.s32.totalorder %s453, %s454
      %p465 = scmp.eq.s32.totalorder %s85, 0
      %p466 = por %p464, %p465
      %p467 = scmp.ne.s32.totalorder %s453, %s454
      %p468 = scmp.eq.s32.totalorder %s86, 1
      %p469 = por %p467, %p468
      %p471 = scmp.ne.s32.totalorder %s454, %s470
      %p472 = scmp.eq.s32.totalorder %s86, 0
      %p473 = por %p471, %p472
      %s474 = ssub.s32 %s80, %s87
      %p475 = scmp.eq.s32.totalorder %s474, 0
      %s477 = sadd.s32 %s476, 1
      %s478 = scalar_select %p475, %s476, %s477
      %p481 = pneg %p475
      %p482 = scmp.eq.s32.totalorder %s80, 1
      %p483 = por %p481, %p482
      %p484 = scmp.ne.s32.totalorder %s476, %s479
      %p485 = scmp.eq.s32.totalorder %s80, 0
      %p486 = por %p484, %p485
      %p487 = scmp.ne.s32.totalorder %s476, %s479
      %p488 = scmp.eq.s32.totalorder %s85, 1
      %p489 = por %p487, %p488
      %p490 = scmp.ne.s32.totalorder %s479, %s480
      %p491 = scmp.eq.s32.totalorder %s85, 0
      %p492 = por %p490, %p491
      %p493 = scmp.ne.s32.totalorder %s479, %s480
      %p494 = scmp.eq.s32.totalorder %s86, 1
      %p495 = por %p493, %p494
      %p497 = scmp.ne.s32.totalorder %s480, %s496
      %p498 = scmp.eq.s32.totalorder %s86, 0
      %p499 = por %p497, %p498
      %s500 = ssub.s32 %s80, %s87
      %p501 = scmp.eq.s32.totalorder %s500, 0
      %s503 = sadd.s32 %s502, 1
      %s504 = scalar_select %p501, %s502, %s503
      %p507 = pneg %p501
      %p508 = scmp.eq.s32.totalorder %s80, 1
      %p509 = por %p507, %p508
      %p510 = scmp.ne.s32.totalorder %s502, %s505
      %p511 = scmp.eq.s32.totalorder %s80, 0
      %p512 = por %p510, %p511
      %p513 = scmp.ne.s32.totalorder %s502, %s505
      %p514 = scmp.eq.s32.totalorder %s85, 1
      %p515 = por %p513, %p514
      %p516 = scmp.ne.s32.totalorder %s505, %s506
      %p517 = scmp.eq.s32.totalorder %s85, 0
      %p518 = por %p516, %p517
      %p519 = scmp.ne.s32.totalorder %s505, %s506
      %p520 = scmp.eq.s32.totalorder %s86, 1
      %p521 = por %p519, %p520
      %p523 = scmp.ne.s32.totalorder %s506, %s522
      %p524 = scmp.eq.s32.totalorder %s86, 0
      %p525 = por %p523, %p524
      %s526 = ssub.s32 %s80, %s87
      %p527 = scmp.eq.s32.totalorder %s526, 0
      %s529 = sadd.s32 %s528, 1
      %s530 = scalar_select %p527, %s528, %s529
      %p533 = pneg %p527
      %p534 = scmp.eq.s32.totalorder %s80, 1
      %p535 = por %p533, %p534
      %p536 = scmp.ne.s32.totalorder %s528, %s531
      %p537 = scmp.eq.s32.totalorder %s80, 0
      %p538 = por %p536, %p537
      %p539 = scmp.ne.s32.totalorder %s528, %s531
      %p540 = scmp.eq.s32.totalorder %s85, 1
      %p541 = por %p539, %p540
      %p542 = scmp.ne.s32.totalorder %s531, %s532
      %p543 = scmp.eq.s32.totalorder %s85, 0
      %p544 = por %p542, %p543
      %p545 = scmp.ne.s32.totalorder %s531, %s532
      %p546 = scmp.eq.s32.totalorder %s86, 1
      %p547 = por %p545, %p546
      %p549 = scmp.ne.s32.totalorder %s532, %s548
      %p550 = scmp.eq.s32.totalorder %s86, 0
      %p551 = por %p549, %p550
      %s552 = ssub.s32 %s80, %s87
      %p553 = scmp.eq.s32.totalorder %s552, 0
      %s555 = sadd.s32 %s554, 1
      %s556 = scalar_select %p553, %s554, %s555
      %p559 = pneg %p553
      %p560 = scmp.eq.s32.totalorder %s80, 1
      %p561 = por %p559, %p560
      %p562 = scmp.ne.s32.totalorder %s554, %s557
      %p563 = scmp.eq.s32.totalorder %s80, 0
      %p564 = por %p562, %p563
      %p565 = scmp.ne.s32.totalorder %s554, %s557
      %p566 = scmp.eq.s32.totalorder %s85, 1
      %p567 = por %p565, %p566
      %p568 = scmp.ne.s32.totalorder %s557, %s558
      %p569 = scmp.eq.s32.totalorder %s85, 0
      %p570 = por %p568, %p569
      %p571 = scmp.ne.s32.totalorder %s557, %s558
      %p572 = scmp.eq.s32.totalorder %s86, 1
      %p573 = por %p571, %p572
      %p575 = scmp.ne.s32.totalorder %s558, %s574
      %p576 = scmp.eq.s32.totalorder %s86, 0
      %p577 = por %p575, %p576
      %s578 = ssub.s32 %s80, %s87
      %p579 = scmp.eq.s32.totalorder %s578, 0
      %s581 = sadd.s32 %s580, 1
      %s582 = scalar_select %p579, %s580, %s581
      %p585 = pneg %p579
      %p586 = scmp.eq.s32.totalorder %s80, 1
      %p587 = por %p585, %p586
      %p588 = scmp.ne.s32.totalorder %s580, %s583
      %p589 = scmp.eq.s32.totalorder %s80, 0
      %p590 = por %p588, %p589
      %p591 = scmp.ne.s32.totalorder %s580, %s583
      %p592 = scmp.eq.s32.totalorder %s85, 1
      %p593 = por %p591, %p592
      %p594 = scmp.ne.s32.totalorder %s583, %s584
      %p595 = scmp.eq.s32.totalorder %s85, 0
      %p596 = por %p594, %p595
      %p597 = scmp.ne.s32.totalorder %s583, %s584
      %p598 = scmp.eq.s32.totalorder %s86, 1
      %p599 = por %p597, %p598
      %p601 = scmp.ne.s32.totalorder %s584, %s600
      %p602 = scmp.eq.s32.totalorder %s86, 0
      %p603 = por %p601, %p602
      %s604 = ssub.s32 %s80, %s87
      %p605 = scmp.eq.s32.totalorder %s604, 0
      %s607 = sadd.s32 %s606, 1
      %s608 = scalar_select %p605, %s606, %s607
      %p611 = pneg %p605
      %p612 = scmp.eq.s32.totalorder %s80, 1
      %p613 = por %p611, %p612
      %p614 = scmp.ne.s32.totalorder %s606, %s609
      %p615 = scmp.eq.s32.totalorder %s80, 0
      %p616 = por %p614, %p615
      %p617 = scmp.ne.s32.totalorder %s606, %s609
      %p618 = scmp.eq.s32.totalorder %s85, 1
      %p619 = por %p617, %p618
      %p620 = scmp.ne.s32.totalorder %s609, %s610
      %p621 = scmp.eq.s32.totalorder %s85, 0
      %p622 = por %p620, %p621
      %p623 = scmp.ne.s32.totalorder %s609, %s610
      %p624 = scmp.eq.s32.totalorder %s86, 1
      %p625 = por %p623, %p624
      %p627 = scmp.ne.s32.totalorder %s610, %s626
      %p628 = scmp.eq.s32.totalorder %s86, 0
      %p629 = por %p627, %p628
      %s631 = sadd.s32 %s630, 1
      %p634 = scmp.eq.s32.totalorder %s80, 1
      %p635 = scmp.ne.s32.totalorder %s630, %s632
      %p636 = scmp.eq.s32.totalorder %s80, 0
      %p637 = por %p635, %p636
      %p638 = scmp.ne.s32.totalorder %s630, %s632
      %p639 = scmp.eq.s32.totalorder %s85, 1
      %p640 = por %p638, %p639
      %p641 = scmp.ne.s32.totalorder %s632, %s633
      %p642 = scmp.eq.s32.totalorder %s85, 0
      %p643 = por %p641, %p642
      %p644 = scmp.ne.s32.totalorder %s632, %s633
      %p645 = scmp.eq.s32.totalorder %s86, 1
      %p646 = por %p644, %p645
      %p648 = scmp.ne.s32.totalorder %s633, %s647
      %p649 = scmp.eq.s32.totalorder %s86, 0
      %p650 = por %p648, %p649
      %s652 = sadd.s32 %s651, 1
      %p655 = scmp.eq.s32.totalorder %s80, 1
      %p656 = scmp.ne.s32.totalorder %s651, %s653
      %p657 = scmp.eq.s32.totalorder %s80, 0
      %p658 = por %p656, %p657
      %p659 = scmp.ne.s32.totalorder %s651, %s653
      %p660 = scmp.eq.s32.totalorder %s85, 1
      %p661 = por %p659, %p660
      %p662 = scmp.ne.s32.totalorder %s653, %s654
      %p663 = scmp.eq.s32.totalorder %s85, 0
      %p664 = por %p662, %p663
      %p665 = scmp.ne.s32.totalorder %s653, %s654
      %p666 = scmp.eq.s32.totalorder %s86, 1
      %p667 = por %p665, %p666
      %p669 = scmp.ne.s32.totalorder %s654, %s668
      %p670 = scmp.eq.s32.totalorder %s86, 0
      %p671 = por %p669, %p670
      %s673 = sadd.s32 %s672, 1
      %p676 = scmp.eq.s32.totalorder %s80, 1
      %p677 = scmp.ne.s32.totalorder %s672, %s674
      %p678 = scmp.eq.s32.totalorder %s80, 0
      %p679 = por %p677, %p678
      %p680 = scmp.ne.s32.totalorder %s672, %s674
      %p681 = scmp.eq.s32.totalorder %s85, 1
      %p682 = por %p680, %p681
      %p683 = scmp.ne.s32.totalorder %s674, %s675
      %p684 = scmp.eq.s32.totalorder %s85, 0
      %p685 = por %p683, %p684
      %p686 = scmp.ne.s32.totalorder %s674, %s675
      %p687 = scmp.eq.s32.totalorder %s86, 1
      %p688 = por %p686, %p687
      %p690 = scmp.ne.s32.totalorder %s675, %s689
      %p691 = scmp.eq.s32.totalorder %s86, 0
      %p692 = por %p690, %p691
      %s694 = sadd.s32 %s693, 1
      %p697 = scmp.eq.s32.totalorder %s80, 1
      %p698 = scmp.ne.s32.totalorder %s693, %s695
      %p699 = scmp.eq.s32.totalorder %s80, 0
      %p700 = por %p698, %p699
      %p701 = scmp.ne.s32.totalorder %s693, %s695
      %p702 = scmp.eq.s32.totalorder %s85, 1
      %p703 = por %p701, %p702
      %p704 = scmp.ne.s32.totalorder %s695, %s696
      %p705 = scmp.eq.s32.totalorder %s85, 0
      %p706 = por %p704, %p705
      %p707 = scmp.ne.s32.totalorder %s695, %s696
      %p708 = scmp.eq.s32.totalorder %s86, 1
      %p709 = por %p707, %p708
      %p711 = scmp.ne.s32.totalorder %s696, %s710
      %p712 = scmp.eq.s32.totalorder %s86, 0
      %p713 = por %p711, %p712
      %s715 = sadd.s32 %s714, 1
      %p718 = scmp.eq.s32.totalorder %s80, 1
      %p719 = scmp.ne.s32.totalorder %s714, %s716
      %p720 = scmp.eq.s32.totalorder %s80, 0
      %p721 = por %p719, %p720
      %p722 = scmp.ne.s32.totalorder %s714, %s716
      %p723 = scmp.eq.s32.totalorder %s85, 1
      %p724 = por %p722, %p723
      %p725 = scmp.ne.s32.totalorder %s716, %s717
      %p726 = scmp.eq.s32.totalorder %s85, 0
      %p727 = por %p725, %p726
      %p728 = scmp.ne.s32.totalorder %s716, %s717
      %p729 = scmp.eq.s32.totalorder %s86, 1
      %p730 = por %p728, %p729
      %p732 = scmp.ne.s32.totalorder %s717, %s731
      %p733 = scmp.eq.s32.totalorder %s86, 0
      %p734 = por %p732, %p733
      %s736 = sadd.s32 %s735, 1
      %p739 = scmp.eq.s32.totalorder %s80, 1
      %p740 = scmp.ne.s32.totalorder %s735, %s737
      %p741 = scmp.eq.s32.totalorder %s80, 0
      %p742 = por %p740, %p741
      %p743 = scmp.ne.s32.totalorder %s735, %s737
      %p744 = scmp.eq.s32.totalorder %s85, 1
      %p745 = por %p743, %p744
      %p746 = scmp.ne.s32.totalorder %s737, %s738
      %p747 = scmp.eq.s32.totalorder %s85, 0
      %p748 = por %p746, %p747
      %p749 = scmp.ne.s32.totalorder %s737, %s738
      %p750 = scmp.eq.s32.totalorder %s86, 1
      %p751 = por %p749, %p750
      %p753 = scmp.ne.s32.totalorder %s738, %s752
      %p754 = scmp.eq.s32.totalorder %s86, 0
      %p755 = por %p753, %p754
      %s757 = sadd.s32 %s756, 1
      %p760 = scmp.eq.s32.totalorder %s80, 1
      %p761 = scmp.ne.s32.totalorder %s756, %s758
      %p762 = scmp.eq.s32.totalorder %s80, 0
      %p763 = por %p761, %p762
      %p764 = scmp.ne.s32.totalorder %s756, %s758
      %p765 = scmp.eq.s32.totalorder %s85, 1
      %p766 = por %p764, %p765
      %p767 = scmp.ne.s32.totalorder %s758, %s759
      %p768 = scmp.eq.s32.totalorder %s85, 0
      %p769 = por %p767, %p768
      %p770 = scmp.ne.s32.totalorder %s758, %s759
      %p771 = scmp.eq.s32.totalorder %s86, 1
      %p772 = por %p770, %p771
      %p774 = scmp.ne.s32.totalorder %s759, %s773
      %p775 = scmp.eq.s32.totalorder %s86, 0
      %p776 = por %p774, %p775
      %s778 = sadd.s32 %s777, 1
      %p781 = scmp.eq.s32.totalorder %s80, 1
      %p782 = scmp.ne.s32.totalorder %s777, %s779
      %p783 = scmp.eq.s32.totalorder %s80, 0
      %p784 = por %p782, %p783
      %p785 = scmp.ne.s32.totalorder %s777, %s779
      %p786 = scmp.eq.s32.totalorder %s85, 1
      %p787 = por %p785, %p786
      %p788 = scmp.ne.s32.totalorder %s779, %s780
      %p789 = scmp.eq.s32.totalorder %s85, 0
      %p790 = por %p788, %p789
      %p791 = scmp.ne.s32.totalorder %s779, %s780
      %p792 = scmp.eq.s32.totalorder %s86, 1
      %p793 = por %p791, %p792
      %p795 = scmp.ne.s32.totalorder %s780, %s794
      %p796 = scmp.eq.s32.totalorder %s86, 0
      %p797 = por %p795, %p796
      %s799 = sadd.s32 %s798, 1
      %p802 = scmp.eq.s32.totalorder %s80, 1
      %p803 = scmp.ne.s32.totalorder %s798, %s800
      %p804 = scmp.eq.s32.totalorder %s80, 0
      %p805 = por %p803, %p804
      %p806 = scmp.ne.s32.totalorder %s798, %s800
      %p807 = scmp.eq.s32.totalorder %s85, 1
      %p808 = por %p806, %p807
      %p809 = scmp.ne.s32.totalorder %s800, %s801
      %p810 = scmp.eq.s32.totalorder %s85, 0
      %p811 = por %p809, %p810
      %p812 = scmp.ne.s32.totalorder %s800, %s801
      %p813 = scmp.eq.s32.totalorder %s86, 1
      %p814 = por %p812, %p813
      %p816 = scmp.ne.s32.totalorder %s801, %s815
      %p817 = scmp.eq.s32.totalorder %s86, 0
      %p818 = por %p816, %p817
      %p819 = scmp.le.s32.totalorder 1, %s80
      %p820 = scmp.lt.s32.totalorder %s80, 3
      %p821 = pnand %p819, %p820
      %p822 = pneg %p821
      // Predicated region
      $region9: #{tpu_custom_call.1} parent=5 // pred_check
        _
      $region10: #{tpu_custom_call.1} parent=5 // pred_check_branch
        %824 = sbr.rel (%p821) target = $region12
      $region11: #{tpu_custom_call.1} parent=5 // pred_region
        %s825 = ssub.s32 %s80, 1
        // Predicated region
        $region13: #{tpu_custom_call.1} parent=11 // pred_check
          %p826 = pneg %p101
        $region14: #{tpu_custom_call.1} parent=11 // pred_check_branch
          %828 = sbr.rel (%p826) target = $region16
        $region15: #{tpu_custom_call.1} parent=11 // pred_region
          %s830 = ssub.s32 128, 128
          %831 = vsyncadd [#allocation6], %s830
          %s832 = sshll.u32 [#allocation5], 4
          %s833 = int_to_ptr.vmem [resolvable:$true] %s832
          %838 = dma.hbm_to_vmem [thread:$0]  %s3, 128, %s833, [#allocation6], 64, 64, 4
        $region16: #{tpu_custom_call.1} parent=11 // pred_fallthru
          _
        // Predicated region
        $region17: #{tpu_custom_call.1} parent=11 // pred_check
          %p839 = pneg %p122
        $region18: #{tpu_custom_call.1} parent=11 // pred_check_branch
          %841 = sbr.rel (%p839) target = $region20
        $region19: #{tpu_custom_call.1} parent=11 // pred_region
          %s843 = ssub.s32 128, 128
          %844 = vsyncadd [#allocation9], %s843
          %s846 = sshll.u32 [#allocation8], 4
          %s847 = int_to_ptr.vmem [resolvable:$true] %s846
          %849 = dma.hbm_to_vmem [thread:$0]  %s5, 128, %s847, [#allocation9]
        $region20: #{tpu_custom_call.1} parent=11 // pred_fallthru
          _
        // Predicated region
        $region21: #{tpu_custom_call.1} parent=11 // pred_check
          %p850 = pneg %p143
        $region22: #{tpu_custom_call.1} parent=11 // pred_check_branch
          %852 = sbr.rel (%p850) target = $region24
        $region23: #{tpu_custom_call.1} parent=11 // pred_region
          %s854 = ssub.s32 128, 128
          %855 = vsyncadd [#allocation9], %s854
          %s856 = sshll.u32 [#allocation10], 4
          %s857 = int_to_ptr.vmem [resolvable:$true] %s856
          %862 = dma.hbm_to_vmem [thread:$0]  %s7, 128, %s857, [#allocation9], 64, 64, 4
        $region24: #{tpu_custom_call.1} parent=11 // pred_fallthru
          _
        // Predicated region
        $region25: #{tpu_custom_call.1} parent=11 // pred_check
          %p863 = pneg %p164
        $region26: #{tpu_custom_call.1} parent=11 // pred_check_branch
          %865 = sbr.rel (%p863) target = $region28
        $region27: #{tpu_custom_call.1} parent=11 // pred_region
          %s867 = ssub.s32 16, 16
          %868 = vsyncadd [#allocation12], %s867
          %s870 = sshll.u32 [#allocation11], 4
          %s871 = int_to_ptr.vmem [resolvable:$true] %s870
          %873 = dma.hbm_to_vmem [thread:$0]  %s9, 16, %s871, [#allocation12]
        $region28: #{tpu_custom_call.1} parent=11 // pred_fallthru
          _
        // Predicated region
        $region29: #{tpu_custom_call.1} parent=11 // pred_check
          %p874 = pneg %p185
        $region30: #{tpu_custom_call.1} parent=11 // pred_check_branch
          %876 = sbr.rel (%p874) target = $region32
        $region31: #{tpu_custom_call.1} parent=11 // pred_region
          %s878 = ssub.s32 16, 16
          %879 = vsyncadd [#allocation12], %s878
          %s881 = sshll.u32 [#allocation13], 4
          %s882 = int_to_ptr.vmem [resolvable:$true] %s881
          %884 = dma.hbm_to_vmem [thread:$0]  %s11, 16, %s882, [#allocation12]
        $region32: #{tpu_custom_call.1} parent=11 // pred_fallthru
          _
        // Predicated region
        $region33: #{tpu_custom_call.1} parent=11 // pred_check
          %p885 = pneg %p206
        $region34: #{tpu_custom_call.1} parent=11 // pred_check_branch
          %887 = sbr.rel (%p885) target = $region36
        $region35: #{tpu_custom_call.1} parent=11 // pred_region
          %s889 = ssub.s32 16, 16
          %890 = vsyncadd [#allocation15], %s889
          %s892 = sshll.u32 [#allocation14], 4
          %s893 = int_to_ptr.vmem [resolvable:$true] %s892
          %895 = dma.hbm_to_vmem [thread:$0]  %s13, 16, %s893, [#allocation15]
        $region36: #{tpu_custom_call.1} parent=11 // pred_fallthru
          _
        // Predicated region
        $region37: #{tpu_custom_call.1} parent=11 // pred_check
          %p896 = pneg %p643
        $region38: #{tpu_custom_call.1} parent=11 // pred_check_branch
          %898 = sbr.rel (%p896) target = $region40
        $region39: #{tpu_custom_call.1} parent=11 // pred_region
          _
        $region40: #{tpu_custom_call.1} parent=11 // pred_fallthru
          _
        // Predicated region
        $region41: #{tpu_custom_call.1} parent=11 // pred_check
          %p899 = pneg %p664
        $region42: #{tpu_custom_call.1} parent=11 // pred_check_branch
          %901 = sbr.rel (%p899) target = $region44
        $region43: #{tpu_custom_call.1} parent=11 // pred_region
          _
        $region44: #{tpu_custom_call.1} parent=11 // pred_fallthru
          _
        // Predicated region
        $region45: #{tpu_custom_call.1} parent=11 // pred_check
          %p902 = pneg %p685
        $region46: #{tpu_custom_call.1} parent=11 // pred_check_branch
          %904 = sbr.rel (%p902) target = $region48
        $region47: #{tpu_custom_call.1} parent=11 // pred_region
          _
        $region48: #{tpu_custom_call.1} parent=11 // pred_fallthru
          _
        // Predicated region
        $region49: #{tpu_custom_call.1} parent=11 // pred_check
          %p905 = pneg %p706
        $region50: #{tpu_custom_call.1} parent=11 // pred_check_branch
          %907 = sbr.rel (%p905) target = $region52
        $region51: #{tpu_custom_call.1} parent=11 // pred_region
          _
        $region52: #{tpu_custom_call.1} parent=11 // pred_fallthru
          _
        // Predicated region
        $region53: #{tpu_custom_call.1} parent=11 // pred_check
          %p908 = pneg %p727
        $region54: #{tpu_custom_call.1} parent=11 // pred_check_branch
          %910 = sbr.rel (%p908) target = $region56
        $region55: #{tpu_custom_call.1} parent=11 // pred_region
          _
        $region56: #{tpu_custom_call.1} parent=11 // pred_fallthru
          _
        // Predicated region
        $region57: #{tpu_custom_call.1} parent=11 // pred_check
          %p911 = pneg %p748
        $region58: #{tpu_custom_call.1} parent=11 // pred_check_branch
          %913 = sbr.rel (%p911) target = $region60
        $region59: #{tpu_custom_call.1} parent=11 // pred_region
          _
        $region60: #{tpu_custom_call.1} parent=11 // pred_fallthru
          _
        // Predicated region
        $region61: #{tpu_custom_call.1} parent=11 // pred_check
          %p914 = pneg %p769
        $region62: #{tpu_custom_call.1} parent=11 // pred_check_branch
          %916 = sbr.rel (%p914) target = $region64
        $region63: #{tpu_custom_call.1} parent=11 // pred_region
          _
        $region64: #{tpu_custom_call.1} parent=11 // pred_fallthru
          _
      $region12: #{tpu_custom_call.1} parent=5 // pred_fallthru
        _
      %p917 = scmp.lt.s32.totalorder %s80, 2
      // Predicated region
      $region65: #{tpu_custom_call.1} parent=5 // pred_check
        %p918 = pneg %p917
      $region66: #{tpu_custom_call.1} parent=5 // pred_check_branch
        %920 = sbr.rel (%p918) target = $region68
      $region67: #{tpu_custom_call.1} parent=5 // pred_region
        // Predicated region
        $region69: #{tpu_custom_call.1} parent=67 // pred_check
          %p921 = pneg %p226
        $region70: #{tpu_custom_call.1} parent=67 // pred_check_branch
          %923 = sbr.rel (%p921) target = $region72
        $region71: #{tpu_custom_call.1} parent=67 // pred_region
          %s924 = sand.u32 %s80, 1
          %s925 = scalar_lea.sflag [#allocation6], %s924
          %s926 = sand.u32 %s216, 1
          %s927 = scalar_lea.vmem [#allocation16], %s926
          %s929 = ssub.s32 16, 16
          %930 = vsyncadd %s925, %s929
          %s931 = smul.addr %s80, 16
          %s932 = scalar_lea.hbm %s15, %s931
          %s934 = sshll.u32 %s927, 4
          %s935 = int_to_ptr.vmem [resolvable:$true] %s934
          %937 = dma.hbm_to_vmem [thread:$0]  %s932, 16, %s935, %s925
        $region72: #{tpu_custom_call.1} parent=67 // pred_fallthru
          _
        // Predicated region
        $region73: #{tpu_custom_call.1} parent=67 // pred_check
          %p938 = pneg %p252
        $region74: #{tpu_custom_call.1} parent=67 // pred_check_branch
          %940 = sbr.rel (%p938) target = $region76
        $region75: #{tpu_custom_call.1} parent=67 // pred_region
          %s941 = sand.u32 %s80, 1
          %s942 = scalar_lea.sflag [#allocation6], %s941
          %s943 = sand.u32 %s242, 1
          %s944 = scalar_lea.vmem [#allocation17], %s943
          %s946 = ssub.s32 16, 16
          %947 = vsyncadd %s942, %s946
          %s948 = smul.addr %s80, 16
          %s949 = scalar_lea.hbm %s17, %s948
          %s951 = sshll.u32 %s944, 4
          %s952 = int_to_ptr.vmem [resolvable:$true] %s951
          %954 = dma.hbm_to_vmem [thread:$0]  %s949, 16, %s952, %s942
        $region76: #{tpu_custom_call.1} parent=67 // pred_fallthru
          _
        // Predicated region
        $region77: #{tpu_custom_call.1} parent=67 // pred_check
          %p955 = pneg %p278
        $region78: #{tpu_custom_call.1} parent=67 // pred_check_branch
          %957 = sbr.rel (%p955) target = $region80
        $region79: #{tpu_custom_call.1} parent=67 // pred_region
          %p958 = scmp.lt.s32.totalorder %s80, 1
          %s959 = scalar_select %p958, %s80, 1
          %s960 = smul.addr %s959, 4
          %s961 = smul.addr %s960, 4
          %s962 = scalar_lea.vmem %s19, %s961
        $region80: #{tpu_custom_call.1} parent=67 // pred_fallthru
          _
        // Predicated region
        $region81: #{tpu_custom_call.1} parent=67 // pred_check
          %p963 = pneg %p304
        $region82: #{tpu_custom_call.1} parent=67 // pred_check_branch
          %965 = sbr.rel (%p963) target = $region84
        $region83: #{tpu_custom_call.1} parent=67 // pred_region
          %s966 = sand.u32 %s80, 1
          %s967 = scalar_lea.sflag [#allocation6], %s966
          %s968 = sand.u32 %s294, 1
          %s969 = scalar_lea.vmem [#allocation18], %s968
          %s971 = ssub.s32 16, 16
          %972 = vsyncadd %s967, %s971
          %s973 = smul.addr %s80, 16
          %s974 = scalar_lea.hbm %s21, %s973
          %s976 = sshll.u32 %s969, 4
          %s977 = int_to_ptr.vmem [resolvable:$true] %s976
          %979 = dma.hbm_to_vmem [thread:$0]  %s974, 16, %s977, %s967
        $region84: #{tpu_custom_call.1} parent=67 // pred_fallthru
          _
        // Predicated region
        $region85: #{tpu_custom_call.1} parent=67 // pred_check
          %p980 = pneg %p330
        $region86: #{tpu_custom_call.1} parent=67 // pred_check_branch
          %982 = sbr.rel (%p980) target = $region88
        $region87: #{tpu_custom_call.1} parent=67 // pred_region
          %p983 = scmp.lt.s32.totalorder %s80, 1
          %s984 = scalar_select %p983, %s80, 1
          %s985 = smul.addr %s984, 4
          %s986 = smul.addr %s985, 4
          %s987 = scalar_lea.vmem %s23, %s986
        $region88: #{tpu_custom_call.1} parent=67 // pred_fallthru
          _
        // Predicated region
        $region89: #{tpu_custom_call.1} parent=67 // pred_check
          %p988 = pneg %p356
        $region90: #{tpu_custom_call.1} parent=67 // pred_check_branch
          %990 = sbr.rel (%p988) target = $region92
        $region91: #{tpu_custom_call.1} parent=67 // pred_region
          %s991 = sand.u32 %s80, 1
          %s992 = scalar_lea.sflag [#allocation6], %s991
          %s993 = sand.u32 %s346, 1
          %s994 = scalar_lea.vmem [#allocation19], %s993
          %s996 = ssub.s32 16, 16
          %997 = vsyncadd %s992, %s996
          %s998 = smul.addr %s80, 16
          %s999 = scalar_lea.hbm %s25, %s998
          %s1001 = sshll.u32 %s994, 4
          %s1002 = int_to_ptr.vmem [resolvable:$true] %s1001
          %1004 = dma.hbm_to_vmem [thread:$0]  %s999, 16, %s1002, %s992
        $region92: #{tpu_custom_call.1} parent=67 // pred_fallthru
          _
        // Predicated region
        $region93: #{tpu_custom_call.1} parent=67 // pred_check
          %p1005 = pneg %p382
        $region94: #{tpu_custom_call.1} parent=67 // pred_check_branch
          %1007 = sbr.rel (%p1005) target = $region96
        $region95: #{tpu_custom_call.1} parent=67 // pred_region
          %p1008 = scmp.lt.s32.totalorder %s80, 1
          %s1009 = scalar_select %p1008, %s80, 1
          %s1010 = smul.addr %s1009, 4
          %s1011 = smul.addr %s1010, 4
          %s1012 = scalar_lea.vmem %s27, %s1011
        $region96: #{tpu_custom_call.1} parent=67 // pred_fallthru
          _
        // Predicated region
        $region97: #{tpu_custom_call.1} parent=67 // pred_check
          %p1013 = pneg %p408
        $region98: #{tpu_custom_call.1} parent=67 // pred_check_branch
          %1015 = sbr.rel (%p1013) target = $region100
        $region99: #{tpu_custom_call.1} parent=67 // pred_region
          %s1016 = sand.u32 %s80, 1
          %s1017 = scalar_lea.sflag [#allocation6], %s1016
          %s1018 = sand.u32 %s398, 1
          %s1019 = scalar_lea.vmem [#allocation20], %s1018
          %s1021 = ssub.s32 16, 16
          %1022 = vsyncadd %s1017, %s1021
          %s1023 = smul.addr %s80, 16
          %s1024 = scalar_lea.hbm %s29, %s1023
          %s1026 = sshll.u32 %s1019, 4
          %s1027 = int_to_ptr.vmem [resolvable:$true] %s1026
          %1029 = dma.hbm_to_vmem [thread:$0]  %s1024, 16, %s1027, %s1017
        $region100: #{tpu_custom_call.1} parent=67 // pred_fallthru
          _
        // Predicated region
        $region101: #{tpu_custom_call.1} parent=67 // pred_check
          %p1030 = pneg %p434
        $region102: #{tpu_custom_call.1} parent=67 // pred_check_branch
          %1032 = sbr.rel (%p1030) target = $region104
        $region103: #{tpu_custom_call.1} parent=67 // pred_region
          %p1033 = scmp.lt.s32.totalorder %s80, 1
          %s1034 = scalar_select %p1033, %s80, 1
          %s1035 = smul.addr %s1034, 4
          %s1036 = smul.addr %s1035, 4
          %s1037 = scalar_lea.vmem %s31, %s1036
        $region104: #{tpu_custom_call.1} parent=67 // pred_fallthru
          _
        // Predicated region
        $region105: #{tpu_custom_call.1} parent=67 // pred_check
          %p1038 = pneg %p460
        $region106: #{tpu_custom_call.1} parent=67 // pred_check_branch
          %1040 = sbr.rel (%p1038) target = $region108
        $region107: #{tpu_custom_call.1} parent=67 // pred_region
          %p1041 = scmp.lt.s32.totalorder %s80, 1
          %s1042 = scalar_select %p1041, %s80, 1
          %s1043 = scalar_lea.vmem %s33, %s1042
        $region108: #{tpu_custom_call.1} parent=67 // pred_fallthru
          _
        // Predicated region
        $region109: #{tpu_custom_call.1} parent=67 // pred_check
          %p1044 = pneg %p486
        $region110: #{tpu_custom_call.1} parent=67 // pred_check_branch
          %1046 = sbr.rel (%p1044) target = $region112
        $region111: #{tpu_custom_call.1} parent=67 // pred_region
          %s1047 = sand.u32 %s80, 1
          %s1048 = scalar_lea.sflag [#allocation6], %s1047
          %s1049 = sand.u32 %s476, 1
          %s1050 = scalar_lea.vmem [#allocation21], %s1049
          %s1052 = ssub.s32 16, 16
          %1053 = vsyncadd %s1048, %s1052
          %s1054 = smul.addr %s80, 16
          %s1055 = scalar_lea.hbm %s35, %s1054
          %s1057 = sshll.u32 %s1050, 4
          %s1058 = int_to_ptr.vmem [resolvable:$true] %s1057
          %1060 = dma.hbm_to_vmem [thread:$0]  %s1055, 16, %s1058, %s1048
        $region112: #{tpu_custom_call.1} parent=67 // pred_fallthru
          _
        // Predicated region
        $region113: #{tpu_custom_call.1} parent=67 // pred_check
          %p1061 = pneg %p512
        $region114: #{tpu_custom_call.1} parent=67 // pred_check_branch
          %1063 = sbr.rel (%p1061) target = $region116
        $region115: #{tpu_custom_call.1} parent=67 // pred_region
          %s1064 = sand.u32 %s80, 1
          %s1065 = scalar_lea.sflag [#allocation6], %s1064
          %s1066 = sand.u32 %s502, 1
          %s1067 = scalar_lea.vmem [#allocation22], %s1066
          %s1069 = ssub.s32 16, 16
          %1070 = vsyncadd %s1065, %s1069
          %s1071 = smul.addr %s80, 16
          %s1072 = scalar_lea.hbm %s37, %s1071
          %s1074 = sshll.u32 %s1067, 4
          %s1075 = int_to_ptr.vmem [resolvable:$true] %s1074
          %1077 = dma.hbm_to_vmem [thread:$0]  %s1072, 16, %s1075, %s1065
        $region116: #{tpu_custom_call.1} parent=67 // pred_fallthru
          _
        // Predicated region
        $region117: #{tpu_custom_call.1} parent=67 // pred_check
          %p1078 = pneg %p538
        $region118: #{tpu_custom_call.1} parent=67 // pred_check_branch
          %1080 = sbr.rel (%p1078) target = $region120
        $region119: #{tpu_custom_call.1} parent=67 // pred_region
          %p1081 = scmp.lt.s32.totalorder %s80, 1
          %s1082 = scalar_select %p1081, %s80, 1
          %s1083 = smul.addr %s1082, 4
          %s1084 = smul.addr %s1083, 4
          %s1085 = scalar_lea.vmem %s39, %s1084
        $region120: #{tpu_custom_call.1} parent=67 // pred_fallthru
          _
        // Predicated region
        $region121: #{tpu_custom_call.1} parent=67 // pred_check
          %p1086 = pneg %p564
        $region122: #{tpu_custom_call.1} parent=67 // pred_check_branch
          %1088 = sbr.rel (%p1086) target = $region124
        $region123: #{tpu_custom_call.1} parent=67 // pred_region
          %s1089 = sand.u32 %s80, 1
          %s1090 = scalar_lea.sflag [#allocation6], %s1089
          %s1091 = sand.u32 %s554, 1
          %s1092 = scalar_lea.vmem [#allocation23], %s1091
          %s1094 = ssub.s32 16, 16
          %1095 = vsyncadd %s1090, %s1094
          %s1096 = smul.addr %s80, 16
          %s1097 = scalar_lea.hbm %s41, %s1096
          %s1099 = sshll.u32 %s1092, 4
          %s1100 = int_to_ptr.vmem [resolvable:$true] %s1099
          %1102 = dma.hbm_to_vmem [thread:$0]  %s1097, 16, %s1100, %s1090
        $region124: #{tpu_custom_call.1} parent=67 // pred_fallthru
          _
        // Predicated region
        $region125: #{tpu_custom_call.1} parent=67 // pred_check
          %p1103 = pneg %p590
        $region126: #{tpu_custom_call.1} parent=67 // pred_check_branch
          %1105 = sbr.rel (%p1103) target = $region128
        $region127: #{tpu_custom_call.1} parent=67 // pred_region
          %p1106 = scmp.lt.s32.totalorder %s80, 1
          %s1107 = scalar_select %p1106, %s80, 1
          %s1108 = smul.addr %s1107, 8
          %s1109 = smul.addr %s1108, 4
          %s1110 = scalar_lea.vmem %s43, %s1109
        $region128: #{tpu_custom_call.1} parent=67 // pred_fallthru
          _
        // Predicated region
        $region129: #{tpu_custom_call.1} parent=67 // pred_check
          %p1111 = pneg %p616
        $region130: #{tpu_custom_call.1} parent=67 // pred_check_branch
          %1113 = sbr.rel (%p1111) target = $region132
        $region131: #{tpu_custom_call.1} parent=67 // pred_region
          %s1114 = sand.u32 %s80, 1
          %s1115 = scalar_lea.sflag [#allocation6], %s1114
          %s1116 = sand.u32 %s606, 1
          %s1117 = scalar_lea.vmem [#allocation24], %s1116
          %s1119 = ssub.s32 16, 16
          %1120 = vsyncadd %s1115, %s1119
          %s1121 = smul.addr %s80, 16
          %s1122 = scalar_lea.hbm %s45, %s1121
          %s1124 = sshll.u32 %s1117, 4
          %s1125 = int_to_ptr.vmem [resolvable:$true] %s1124
          %1127 = dma.hbm_to_vmem [thread:$0]  %s1122, 16, %s1125, %s1115
        $region132: #{tpu_custom_call.1} parent=67 // pred_fallthru
          _
      $region68: #{tpu_custom_call.1} parent=5 // pred_fallthru
        _
      %p1128 = scmp.le.s32.totalorder 1, %s80
      %p1129 = scmp.lt.s32.totalorder %s80, 3
      %p1130 = pnand %p1128, %p1129
      %p1131 = pneg %p1130
      // Predicated region
      $region133: #{tpu_custom_call.1} parent=5 // pred_check
        _
      $region134: #{tpu_custom_call.1} parent=5 // pred_check_branch
        %1133 = sbr.rel (%p1130) target = $region136
      $region135: #{tpu_custom_call.1} parent=5 // pred_region
        %s1134 = ssub.s32 %s80, 1
        // Predicated region
        $region137: #{tpu_custom_call.1} parent=135 // pred_check
          %p1135 = pneg %p101
        $region138: #{tpu_custom_call.1} parent=135 // pred_check_branch
          %1137 = sbr.rel (%p1135) target = $region140
        $region139: #{tpu_custom_call.1} parent=135 // pred_region
          %1138 = dma.done [#allocation6], 128
        $region140: #{tpu_custom_call.1} parent=135 // pred_fallthru
          _
        // Predicated region
        $region141: #{tpu_custom_call.1} parent=135 // pred_check
          %p1139 = pneg %p122
        $region142: #{tpu_custom_call.1} parent=135 // pred_check_branch
          %1141 = sbr.rel (%p1139) target = $region144
        $region143: #{tpu_custom_call.1} parent=135 // pred_region
          %1142 = dma.done [#allocation9], 128
        $region144: #{tpu_custom_call.1} parent=135 // pred_fallthru
          _
        // Predicated region
        $region145: #{tpu_custom_call.1} parent=135 // pred_check
          %p1143 = pneg %p143
        $region146: #{tpu_custom_call.1} parent=135 // pred_check_branch
          %1145 = sbr.rel (%p1143) target = $region148
        $region147: #{tpu_custom_call.1} parent=135 // pred_region
          %1146 = dma.done [#allocation9], 128
        $region148: #{tpu_custom_call.1} parent=135 // pred_fallthru
          _
        // Predicated region
        $region149: #{tpu_custom_call.1} parent=135 // pred_check
          %p1147 = pneg %p164
        $region150: #{tpu_custom_call.1} parent=135 // pred_check_branch
          %1149 = sbr.rel (%p1147) target = $region152
        $region151: #{tpu_custom_call.1} parent=135 // pred_region
          %1150 = dma.done [#allocation12], 16
        $region152: #{tpu_custom_call.1} parent=135 // pred_fallthru
          _
        // Predicated region
        $region153: #{tpu_custom_call.1} parent=135 // pred_check
          %p1151 = pneg %p185
        $region154: #{tpu_custom_call.1} parent=135 // pred_check_branch
          %1153 = sbr.rel (%p1151) target = $region156
        $region155: #{tpu_custom_call.1} parent=135 // pred_region
          %1154 = dma.done [#allocation12], 16
        $region156: #{tpu_custom_call.1} parent=135 // pred_fallthru
          _
        // Predicated region
        $region157: #{tpu_custom_call.1} parent=135 // pred_check
          %p1155 = pneg %p206
        $region158: #{tpu_custom_call.1} parent=135 // pred_check_branch
          %1157 = sbr.rel (%p1155) target = $region160
        $region159: #{tpu_custom_call.1} parent=135 // pred_region
          %1158 = dma.done [#allocation15], 16
        $region160: #{tpu_custom_call.1} parent=135 // pred_fallthru
          _
        %s1159 = sand.u32 %s85, 1
        %s1160 = scalar_lea.sflag [#allocation6], %s1159
        %s1161 = sand.u32 %s219, 1
        %s1162 = scalar_lea.vmem [#allocation16], %s1161
        // Predicated region
        $region161: #{tpu_custom_call.1} parent=135 // pred_check
          %p1163 = pneg %p232
        $region162: #{tpu_custom_call.1} parent=135 // pred_check_branch
          %1165 = sbr.rel (%p1163) target = $region164
        $region163: #{tpu_custom_call.1} parent=135 // pred_region
          %1166 = dma.done %s1160, 16
        $region164: #{tpu_custom_call.1} parent=135 // pred_fallthru
          _
        %s1167 = sand.u32 %s85, 1
        %s1168 = scalar_lea.sflag [#allocation6], %s1167
        %s1169 = sand.u32 %s245, 1
        %s1170 = scalar_lea.vmem [#allocation17], %s1169
        // Predicated region
        $region165: #{tpu_custom_call.1} parent=135 // pred_check
          %p1171 = pneg %p258
        $region166: #{tpu_custom_call.1} parent=135 // pred_check_branch
          %1173 = sbr.rel (%p1171) target = $region168
        $region167: #{tpu_custom_call.1} parent=135 // pred_region
          %1174 = dma.done %s1168, 16
        $region168: #{tpu_custom_call.1} parent=135 // pred_fallthru
          _
        %s1175 = sand.u32 %s85, 1
        %s1176 = scalar_lea.sflag [#allocation6], %s1175
        %s1177 = sand.u32 %s297, 1
        %s1178 = scalar_lea.vmem [#allocation18], %s1177
        // Predicated region
        $region169: #{tpu_custom_call.1} parent=135 // pred_check
          %p1179 = pneg %p310
        $region170: #{tpu_custom_call.1} parent=135 // pred_check_branch
          %1181 = sbr.rel (%p1179) target = $region172
        $region171: #{tpu_custom_call.1} parent=135 // pred_region
          %1182 = dma.done %s1176, 16
        $region172: #{tpu_custom_call.1} parent=135 // pred_fallthru
          _
        %s1183 = sand.u32 %s85, 1
        %s1184 = scalar_lea.sflag [#allocation6], %s1183
        %s1185 = sand.u32 %s349, 1
        %s1186 = scalar_lea.vmem [#allocation19], %s1185
        // Predicated region
        $region173: #{tpu_custom_call.1} parent=135 // pred_check
          %p1187 = pneg %p362
        $region174: #{tpu_custom_call.1} parent=135 // pred_check_branch
          %1189 = sbr.rel (%p1187) target = $region176
        $region175: #{tpu_custom_call.1} parent=135 // pred_region
          %1190 = dma.done %s1184, 16
        $region176: #{tpu_custom_call.1} parent=135 // pred_fallthru
          _
        %s1191 = sand.u32 %s85, 1
        %s1192 = scalar_lea.sflag [#allocation6], %s1191
        %s1193 = sand.u32 %s401, 1
        %s1194 = scalar_lea.vmem [#allocation20], %s1193
        // Predicated region
        $region177: #{tpu_custom_call.1} parent=135 // pred_check
          %p1195 = pneg %p414
        $region178: #{tpu_custom_call.1} parent=135 // pred_check_branch
          %1197 = sbr.rel (%p1195) target = $region180
        $region179: #{tpu_custom_call.1} parent=135 // pred_region
          %1198 = dma.done %s1192, 16
        $region180: #{tpu_custom_call.1} parent=135 // pred_fallthru
          _
        %s1199 = sand.u32 %s85, 1
        %s1200 = scalar_lea.sflag [#allocation6], %s1199
        %s1201 = sand.u32 %s479, 1
        %s1202 = scalar_lea.vmem [#allocation21], %s1201
        // Predicated region
        $region181: #{tpu_custom_call.1} parent=135 // pred_check
          %p1203 = pneg %p492
        $region182: #{tpu_custom_call.1} parent=135 // pred_check_branch
          %1205 = sbr.rel (%p1203) target = $region184
        $region183: #{tpu_custom_call.1} parent=135 // pred_region
          %1206 = dma.done %s1200, 16
        $region184: #{tpu_custom_call.1} parent=135 // pred_fallthru
          _
        %s1207 = sand.u32 %s85, 1
        %s1208 = scalar_lea.sflag [#allocation6], %s1207
        %s1209 = sand.u32 %s505, 1
        %s1210 = scalar_lea.vmem [#allocation22], %s1209
        // Predicated region
        $region185: #{tpu_custom_call.1} parent=135 // pred_check
          %p1211 = pneg %p518
        $region186: #{tpu_custom_call.1} parent=135 // pred_check_branch
          %1213 = sbr.rel (%p1211) target = $region188
        $region187: #{tpu_custom_call.1} parent=135 // pred_region
          %1214 = dma.done %s1208, 16
        $region188: #{tpu_custom_call.1} parent=135 // pred_fallthru
          _
        %s1215 = sand.u32 %s85, 1
        %s1216 = scalar_lea.sflag [#allocation6], %s1215
        %s1217 = sand.u32 %s557, 1
        %s1218 = scalar_lea.vmem [#allocation23], %s1217
        // Predicated region
        $region189: #{tpu_custom_call.1} parent=135 // pred_check
          %p1219 = pneg %p570
        $region190: #{tpu_custom_call.1} parent=135 // pred_check_branch
          %1221 = sbr.rel (%p1219) target = $region192
        $region191: #{tpu_custom_call.1} parent=135 // pred_region
          %1222 = dma.done %s1216, 16
        $region192: #{tpu_custom_call.1} parent=135 // pred_fallthru
          _
        %s1223 = sand.u32 %s85, 1
        %s1224 = scalar_lea.sflag [#allocation6], %s1223
        %s1225 = sand.u32 %s609, 1
        %s1226 = scalar_lea.vmem [#allocation24], %s1225
        // Predicated region
        $region193: #{tpu_custom_call.1} parent=135 // pred_check
          %p1227 = pneg %p622
        $region194: #{tpu_custom_call.1} parent=135 // pred_check_branch
          %1229 = sbr.rel (%p1227) target = $region196
        $region195: #{tpu_custom_call.1} parent=135 // pred_region
          %1230 = dma.done %s1224, 16
        $region196: #{tpu_custom_call.1} parent=135 // pred_fallthru
          _
        %p1231 = pneg %p101
        %p1232 = pneg %p98
        %p1233 = pneg %p122
        %p1234 = pneg %p119
        %p1235 = pneg %p143
        %p1236 = pneg %p140
        %p1237 = pneg %p164
        %p1238 = pneg %p161
        %p1239 = pneg %p185
        %p1240 = pneg %p182
        %p1241 = pneg %p206
        %p1242 = pneg %p203
        %s1243 = sand.u32 %s85, 1
        %s1244 = scalar_lea.sflag [#allocation6], %s1243
        %s1245 = sand.u32 %s219, 1
        %s1246 = scalar_lea.vmem [#allocation16], %s1245
        %p1247 = pneg %p232
        %p1248 = pneg %p229
        %s1249 = sand.u32 %s85, 1
        %s1250 = scalar_lea.sflag [#allocation6], %s1249
        %s1251 = sand.u32 %s245, 1
        %s1252 = scalar_lea.vmem [#allocation17], %s1251
        %p1253 = pneg %p258
        %p1254 = pneg %p255
        %p1255 = scmp.lt.s32.totalorder %s85, 1
        %s1256 = scalar_select %p1255, %s85, 1
        %s1257 = smul.addr %s1256, 4
        %s1258 = smul.addr %s1257, 4
        %s1259 = scalar_lea.vmem %s19, %s1258
        %p1260 = pneg %p284
        %p1261 = pneg %p281
        %s1262 = sand.u32 %s85, 1
        %s1263 = scalar_lea.sflag [#allocation6], %s1262
        %s1264 = sand.u32 %s297, 1
        %s1265 = scalar_lea.vmem [#allocation18], %s1264
        %p1266 = pneg %p310
        %p1267 = pneg %p307
        %p1268 = scmp.lt.s32.totalorder %s85, 1
        %s1269 = scalar_select %p1268, %s85, 1
        %s1270 = smul.addr %s1269, 4
        %s1271 = smul.addr %s1270, 4
        %s1272 = scalar_lea.vmem %s23, %s1271
        %p1273 = pneg %p336
        %p1274 = pneg %p333
        %s1275 = sand.u32 %s85, 1
        %s1276 = scalar_lea.sflag [#allocation6], %s1275
        %s1277 = sand.u32 %s349, 1
        %s1278 = scalar_lea.vmem [#allocation19], %s1277
        %p1279 = pneg %p362
        %p1280 = pneg %p359
        %p1281 = scmp.lt.s32.totalorder %s85, 1
        %s1282 = scalar_select %p1281, %s85, 1
        %s1283 = smul.addr %s1282, 4
        %s1284 = smul.addr %s1283, 4
        %s1285 = scalar_lea.vmem %s27, %s1284
        %p1286 = pneg %p388
        %p1287 = pneg %p385
        %s1288 = sand.u32 %s85, 1
        %s1289 = scalar_lea.sflag [#allocation6], %s1288
        %s1290 = sand.u32 %s401, 1
        %s1291 = scalar_lea.vmem [#allocation20], %s1290
        %p1292 = pneg %p414
        %p1293 = pneg %p411
        %p1294 = scmp.lt.s32.totalorder %s85, 1
        %s1295 = scalar_select %p1294, %s85, 1
        %s1296 = smul.addr %s1295, 4
        %s1297 = smul.addr %s1296, 4
        %s1298 = scalar_lea.vmem %s31, %s1297
        %p1299 = pneg %p440
        %p1300 = pneg %p437
        %p1301 = scmp.lt.s32.totalorder %s85, 1
        %s1302 = scalar_select %p1301, %s85, 1
        %s1303 = scalar_lea.vmem %s33, %s1302
        %p1304 = pneg %p466
        %p1305 = pneg %p463
        %s1306 = sand.u32 %s85, 1
        %s1307 = scalar_lea.sflag [#allocation6], %s1306
        %s1308 = sand.u32 %s479, 1
        %s1309 = scalar_lea.vmem [#allocation21], %s1308
        %p1310 = pneg %p492
        %p1311 = pneg %p489
        %s1312 = sand.u32 %s85, 1
        %s1313 = scalar_lea.sflag [#allocation6], %s1312
        %s1314 = sand.u32 %s505, 1
        %s1315 = scalar_lea.vmem [#allocation22], %s1314
        %p1316 = pneg %p518
        %p1317 = pneg %p515
        %p1318 = scmp.lt.s32.totalorder %s85, 1
        %s1319 = scalar_select %p1318, %s85, 1
        %s1320 = smul.addr %s1319, 4
        %s1321 = smul.addr %s1320, 4
        %s1322 = scalar_lea.vmem %s39, %s1321
        %p1323 = pneg %p544
        %p1324 = pneg %p541
        %s1325 = sand.u32 %s85, 1
        %s1326 = scalar_lea.sflag [#allocation6], %s1325
        %s1327 = sand.u32 %s557, 1
        %s1328 = scalar_lea.vmem [#allocation23], %s1327
        %p1329 = pneg %p570
        %p1330 = pneg %p567
        %p1331 = scmp.lt.s32.totalorder %s85, 1
        %s1332 = scalar_select %p1331, %s85, 1
        %s1333 = smul.addr %s1332, 8
        %s1334 = smul.addr %s1333, 4
        %s1335 = scalar_lea.vmem %s43, %s1334
        %p1336 = pneg %p596
        %p1337 = pneg %p593
        %s1338 = sand.u32 %s85, 1
        %s1339 = scalar_lea.sflag [#allocation6], %s1338
        %s1340 = sand.u32 %s609, 1
        %s1341 = scalar_lea.vmem [#allocation24], %s1340
        %p1342 = pneg %p622
        %p1343 = pneg %p619
        %p1344 = pneg %p643
        %p1345 = pneg %p640
        %p1346 = pneg %p664
        %p1347 = pneg %p661
        %p1348 = pneg %p685
        %p1349 = pneg %p682
        %p1350 = pneg %p706
        %p1351 = pneg %p703
        %p1352 = pneg %p727
        %p1353 = pneg %p724
        %p1354 = pneg %p748
        %p1355 = pneg %p745
        %p1356 = pneg %p769
        %p1357 = pneg %p766
        %p1358 = pneg %p790
        %p1359 = pneg %p787
        %p1360 = pneg %p811
        %p1361 = pneg %p808
        %p1362 = scmp.lt.s32.totalorder %s85, 1
        %s1363 = scalar_select %p1362, %s85, 1
        %s1364 = smul.addr %s1363, 4
        %s1365 = smul.addr %s1364, 4
        %s1366 = scalar_lea.vmem %s19, %s1365
        %p1367 = scmp.lt.s32.totalorder %s85, 1
        %s1368 = scalar_select %p1367, %s85, 1
        %s1369 = smul.addr %s1368, 4
        %s1370 = smul.addr %s1369, 4
        %s1371 = scalar_lea.vmem %s23, %s1370
        %p1372 = scmp.lt.s32.totalorder %s85, 1
        %s1373 = scalar_select %p1372, %s85, 1
        %s1374 = smul.addr %s1373, 4
        %s1375 = smul.addr %s1374, 4
        %s1376 = scalar_lea.vmem %s27, %s1375
        %p1377 = scmp.lt.s32.totalorder %s85, 1
        %s1378 = scalar_select %p1377, %s85, 1
        %s1379 = smul.addr %s1378, 4
        %s1380 = smul.addr %s1379, 4
        %s1381 = scalar_lea.vmem %s31, %s1380
        %p1382 = scmp.lt.s32.totalorder %s85, 1
        %s1383 = scalar_select %p1382, %s85, 1
        %s1384 = scalar_lea.vmem %s33, %s1383
        %p1385 = scmp.lt.s32.totalorder %s85, 1
        %s1386 = scalar_select %p1385, %s85, 1
        %s1387 = smul.addr %s1386, 4
        %s1388 = smul.addr %s1387, 4
        %s1389 = scalar_lea.vmem %s39, %s1388
        %p1390 = scmp.lt.s32.totalorder %s85, 1
        %s1391 = scalar_select %p1390, %s85, 1
        %s1392 = smul.addr %s1391, 8
        %s1393 = smul.addr %s1392, 4
        %s1394 = scalar_lea.vmem %s43, %s1393
        %p1396 = scmp.eq.s32.totalorder %s85, 0
        // Predicated region
        $region197: #{tpu_custom_call.1} parent=135 // pred_check
          %p1397 = pneg %p1396
        $region198: #{tpu_custom_call.1} parent=135 // pred_check_branch
          %1399 = sbr.rel (%p1397) target = $region200
        $region199: #{tpu_custom_call.1} parent=135 // pred_region
          %v1400 = vld [vmem:[#allocation5] sm:$0xf]
          %v1401 = vld [vmem:[#allocation5 + $0x4] sm:$0xf]
          %v1402 = vld [vmem:[#allocation10] sm:$0xf]
          %v1403 = vld [vmem:[#allocation10 + $0x4] sm:$0xf]
          %v1404 = vld [vmem:[#allocation11] sm:$0x1]
          %v1406 = vlaneseq
          %v1407 = vshrl.u32 %v1406, 7
          %v1408 = vsub.s32 0, %v1407
          %v1409 = vrot.slane %v1404, %v1408
          %v1413 = vunpack.c.l.b16 %v1400
          %v1414 = vunpack.c.l.b16 %v1401
          %v1415 = vpack.c.b16 %v1414, %v1413
          %v1418 = vunpack.c.l.b16 %v1402
          %v1419 = vunpack.c.l.b16 %v1403
          %v1420 = vpack.c.b16 %v1419, %v1418
          %vm1422 = vcmask 130048
          %v1424 = vsel %vm1422, %v1415, 0
          %1426 = vmatprep.subr.bf16.mxu0 0
          %1427 = vmatpush1.bf16.msra.mxu0 %v1420
          %1428 = vmatprep.subr.bf16.mxu0 0
          %1429 = vmatpush1.bf16.msra.mxu0 0
          %1430 = vmatprep.subr.bf16.mxu0 0
          %1431 = vmatpush1.bf16.msra.mxu0 0
          %1432 = vmatprep.subr.bf16.mxu0 0
          %1433 = vmatpush1.bf16.msra.mxu0 0
          %1434 = vmatprep.subr.bf16.mxu0 0
          %1435 = vmatpush1.bf16.msra.mxu0 0
          %1436 = vmatprep.subr.bf16.mxu0 0
          %1437 = vmatpush1.bf16.msra.mxu0 0
          %1438 = vmatprep.subr.bf16.mxu0 0
          %1439 = vmatpush1.bf16.msra.mxu0 0
          %1440 = vmatprep.subr.bf16.mxu0 0
          %1441 = vmatpush1.bf16.msra.mxu0 0
          %1442 = vmatprep.subr.bf16.mxu0 0
          %1443 = vmatpush1.bf16.msra.mxu0 0
          %1444 = vmatprep.subr.bf16.mxu0 0
          %1445 = vmatpush1.bf16.msra.mxu0 0
          %1446 = vmatprep.subr.bf16.mxu0 0
          %1447 = vmatpush1.bf16.msra.mxu0 0
          %1448 = vmatprep.subr.bf16.mxu0 0
          %1449 = vmatpush1.bf16.msra.mxu0 0
          %1450 = vmatprep.subr.bf16.mxu0 0
          %1451 = vmatpush1.bf16.msra.mxu0 0
          %1452 = vmatprep.subr.bf16.mxu0 0
          %1453 = vmatpush1.bf16.msra.mxu0 0
          %1454 = vmatprep.subr.bf16.mxu0 0
          %1455 = vmatpush1.bf16.msra.mxu0 0
          %1456 = vmatprep.subr.bf16.mxu0 0
          %1457 = vmatpush1.bf16.msra.mxu0 0
          %1458 = vmatprep.mubr.bf16.mxu0 0
          %1459 = vmatmul.mubr.bf16.gmra.mrb[0].mxu0 %v1424
          %v1460 = vpop.f32.mrb[0].mxu0
          %v1461 = vadd.f32 %v1409, %v1460
          %v1462 = vpop.f32.mrb[0].mxu0
          %v1463 = vpop.f32.mrb[0].mxu0
          %v1464 = vadd.f32 %v1409, %v1463
          %v1465 = vpop.f32.mrb[0].mxu0
          %1466 = vdwg.mxu0
          %v1467 = vld [vmem:[#allocation13] sm:$0x1]
          %v1468 = vld [vmem:[#allocation14] sm:$0x1]
          %vm1469 = vcmask 261120
          %v1470 = vsel %vm1469, %v1461, 0.0
          %1471 = vadd.xlane.f32.xlu0 %v1470
          %v1472 = vpop.xlane.xlu0 %1471
          %v1473 = vsel %vm1469, %v1464, 0.0
          %1474 = vadd.xlane.f32.xlu0 %v1473
          %v1475 = vpop.xlane.xlu0 %1474
          %v1476 = vrcp.pop 32.0
          %v1477 = vmul.f32 %v1472, %v1476
          %v1478 = vmul.f32 %v1475, %v1476
          %v1479 = vsub.f32 %v1461, %v1477
          %v1480 = vsub.f32 %v1464, %v1478
          %v1481 = vmul.f32 %v1479, %v1479
          %v1482 = vmul.f32 %v1480, %v1480
          %v1483 = vsel %vm1469, %v1481, 0.0
          %1484 = vadd.xlane.f32.xlu0 %v1483
          %v1485 = vpop.xlane.xlu0 %1484
          %v1486 = vsel %vm1469, %v1482, 0.0
          %1487 = vadd.xlane.f32.xlu0 %v1486
          %v1488 = vpop.xlane.xlu0 %1487
          %v1489 = vmul.f32 %v1485, %v1476
          %v1490 = vmul.f32 %v1488, %v1476
          %v1491 = vadd.f32 %v1489, 1e-05
          %v1492 = vadd.f32 %v1490, 1e-05
          %v1493 = vrsqrt.pop %v1491
          %v1494 = vrsqrt.pop %v1492
          %v1495 = vmul.f32 %v1479, %v1493
          %v1496 = vmul.f32 %v1480, %v1494
          %v1498 = vlaneseq
          %v1499 = vshrl.u32 %v1498, 7
          %v1500 = vsub.s32 0, %v1499
          %v1501 = vrot.slane %v1467, %v1500
          %v1503 = vmul.f32 %v1495, %v1501
          %v1504 = vmul.f32 %v1496, %v1501
          %v1506 = vlaneseq
          %v1507 = vshrl.u32 %v1506, 7
          %v1508 = vsub.s32 0, %v1507
          %v1509 = vrot.slane %v1468, %v1508
          %v1511 = vadd.f32 %v1503, %v1509
          %v1512 = vadd.f32 %v1504, %v1509
          %v1513 = vmax.f32 %v1511, 0.0
          %v1514 = vmax.f32 %v1512, 0.0
          %v1515 = vld [vmem:[#allocation8] sm:$0xff]
          %v1516 = vmul.f32 %v1513, 5.656854
          %v1517 = vmul.f32 %v1514, 5.656854
          %v1518 = vadd.f32 %v1516, %v1515
          %v1519 = vadd.f32 %v1517, %v1515
          %1520 = vst.msk [vmem:[#allocation2] sm:$0xff] %vm1469, %v1518
          %1521 = vst.msk [vmem:[#allocation2 + $0x8] sm:$0xff] %vm1469, %v1519
        $region200: #{tpu_custom_call.1} parent=135 // pred_fallthru
          _
        %v1522 = vld [vmem:[#allocation2] sm:$0xff]
        %v1523 = vld [vmem:[#allocation2 + $0x8] sm:$0xff]
        %v1524 = vld [vmem:[%s1162] sm:$0x1]
        %v1525 = vld [vmem:[%s1170] sm:$0x1]
        %vm1526 = vcmask 261120
        %v1527 = vsel %vm1526, %v1522, 0.0
        %1528 = vadd.xlane.f32.xlu0 %v1527
        %v1529 = vpop.xlane.xlu0 %1528
        %v1530 = vsel %vm1526, %v1523, 0.0
        %1531 = vadd.xlane.f32.xlu0 %v1530
        %v1532 = vpop.xlane.xlu0 %1531
        %v1533 = vrcp.pop 32.0
        %v1534 = vmul.f32 %v1529, %v1533
        %v1535 = vmul.f32 %v1532, %v1533
        %v1536 = vsub.f32 %v1522, %v1534
        %v1537 = vsub.f32 %v1523, %v1535
        %v1538 = vmul.f32 %v1536, %v1536
        %v1539 = vmul.f32 %v1537, %v1537
        %v1540 = vsel %vm1526, %v1538, 0.0
        %1541 = vadd.xlane.f32.xlu0 %v1540
        %v1542 = vpop.xlane.xlu0 %1541
        %v1543 = vsel %vm1526, %v1539, 0.0
        %1544 = vadd.xlane.f32.xlu0 %v1543
        %v1545 = vpop.xlane.xlu0 %1544
        %v1546 = vmul.f32 %v1542, %v1533
        %v1547 = vmul.f32 %v1545, %v1533
        %v1548 = vadd.f32 %v1546, 1e-12
        %v1549 = vadd.f32 %v1547, 1e-12
        %v1550 = vrsqrt.pop %v1548
        %v1551 = vrsqrt.pop %v1549
        %v1552 = vmul.f32 %v1536, %v1550
        %v1553 = vmul.f32 %v1537, %v1551
        %v1555 = vlaneseq
        %v1556 = vshrl.u32 %v1555, 7
        %v1557 = vsub.s32 0, %v1556
        %v1558 = vrot.slane %v1524, %v1557
        %v1560 = vmul.f32 %v1552, %v1558
        %v1561 = vmul.f32 %v1553, %v1558
        %v1563 = vlaneseq
        %v1564 = vshrl.u32 %v1563, 7
        %v1565 = vsub.s32 0, %v1564
        %v1566 = vrot.slane %v1525, %v1565
        %v1568 = vadd.f32 %v1560, %v1566
        %v1569 = vadd.f32 %v1561, %v1566
        %v1570 = vpack.c.bf16 %v1569, %v1568
        %v1571 = vld [vmem:[%s1366] sm:$0xf]
        %v1572 = vld [vmem:[%s1366 + $0x4] sm:$0xf]
        %v1573 = vld [vmem:[%s1366 + $0x8] sm:$0xf]
        %v1574 = vld [vmem:[%s1366 + $0xc] sm:$0xf]
        %v1575 = vld [vmem:[%s1178] sm:$0x1]
        %v1577 = vlaneseq
        %v1578 = vshrl.u32 %v1577, 7
        %v1579 = vsub.s32 0, %v1578
        %v1580 = vrot.slane %v1575, %v1579
        %v1586 = vunpack.c.l.b16 %v1571
        %v1587 = vunpack.c.l.b16 %v1572
        %v1588 = vunpack.c.l.b16 %v1573
        %v1589 = vunpack.c.l.b16 %v1574
        %v1590 = vpack.c.b16 %v1587, %v1586
        %v1591 = vpack.c.b16 %v1589, %v1588
        %v1595 = vsel %vm1526, %v1570, 0
        %1597 = vmatprep.subr.bf16.mxu0 0
        %1598 = vmatpush1.bf16.msra.mxu0 %v1590
        %1599 = vmatprep.subr.bf16.mxu0 0
        %1600 = vmatpush1.bf16.msra.mxu0 %v1591
        %1601 = vmatprep.subr.bf16.mxu0 0
        %1602 = vmatpush1.bf16.msra.mxu0 0
        %1603 = vmatprep.subr.bf16.mxu0 0
        %1604 = vmatpush1.bf16.msra.mxu0 0
        %1605 = vmatprep.subr.bf16.mxu0 0
        %1606 = vmatpush1.bf16.msra.mxu0 0
        %1607 = vmatprep.subr.bf16.mxu0 0
        %1608 = vmatpush1.bf16.msra.mxu0 0
        %1609 = vmatprep.subr.bf16.mxu0 0
        %1610 = vmatpush1.bf16.msra.mxu0 0
        %1611 = vmatprep.subr.bf16.mxu0 0
        %1612 = vmatpush1.bf16.msra.mxu0 0
        %1613 = vmatprep.subr.bf16.mxu0 0
        %1614 = vmatpush1.bf16.msra.mxu0 0
        %1615 = vmatprep.subr.bf16.mxu0 0
        %1616 = vmatpush1.bf16.msra.mxu0 0
        %1617 = vmatprep.subr.bf16.mxu0 0
        %1618 = vmatpush1.bf16.msra.mxu0 0
        %1619 = vmatprep.subr.bf16.mxu0 0
        %1620 = vmatpush1.bf16.msra.mxu0 0
        %1621 = vmatprep.subr.bf16.mxu0 0
        %1622 = vmatpush1.bf16.msra.mxu0 0
        %1623 = vmatprep.subr.bf16.mxu0 0
        %1624 = vmatpush1.bf16.msra.mxu0 0
        %1625 = vmatprep.subr.bf16.mxu0 0
        %1626 = vmatpush1.bf16.msra.mxu0 0
        %1627 = vmatprep.subr.bf16.mxu0 0
        %1628 = vmatpush1.bf16.msra.mxu0 0
        %1629 = vmatprep.mubr.bf16.mxu0 0
        %1630 = vmatmul.mubr.bf16.gmra.mrb[0].mxu0 %v1595
        %v1631 = vpop.f32.mrb[0].mxu0
        %v1632 = vadd.f32 %v1580, %v1631
        %v1633 = vpop.f32.mrb[0].mxu0
        %v1634 = vpop.f32.mrb[0].mxu0
        %v1635 = vadd.f32 %v1580, %v1634
        %v1636 = vpop.f32.mrb[0].mxu0
        %1637 = vdwg.mxu0
        %v1638 = vld [vmem:[%s1371] sm:$0xf]
        %v1639 = vld [vmem:[%s1371 + $0x4] sm:$0xf]
        %v1640 = vld [vmem:[%s1371 + $0x8] sm:$0xf]
        %v1641 = vld [vmem:[%s1371 + $0xc] sm:$0xf]
        %v1642 = vld [vmem:[%s1186] sm:$0x1]
        %v1644 = vlaneseq
        %v1645 = vshrl.u32 %v1644, 7
        %v1646 = vsub.s32 0, %v1645
        %v1647 = vrot.slane %v1642, %v1646
        %v1653 = vunpack.c.l.b16 %v1638
        %v1654 = vunpack.c.l.b16 %v1639
        %v1655 = vunpack.c.l.b16 %v1640
        %v1656 = vunpack.c.l.b16 %v1641
        %v1657 = vpack.c.b16 %v1654, %v1653
        %v1658 = vpack.c.b16 %v1656, %v1655
        %1661 = vmatprep.subr.bf16.mxu0 0
        %1662 = vmatpush1.bf16.msra.mxu0 %v1657
        %1663 = vmatprep.subr.bf16.mxu0 0
        %1664 = vmatpush1.bf16.msra.mxu0 %v1658
        %1665 = vmatprep.subr.bf16.mxu0 0
        %1666 = vmatpush1.bf16.msra.mxu0 0
        %1667 = vmatprep.subr.bf16.mxu0 0
        %1668 = vmatpush1.bf16.msra.mxu0 0
        %1669 = vmatprep.subr.bf16.mxu0 0
        %1670 = vmatpush1.bf16.msra.mxu0 0
        %1671 = vmatprep.subr.bf16.mxu0 0
        %1672 = vmatpush1.bf16.msra.mxu0 0
        %1673 = vmatprep.subr.bf16.mxu0 0
        %1674 = vmatpush1.bf16.msra.mxu0 0
        %1675 = vmatprep.subr.bf16.mxu0 0
        %1676 = vmatpush1.bf16.msra.mxu0 0
        %1677 = vmatprep.subr.bf16.mxu0 0
        %1678 = vmatpush1.bf16.msra.mxu0 0
        %1679 = vmatprep.subr.bf16.mxu0 0
        %1680 = vmatpush1.bf16.msra.mxu0 0
        %1681 = vmatprep.subr.bf16.mxu0 0
        %1682 = vmatpush1.bf16.msra.mxu0 0
        %1683 = vmatprep.subr.bf16.mxu0 0
        %1684 = vmatpush1.bf16.msra.mxu0 0
        %1685 = vmatprep.subr.bf16.mxu0 0
        %1686 = vmatpush1.bf16.msra.mxu0 0
        %1687 = vmatprep.subr.bf16.mxu0 0
        %1688 = vmatpush1.bf16.msra.mxu0 0
        %1689 = vmatprep.subr.bf16.mxu0 0
        %1690 = vmatpush1.bf16.msra.mxu0 0
        %1691 = vmatprep.subr.bf16.mxu0 0
        %1692 = vmatpush1.bf16.msra.mxu0 0
        %1693 = vmatprep.mubr.bf16.mxu0 0
        %1694 = vmatmul.mubr.bf16.gmra.mrb[0].mxu0 %v1595
        %v1695 = vpop.f32.mrb[0].mxu0
        %v1696 = vadd.f32 %v1647, %v1695
        %v1697 = vpop.f32.mrb[0].mxu0
        %v1698 = vpop.f32.mrb[0].mxu0
        %v1699 = vadd.f32 %v1647, %v1698
        %v1700 = vpop.f32.mrb[0].mxu0
        %1701 = vdwg.mxu0
        %v1702 = vld [vmem:[%s1376] sm:$0xf]
        %v1703 = vld [vmem:[%s1376 + $0x4] sm:$0xf]
        %v1704 = vld [vmem:[%s1376 + $0x8] sm:$0xf]
        %v1705 = vld [vmem:[%s1376 + $0xc] sm:$0xf]
        %v1706 = vld [vmem:[%s1194] sm:$0x1]
        %v1708 = vlaneseq
        %v1709 = vshrl.u32 %v1708, 7
        %v1710 = vsub.s32 0, %v1709
        %v1711 = vrot.slane %v1706, %v1710
        %v1717 = vunpack.c.l.b16 %v1702
        %v1718 = vunpack.c.l.b16 %v1703
        %v1719 = vunpack.c.l.b16 %v1704
        %v1720 = vunpack.c.l.b16 %v1705
        %v1721 = vpack.c.b16 %v1718, %v1717
        %v1722 = vpack.c.b16 %v1720, %v1719
        %1725 = vmatprep.subr.bf16.mxu0 0
        %1726 = vmatpush1.bf16.msra.mxu0 %v1721
        %1727 = vmatprep.subr.bf16.mxu0 0
        %1728 = vmatpush1.bf16.msra.mxu0 %v1722
        %1729 = vmatprep.subr.bf16.mxu0 0
        %1730 = vmatpush1.bf16.msra.mxu0 0
        %1731 = vmatprep.subr.bf16.mxu0 0
        %1732 = vmatpush1.bf16.msra.mxu0 0
        %1733 = vmatprep.subr.bf16.mxu0 0
        %1734 = vmatpush1.bf16.msra.mxu0 0
        %1735 = vmatprep.subr.bf16.mxu0 0
        %1736 = vmatpush1.bf16.msra.mxu0 0
        %1737 = vmatprep.subr.bf16.mxu0 0
        %1738 = vmatpush1.bf16.msra.mxu0 0
        %1739 = vmatprep.subr.bf16.mxu0 0
        %1740 = vmatpush1.bf16.msra.mxu0 0
        %1741 = vmatprep.subr.bf16.mxu0 0
        %1742 = vmatpush1.bf16.msra.mxu0 0
        %1743 = vmatprep.subr.bf16.mxu0 0
        %1744 = vmatpush1.bf16.msra.mxu0 0
        %1745 = vmatprep.subr.bf16.mxu0 0
        %1746 = vmatpush1.bf16.msra.mxu0 0
        %1747 = vmatprep.subr.bf16.mxu0 0
        %1748 = vmatpush1.bf16.msra.mxu0 0
        %1749 = vmatprep.subr.bf16.mxu0 0
        %1750 = vmatpush1.bf16.msra.mxu0 0
        %1751 = vmatprep.subr.bf16.mxu0 0
        %1752 = vmatpush1.bf16.msra.mxu0 0
        %1753 = vmatprep.subr.bf16.mxu0 0
        %1754 = vmatpush1.bf16.msra.mxu0 0
        %1755 = vmatprep.subr.bf16.mxu0 0
        %1756 = vmatpush1.bf16.msra.mxu0 0
        %1757 = vmatprep.mubr.bf16.mxu0 0
        %1758 = vmatmul.mubr.bf16.gmra.mrb[0].mxu0 %v1595
        %v1759 = vpop.f32.mrb[0].mxu0
        %v1760 = vadd.f32 %v1711, %v1759
        %v1761 = vpop.f32.mrb[0].mxu0
        %v1762 = vpop.f32.mrb[0].mxu0
        %v1763 = vadd.f32 %v1711, %v1762
        %v1764 = vpop.f32.mrb[0].mxu0
        %1765 = vdwg.mxu0
        %v1766 = vlaneseq
        %v1767 = vand.u32 %v1766, 127
        %s1768 = sld [smem:[#allocation4]]
        %v1769 = vstv %s1768
        %vm1770 = vcmp.lt.s32.totalorder %v1767, %v1769
        %v1771 = vsel %vm1770, 1, 0
        %v1772 = vcvt.s32.f32 %v1771
        %v1773 = vpack.c.bf16 %v1632, %v1632
        %v1774 = vpack.c.bf16 %v1696, %v1696
        %v1775 = vpack.c.bf16 %v1760, %v1760
        %vm1776 = vcmask 64512
        %v1778 = vsel %vm1776, %v1773, 0
        %v1781 = vsel %vm1776, %v1774, 0
        %1783 = vmatprep.subr.bf16.mxu0 0
        %1784 = vmatpush1.bf16.xpose.msra.mxu0 %v1781
        %1785 = vmatprep.subr.bf16.mxu0 0
        %1786 = vmatpush1.bf16.xpose.msra.mxu0 0
        %1787 = vmatprep.subr.bf16.mxu0 0
        %1788 = vmatpush1.bf16.xpose.msra.mxu0 0
        %1789 = vmatprep.subr.bf16.mxu0 0
        %1790 = vmatpush1.bf16.xpose.msra.mxu0 0
        %1791 = vmatprep.subr.bf16.mxu0 0
        %1792 = vmatpush1.bf16.xpose.msra.mxu0 0
        %1793 = vmatprep.subr.bf16.mxu0 0
        %1794 = vmatpush1.bf16.xpose.msra.mxu0 0
        %1795 = vmatprep.subr.bf16.mxu0 0
        %1796 = vmatpush1.bf16.xpose.msra.mxu0 0
        %1797 = vmatprep.subr.bf16.mxu0 0
        %1798 = vmatpush1.bf16.xpose.msra.mxu0 0
        %1799 = vmatprep.subr.bf16.mxu0 0
        %1800 = vmatpush1.bf16.xpose.msra.mxu0 0
        %1801 = vmatprep.subr.bf16.mxu0 0
        %1802 = vmatpush1.bf16.xpose.msra.mxu0 0
        %1803 = vmatprep.subr.bf16.mxu0 0
        %1804 = vmatpush1.bf16.xpose.msra.mxu0 0
        %1805 = vmatprep.subr.bf16.mxu0 0
        %1806 = vmatpush1.bf16.xpose.msra.mxu0 0
        %1807 = vmatprep.subr.bf16.mxu0 0
        %1808 = vmatpush1.bf16.xpose.msra.mxu0 0
        %1809 = vmatprep.subr.bf16.mxu0 0
        %1810 = vmatpush1.bf16.xpose.msra.mxu0 0
        %1811 = vmatprep.subr.bf16.mxu0 0
        %1812 = vmatpush1.bf16.xpose.msra.mxu0 0
        %1813 = vmatprep.subr.bf16.mxu0 0
        %1814 = vmatpush1.bf16.xpose.msra.mxu0 0
        %1815 = vmatprep.mubr.bf16.mxu0 0
        %1816 = vmatmul.mubr.bf16.gmra.mrb[0].mxu0 %v1778
        %v1817 = vpop.f32.mrb[0].mxu0
        %v1818 = vadd.f32 0.0, %v1817
        %v1819 = vpop.f32.mrb[0].mxu0
        %v1820 = vpop.f32.mrb[0].mxu0
        %v1821 = vpop.f32.mrb[0].mxu0
        %1822 = vdwg.mxu0
        %v1823 = vmul.f32 %v1818, 0.35355338
        %v1824 = vsel %vm1770, %v1823, -1e+30
        %v1825 = vsel %vm1776, %v1824, -inf
        %1826 = vmax.xlane.f32.xlu0 %v1825
        %v1827 = vpop.xlane.xlu0 %1826
        %v1828 = vsub.f32 %v1824, %v1827
        %v1829 = vmul.f32 %v1828, 1.442695
        %v1830 = vpow.pop %v1829
        %v1831 = vsel %vm1776, %v1830, 0.0
        %1832 = vadd.xlane.f32.xlu0 %v1831
        %v1833 = vpop.xlane.xlu0 %1832
        %v1834 = vrcp.pop %v1833
        %v1835 = vmul.f32 %v1830, %v1834
        %v1836 = vmul.f32 %v1835, %v1772
        %v1837 = vpack.c.bf16 %v1836, %v1836
        %v1839 = vsel %vm1776, %v1837, 0
        %vm1841 = vcmask 1043456
        %v1843 = vsel %vm1841, %v1775, 0
        %1845 = vmatprep.subr.bf16.mxu0 0
        %1846 = vmatpush1.bf16.msra.mxu0 %v1843
        %1847 = vmatprep.subr.bf16.mxu0 0
        %1848 = vmatpush1.bf16.msra.mxu0 0
        %1849 = vmatprep.subr.bf16.mxu0 0
        %1850 = vmatpush1.bf16.msra.mxu0 0
        %1851 = vmatprep.subr.bf16.mxu0 0
        %1852 = vmatpush1.bf16.msra.mxu0 0
        %1853 = vmatprep.subr.bf16.mxu0 0
        %1854 = vmatpush1.bf16.msra.mxu0 0
        %1855 = vmatprep.subr.bf16.mxu0 0
        %1856 = vmatpush1.bf16.msra.mxu0 0
        %1857 = vmatprep.subr.bf16.mxu0 0
        %1858 = vmatpush1.bf16.msra.mxu0 0
        %1859 = vmatprep.subr.bf16.mxu0 0
        %1860 = vmatpush1.bf16.msra.mxu0 0
        %1861 = vmatprep.subr.bf16.mxu0 0
        %1862 = vmatpush1.bf16.msra.mxu0 0
        %1863 = vmatprep.subr.bf16.mxu0 0
        %1864 = vmatpush1.bf16.msra.mxu0 0
        %1865 = vmatprep.subr.bf16.mxu0 0
        %1866 = vmatpush1.bf16.msra.mxu0 0
        %1867 = vmatprep.subr.bf16.mxu0 0
        %1868 = vmatpush1.bf16.msra.mxu0 0
        %1869 = vmatprep.subr.bf16.mxu0 0
        %1870 = vmatpush1.bf16.msra.mxu0 0
        %1871 = vmatprep.subr.bf16.mxu0 0
        %1872 = vmatpush1.bf16.msra.mxu0 0
        %1873 = vmatprep.subr.bf16.mxu0 0
        %1874 = vmatpush1.bf16.msra.mxu0 0
        %1875 = vmatprep.subr.bf16.mxu0 0
        %1876 = vmatpush1.bf16.msra.mxu0 0
        %1877 = vmatprep.mubr.bf16.mxu0 0
        %1878 = vmatmul.mubr.bf16.gmra.mrb[0].mxu0 %v1839
        %v1879 = vpop.f32.mrb[0].mxu0
        %v1880 = vadd.f32 0.0, %v1879
        %v1881 = vpop.f32.mrb[0].mxu0
        %v1882 = vpop.f32.mrb[0].mxu0
        %v1883 = vpop.f32.mrb[0].mxu0
        %1884 = vdwg.mxu0
        %1886 = vrot.lane.b32.xlu0 %v1773, 120
        %v1887 = vpop.permute.xlu0 %1886
        %1889 = vrot.lane.b32.xlu0 %v1774, 120
        %v1890 = vpop.permute.xlu0 %1889
        %v1892 = vsel %vm1776, %v1887, 0
        %v1895 = vsel %vm1776, %v1890, 0
        %1897 = vmatprep.subr.bf16.mxu0 0
        %1898 = vmatpush1.bf16.xpose.msra.mxu0 %v1895
        %1899 = vmatprep.subr.bf16.mxu0 0
        %1900 = vmatpush1.bf16.xpose.msra.mxu0 0
        %1901 = vmatprep.subr.bf16.mxu0 0
        %1902 = vmatpush1.bf16.xpose.msra.mxu0 0
        %1903 = vmatprep.subr.bf16.mxu0 0
        %1904 = vmatpush1.bf16.xpose.msra.mxu0 0
        %1905 = vmatprep.subr.bf16.mxu0 0
        %1906 = vmatpush1.bf16.xpose.msra.mxu0 0
        %1907 = vmatprep.subr.bf16.mxu0 0
        %1908 = vmatpush1.bf16.xpose.msra.mxu0 0
        %1909 = vmatprep.subr.bf16.mxu0 0
        %1910 = vmatpush1.bf16.xpose.msra.mxu0 0
        %1911 = vmatprep.subr.bf16.mxu0 0
        %1912 = vmatpush1.bf16.xpose.msra.mxu0 0
        %1913 = vmatprep.subr.bf16.mxu0 0
        %1914 = vmatpush1.bf16.xpose.msra.mxu0 0
        %1915 = vmatprep.subr.bf16.mxu0 0
        %1916 = vmatpush1.bf16.xpose.msra.mxu0 0
        %1917 = vmatprep.subr.bf16.mxu0 0
        %1918 = vmatpush1.bf16.xpose.msra.mxu0 0
        %1919 = vmatprep.subr.bf16.mxu0 0
        %1920 = vmatpush1.bf16.xpose.msra.mxu0 0
        %1921 = vmatprep.subr.bf16.mxu0 0
        %1922 = vmatpush1.bf16.xpose.msra.mxu0 0
        %1923 = vmatprep.subr.bf16.mxu0 0
        %1924 = vmatpush1.bf16.xpose.msra.mxu0 0
        %1925 = vmatprep.subr.bf16.mxu0 0
        %1926 = vmatpush1.bf16.xpose.msra.mxu0 0
        %1927 = vmatprep.subr.bf16.mxu0 0
        %1928 = vmatpush1.bf16.xpose.msra.mxu0 0
        %1929 = vmatprep.mubr.bf16.mxu0 0
        %1930 = vmatmul.mubr.bf16.gmra.mrb[0].mxu0 %v1892
        %v1931 = vpop.f32.mrb[0].mxu0
        %v1932 = vadd.f32 0.0, %v1931
        %v1933 = vpop.f32.mrb[0].mxu0
        %v1934 = vpop.f32.mrb[0].mxu0
        %v1935 = vpop.f32.mrb[0].mxu0
        %1936 = vdwg.mxu0
        %v1937 = vmul.f32 %v1932, 0.35355338
        %v1938 = vsel %vm1770, %v1937, -1e+30
        %v1939 = vsel %vm1776, %v1938, -inf
        %1940 = vmax.xlane.f32.xlu0 %v1939
        %v1941 = vpop.xlane.xlu0 %1940
        %v1942 = vsub.f32 %v1938, %v1941
        %v1943 = vmul.f32 %v1942, 1.442695
        %v1944 = vpow.pop %v1943
        %v1945 = vsel %vm1776, %v1944, 0.0
        %1946 = vadd.xlane.f32.xlu0 %v1945
        %v1947 = vpop.xlane.xlu0 %1946
        %v1948 = vrcp.pop %v1947
        %v1949 = vmul.f32 %v1944, %v1948
        %v1950 = vmul.f32 %v1949, %v1772
        %v1951 = vpack.c.bf16 %v1950, %v1950
        %1953 = vrot.lane.b32.xlu0 %v1775, 120
        %v1954 = vpop.permute.xlu0 %1953
        %v1956 = vsel %vm1776, %v1951, 0
        %v1959 = vsel %vm1841, %v1954, 0
        %1961 = vmatprep.subr.bf16.mxu0 0
        %1962 = vmatpush1.bf16.msra.mxu0 %v1959
        %1963 = vmatprep.subr.bf16.mxu0 0
        %1964 = vmatpush1.bf16.msra.mxu0 0
        %1965 = vmatprep.subr.bf16.mxu0 0
        %1966 = vmatpush1.bf16.msra.mxu0 0
        %1967 = vmatprep.subr.bf16.mxu0 0
        %1968 = vmatpush1.bf16.msra.mxu0 0
        %1969 = vmatprep.subr.bf16.mxu0 0
        %1970 = vmatpush1.bf16.msra.mxu0 0
        %1971 = vmatprep.subr.bf16.mxu0 0
        %1972 = vmatpush1.bf16.msra.mxu0 0
        %1973 = vmatprep.subr.bf16.mxu0 0
        %1974 = vmatpush1.bf16.msra.mxu0 0
        %1975 = vmatprep.subr.bf16.mxu0 0
        %1976 = vmatpush1.bf16.msra.mxu0 0
        %1977 = vmatprep.subr.bf16.mxu0 0
        %1978 = vmatpush1.bf16.msra.mxu0 0
        %1979 = vmatprep.subr.bf16.mxu0 0
        %1980 = vmatpush1.bf16.msra.mxu0 0
        %1981 = vmatprep.subr.bf16.mxu0 0
        %1982 = vmatpush1.bf16.msra.mxu0 0
        %1983 = vmatprep.subr.bf16.mxu0 0
        %1984 = vmatpush1.bf16.msra.mxu0 0
        %1985 = vmatprep.subr.bf16.mxu0 0
        %1986 = vmatpush1.bf16.msra.mxu0 0
        %1987 = vmatprep.subr.bf16.mxu0 0
        %1988 = vmatpush1.bf16.msra.mxu0 0
        %1989 = vmatprep.subr.bf16.mxu0 0
        %1990 = vmatpush1.bf16.msra.mxu0 0
        %1991 = vmatprep.subr.bf16.mxu0 0
        %1992 = vmatpush1.bf16.msra.mxu0 0
        %1993 = vmatprep.mubr.bf16.mxu0 0
        %1994 = vmatmul.mubr.bf16.gmra.mrb[0].mxu0 %v1956
        %v1995 = vpop.f32.mrb[0].mxu0
        %v1996 = vadd.f32 0.0, %v1995
        %v1997 = vpop.f32.mrb[0].mxu0
        %v1998 = vpop.f32.mrb[0].mxu0
        %v1999 = vpop.f32.mrb[0].mxu0
        %2000 = vdwg.mxu0
        %2001 = vrot.lane.b32.xlu0 %v1773, 112
        %v2002 = vpop.permute.xlu0 %2001
        %2003 = vrot.lane.b32.xlu0 %v1774, 112
        %v2004 = vpop.permute.xlu0 %2003
        %v2006 = vsel %vm1776, %v2002, 0
        %v2009 = vsel %vm1776, %v2004, 0
        %2011 = vmatprep.subr.bf16.mxu0 0
        %2012 = vmatpush1.bf16.xpose.msra.mxu0 %v2009
        %2013 = vmatprep.subr.bf16.mxu0 0
        %2014 = vmatpush1.bf16.xpose.msra.mxu0 0
        %2015 = vmatprep.subr.bf16.mxu0 0
        %2016 = vmatpush1.bf16.xpose.msra.mxu0 0
        %2017 = vmatprep.subr.bf16.mxu0 0
        %2018 = vmatpush1.bf16.xpose.msra.mxu0 0
        %2019 = vmatprep.subr.bf16.mxu0 0
        %2020 = vmatpush1.bf16.xpose.msra.mxu0 0
        %2021 = vmatprep.subr.bf16.mxu0 0
        %2022 = vmatpush1.bf16.xpose.msra.mxu0 0
        %2023 = vmatprep.subr.bf16.mxu0 0
        %2024 = vmatpush1.bf16.xpose.msra.mxu0 0
        %2025 = vmatprep.subr.bf16.mxu0 0
        %2026 = vmatpush1.bf16.xpose.msra.mxu0 0
        %2027 = vmatprep.subr.bf16.mxu0 0
        %2028 = vmatpush1.bf16.xpose.msra.mxu0 0
        %2029 = vmatprep.subr.bf16.mxu0 0
        %2030 = vmatpush1.bf16.xpose.msra.mxu0 0
        %2031 = vmatprep.subr.bf16.mxu0 0
        %2032 = vmatpush1.bf16.xpose.msra.mxu0 0
        %2033 = vmatprep.subr.bf16.mxu0 0
        %2034 = vmatpush1.bf16.xpose.msra.mxu0 0
        %2035 = vmatprep.subr.bf16.mxu0 0
        %2036 = vmatpush1.bf16.xpose.msra.mxu0 0
        %2037 = vmatprep.subr.bf16.mxu0 0
        %2038 = vmatpush1.bf16.xpose.msra.mxu0 0
        %2039 = vmatprep.subr.bf16.mxu0 0
        %2040 = vmatpush1.bf16.xpose.msra.mxu0 0
        %2041 = vmatprep.subr.bf16.mxu0 0
        %2042 = vmatpush1.bf16.xpose.msra.mxu0 0
        %2043 = vmatprep.mubr.bf16.mxu0 0
        %2044 = vmatmul.mubr.bf16.gmra.mrb[0].mxu0 %v2006
        %v2045 = vpop.f32.mrb[0].mxu0
        %v2046 = vadd.f32 0.0, %v2045
        %v2047 = vpop.f32.mrb[0].mxu0
        %v2048 = vpop.f32.mrb[0].mxu0
        %v2049 = vpop.f32.mrb[0].mxu0
        %2050 = vdwg.mxu0
        %v2051 = vmul.f32 %v2046, 0.35355338
        %v2052 = vsel %vm1770, %v2051, -1e+30
        %v2053 = vsel %vm1776, %v2052, -inf
        %2054 = vmax.xlane.f32.xlu0 %v2053
        %v2055 = vpop.xlane.xlu0 %2054
        %v2056 = vsub.f32 %v2052, %v2055
        %v2057 = vmul.f32 %v2056, 1.442695
        %v2058 = vpow.pop %v2057
        %v2059 = vsel %vm1776, %v2058, 0.0
        %2060 = vadd.xlane.f32.xlu0 %v2059
        %v2061 = vpop.xlane.xlu0 %2060
        %v2062 = vrcp.pop %v2061
        %v2063 = vmul.f32 %v2058, %v2062
        %v2064 = vmul.f32 %v2063, %v1772
        %v2065 = vpack.c.bf16 %v2064, %v2064
        %2066 = vrot.lane.b32.xlu0 %v1775, 112
        %v2067 = vpop.permute.xlu0 %2066
        %v2069 = vsel %vm1776, %v2065, 0
        %v2072 = vsel %vm1841, %v2067, 0
        %2074 = vmatprep.subr.bf16.mxu0 0
        %2075 = vmatpush1.bf16.msra.mxu0 %v2072
        %2076 = vmatprep.subr.bf16.mxu0 0
        %2077 = vmatpush1.bf16.msra.mxu0 0
        %2078 = vmatprep.subr.bf16.mxu0 0
        %2079 = vmatpush1.bf16.msra.mxu0 0
        %2080 = vmatprep.subr.bf16.mxu0 0
        %2081 = vmatpush1.bf16.msra.mxu0 0
        %2082 = vmatprep.subr.bf16.mxu0 0
        %2083 = vmatpush1.bf16.msra.mxu0 0
        %2084 = vmatprep.subr.bf16.mxu0 0
        %2085 = vmatpush1.bf16.msra.mxu0 0
        %2086 = vmatprep.subr.bf16.mxu0 0
        %2087 = vmatpush1.bf16.msra.mxu0 0
        %2088 = vmatprep.subr.bf16.mxu0 0
        %2089 = vmatpush1.bf16.msra.mxu0 0
        %2090 = vmatprep.subr.bf16.mxu0 0
        %2091 = vmatpush1.bf16.msra.mxu0 0
        %2092 = vmatprep.subr.bf16.mxu0 0
        %2093 = vmatpush1.bf16.msra.mxu0 0
        %2094 = vmatprep.subr.bf16.mxu0 0
        %2095 = vmatpush1.bf16.msra.mxu0 0
        %2096 = vmatprep.subr.bf16.mxu0 0
        %2097 = vmatpush1.bf16.msra.mxu0 0
        %2098 = vmatprep.subr.bf16.mxu0 0
        %2099 = vmatpush1.bf16.msra.mxu0 0
        %2100 = vmatprep.subr.bf16.mxu0 0
        %2101 = vmatpush1.bf16.msra.mxu0 0
        %2102 = vmatprep.subr.bf16.mxu0 0
        %2103 = vmatpush1.bf16.msra.mxu0 0
        %2104 = vmatprep.subr.bf16.mxu0 0
        %2105 = vmatpush1.bf16.msra.mxu0 0
        %2106 = vmatprep.mubr.bf16.mxu0 0
        %2107 = vmatmul.mubr.bf16.gmra.mrb[0].mxu0 %v2069
        %v2108 = vpop.f32.mrb[0].mxu0
        %v2109 = vadd.f32 0.0, %v2108
        %v2110 = vpop.f32.mrb[0].mxu0
        %v2111 = vpop.f32.mrb[0].mxu0
        %v2112 = vpop.f32.mrb[0].mxu0
        %2113 = vdwg.mxu0
        %2114 = vrot.lane.b32.xlu0 %v1773, 104
        %v2115 = vpop.permute.xlu0 %2114
        %2116 = vrot.lane.b32.xlu0 %v1774, 104
        %v2117 = vpop.permute.xlu0 %2116
        %v2119 = vsel %vm1776, %v2115, 0
        %v2122 = vsel %vm1776, %v2117, 0
        %2124 = vmatprep.subr.bf16.mxu0 0
        %2125 = vmatpush1.bf16.xpose.msra.mxu0 %v2122
        %2126 = vmatprep.subr.bf16.mxu0 0
        %2127 = vmatpush1.bf16.xpose.msra.mxu0 0
        %2128 = vmatprep.subr.bf16.mxu0 0
        %2129 = vmatpush1.bf16.xpose.msra.mxu0 0
        %2130 = vmatprep.subr.bf16.mxu0 0
        %2131 = vmatpush1.bf16.xpose.msra.mxu0 0
        %2132 = vmatprep.subr.bf16.mxu0 0
        %2133 = vmatpush1.bf16.xpose.msra.mxu0 0
        %2134 = vmatprep.subr.bf16.mxu0 0
        %2135 = vmatpush1.bf16.xpose.msra.mxu0 0
        %2136 = vmatprep.subr.bf16.mxu0 0
        %2137 = vmatpush1.bf16.xpose.msra.mxu0 0
        %2138 = vmatprep.subr.bf16.mxu0 0
        %2139 = vmatpush1.bf16.xpose.msra.mxu0 0
        %2140 = vmatprep.subr.bf16.mxu0 0
        %2141 = vmatpush1.bf16.xpose.msra.mxu0 0
        %2142 = vmatprep.subr.bf16.mxu0 0
        %2143 = vmatpush1.bf16.xpose.msra.mxu0 0
        %2144 = vmatprep.subr.bf16.mxu0 0
        %2145 = vmatpush1.bf16.xpose.msra.mxu0 0
        %2146 = vmatprep.subr.bf16.mxu0 0
        %2147 = vmatpush1.bf16.xpose.msra.mxu0 0
        %2148 = vmatprep.subr.bf16.mxu0 0
        %2149 = vmatpush1.bf16.xpose.msra.mxu0 0
        %2150 = vmatprep.subr.bf16.mxu0 0
        %2151 = vmatpush1.bf16.xpose.msra.mxu0 0
        %2152 = vmatprep.subr.bf16.mxu0 0
        %2153 = vmatpush1.bf16.xpose.msra.mxu0 0
        %2154 = vmatprep.subr.bf16.mxu0 0
        %2155 = vmatpush1.bf16.xpose.msra.mxu0 0
        %2156 = vmatprep.mubr.bf16.mxu0 0
        %2157 = vmatmul.mubr.bf16.gmra.mrb[0].mxu0 %v2119
        %v2158 = vpop.f32.mrb[0].mxu0
        %v2159 = vadd.f32 0.0, %v2158
        %v2160 = vpop.f32.mrb[0].mxu0
        %v2161 = vpop.f32.mrb[0].mxu0
        %v2162 = vpop.f32.mrb[0].mxu0
        %2163 = vdwg.mxu0
        %v2164 = vmul.f32 %v2159, 0.35355338
        %v2165 = vsel %vm1770, %v2164, -1e+30
        %v2166 = vsel %vm1776, %v2165, -inf
        %2167 = vmax.xlane.f32.xlu0 %v2166
        %v2168 = vpop.xlane.xlu0 %2167
        %v2169 = vsub.f32 %v2165, %v2168
        %v2170 = vmul.f32 %v2169, 1.442695
        %v2171 = vpow.pop %v2170
        %v2172 = vsel %vm1776, %v2171, 0.0
        %2173 = vadd.xlane.f32.xlu0 %v2172
        %v2174 = vpop.xlane.xlu0 %2173
        %v2175 = vrcp.pop %v2174
        %v2176 = vmul.f32 %v2171, %v2175
        %v2177 = vmul.f32 %v2176, %v1772
        %v2178 = vpack.c.bf16 %v2177, %v2177
        %2179 = vrot.lane.b32.xlu0 %v1775, 104
        %v2180 = vpop.permute.xlu0 %2179
        %v2182 = vsel %vm1776, %v2178, 0
        %v2185 = vsel %vm1841, %v2180, 0
        %2187 = vmatprep.subr.bf16.mxu0 0
        %2188 = vmatpush1.bf16.msra.mxu0 %v2185
        %2189 = vmatprep.subr.bf16.mxu0 0
        %2190 = vmatpush1.bf16.msra.mxu0 0
        %2191 = vmatprep.subr.bf16.mxu0 0
        %2192 = vmatpush1.bf16.msra.mxu0 0
        %2193 = vmatprep.subr.bf16.mxu0 0
        %2194 = vmatpush1.bf16.msra.mxu0 0
        %2195 = vmatprep.subr.bf16.mxu0 0
        %2196 = vmatpush1.bf16.msra.mxu0 0
        %2197 = vmatprep.subr.bf16.mxu0 0
        %2198 = vmatpush1.bf16.msra.mxu0 0
        %2199 = vmatprep.subr.bf16.mxu0 0
        %2200 = vmatpush1.bf16.msra.mxu0 0
        %2201 = vmatprep.subr.bf16.mxu0 0
        %2202 = vmatpush1.bf16.msra.mxu0 0
        %2203 = vmatprep.subr.bf16.mxu0 0
        %2204 = vmatpush1.bf16.msra.mxu0 0
        %2205 = vmatprep.subr.bf16.mxu0 0
        %2206 = vmatpush1.bf16.msra.mxu0 0
        %2207 = vmatprep.subr.bf16.mxu0 0
        %2208 = vmatpush1.bf16.msra.mxu0 0
        %2209 = vmatprep.subr.bf16.mxu0 0
        %2210 = vmatpush1.bf16.msra.mxu0 0
        %2211 = vmatprep.subr.bf16.mxu0 0
        %2212 = vmatpush1.bf16.msra.mxu0 0
        %2213 = vmatprep.subr.bf16.mxu0 0
        %2214 = vmatpush1.bf16.msra.mxu0 0
        %2215 = vmatprep.subr.bf16.mxu0 0
        %2216 = vmatpush1.bf16.msra.mxu0 0
        %2217 = vmatprep.subr.bf16.mxu0 0
        %2218 = vmatpush1.bf16.msra.mxu0 0
        %2219 = vmatprep.mubr.bf16.mxu0 0
        %2220 = vmatmul.mubr.bf16.gmra.mrb[0].mxu0 %v2182
        %v2221 = vpop.f32.mrb[0].mxu0
        %v2222 = vadd.f32 0.0, %v2221
        %v2223 = vpop.f32.mrb[0].mxu0
        %v2224 = vpop.f32.mrb[0].mxu0
        %v2225 = vpop.f32.mrb[0].mxu0
        %2226 = vdwg.mxu0
        %2228 = vrot.lane.b32.xlu0 %v1996, 8
        %v2229 = vpop.permute.xlu0 %2228
        %2232 = vrot.lane.b32.xlu0 %v2109, 16
        %v2233 = vpop.permute.xlu0 %2232
        %2236 = vrot.lane.b32.xlu0 %v2222, 24
        %v2237 = vpop.permute.xlu0 %2236
        %v2239 = vsel %vm1776, %v1880, %v2229
        %vm2240 = vcmask 130048
        %v2241 = vsel %vm2240, %v2239, %v2233
        %vm2242 = vcmask 195584
        %v2243 = vsel %vm2242, %v2241, %v2237
        %s2244 = sld [smem:[#allocation4 + $0x1]]
        %v2245 = vstv %s2244
        %vm2246 = vcmp.lt.s32.totalorder %v1767, %v2245
        %v2247 = vsel %vm2246, 1, 0
        %v2248 = vcvt.s32.f32 %v2247
        %v2249 = vpack.c.bf16 %v1635, %v1635
        %v2250 = vpack.c.bf16 %v1699, %v1699
        %v2251 = vpack.c.bf16 %v1763, %v1763
        %v2253 = vsel %vm1776, %v2249, 0
        %v2256 = vsel %vm1776, %v2250, 0
        %2258 = vmatprep.subr.bf16.mxu0 0
        %2259 = vmatpush1.bf16.xpose.msra.mxu0 %v2256
        %2260 = vmatprep.subr.bf16.mxu0 0
        %2261 = vmatpush1.bf16.xpose.msra.mxu0 0
        %2262 = vmatprep.subr.bf16.mxu0 0
        %2263 = vmatpush1.bf16.xpose.msra.mxu0 0
        %2264 = vmatprep.subr.bf16.mxu0 0
        %2265 = vmatpush1.bf16.xpose.msra.mxu0 0
        %2266 = vmatprep.subr.bf16.mxu0 0
        %2267 = vmatpush1.bf16.xpose.msra.mxu0 0
        %2268 = vmatprep.subr.bf16.mxu0 0
        %2269 = vmatpush1.bf16.xpose.msra.mxu0 0
        %2270 = vmatprep.subr.bf16.mxu0 0
        %2271 = vmatpush1.bf16.xpose.msra.mxu0 0
        %2272 = vmatprep.subr.bf16.mxu0 0
        %2273 = vmatpush1.bf16.xpose.msra.mxu0 0
        %2274 = vmatprep.subr.bf16.mxu0 0
        %2275 = vmatpush1.bf16.xpose.msra.mxu0 0
        %2276 = vmatprep.subr.bf16.mxu0 0
        %2277 = vmatpush1.bf16.xpose.msra.mxu0 0
        %2278 = vmatprep.subr.bf16.mxu0 0
        %2279 = vmatpush1.bf16.xpose.msra.mxu0 0
        %2280 = vmatprep.subr.bf16.mxu0 0
        %2281 = vmatpush1.bf16.xpose.msra.mxu0 0
        %2282 = vmatprep.subr.bf16.mxu0 0
        %2283 = vmatpush1.bf16.xpose.msra.mxu0 0
        %2284 = vmatprep.subr.bf16.mxu0 0
        %2285 = vmatpush1.bf16.xpose.msra.mxu0 0
        %2286 = vmatprep.subr.bf16.mxu0 0
        %2287 = vmatpush1.bf16.xpose.msra.mxu0 0
        %2288 = vmatprep.subr.bf16.mxu0 0
        %2289 = vmatpush1.bf16.xpose.msra.mxu0 0
        %2290 = vmatprep.mubr.bf16.mxu0 0
        %2291 = vmatmul.mubr.bf16.gmra.mrb[0].mxu0 %v2253
        %v2292 = vpop.f32.mrb[0].mxu0
        %v2293 = vadd.f32 0.0, %v2292
        %v2294 = vpop.f32.mrb[0].mxu0
        %v2295 = vpop.f32.mrb[0].mxu0
        %v2296 = vpop.f32.mrb[0].mxu0
        %2297 = vdwg.mxu0
        %v2298 = vmul.f32 %v2293, 0.35355338
        %v2299 = vsel %vm2246, %v2298, -1e+30
        %v2300 = vsel %vm1776, %v2299, -inf
        %2301 = vmax.xlane.f32.xlu0 %v2300
        %v2302 = vpop.xlane.xlu0 %2301
        %v2303 = vsub.f32 %v2299, %v2302
        %v2304 = vmul.f32 %v2303, 1.442695
        %v2305 = vpow.pop %v2304
        %v2306 = vsel %vm1776, %v2305, 0.0
        %2307 = vadd.xlane.f32.xlu0 %v2306
        %v2308 = vpop.xlane.xlu0 %2307
        %v2309 = vrcp.pop %v2308
        %v2310 = vmul.f32 %v2305, %v2309
        %v2311 = vmul.f32 %v2310, %v2248
        %v2312 = vpack.c.bf16 %v2311, %v2311
        %v2314 = vsel %vm1776, %v2312, 0
        %v2317 = vsel %vm1841, %v2251, 0
        %2319 = vmatprep.subr.bf16.mxu0 0
        %2320 = vmatpush1.bf16.msra.mxu0 %v2317
        %2321 = vmatprep.subr.bf16.mxu0 0
        %2322 = vmatpush1.bf16.msra.mxu0 0
        %2323 = vmatprep.subr.bf16.mxu0 0
        %2324 = vmatpush1.bf16.msra.mxu0 0
        %2325 = vmatprep.subr.bf16.mxu0 0
        %2326 = vmatpush1.bf16.msra.mxu0 0
        %2327 = vmatprep.subr.bf16.mxu0 0
        %2328 = vmatpush1.bf16.msra.mxu0 0
        %2329 = vmatprep.subr.bf16.mxu0 0
        %2330 = vmatpush1.bf16.msra.mxu0 0
        %2331 = vmatprep.subr.bf16.mxu0 0
        %2332 = vmatpush1.bf16.msra.mxu0 0
        %2333 = vmatprep.subr.bf16.mxu0 0
        %2334 = vmatpush1.bf16.msra.mxu0 0
        %2335 = vmatprep.subr.bf16.mxu0 0
        %2336 = vmatpush1.bf16.msra.mxu0 0
        %2337 = vmatprep.subr.bf16.mxu0 0
        %2338 = vmatpush1.bf16.msra.mxu0 0
        %2339 = vmatprep.subr.bf16.mxu0 0
        %2340 = vmatpush1.bf16.msra.mxu0 0
        %2341 = vmatprep.subr.bf16.mxu0 0
        %2342 = vmatpush1.bf16.msra.mxu0 0
        %2343 = vmatprep.subr.bf16.mxu0 0
        %2344 = vmatpush1.bf16.msra.mxu0 0
        %2345 = vmatprep.subr.bf16.mxu0 0
        %2346 = vmatpush1.bf16.msra.mxu0 0
        %2347 = vmatprep.subr.bf16.mxu0 0
        %2348 = vmatpush1.bf16.msra.mxu0 0
        %2349 = vmatprep.subr.bf16.mxu0 0
        %2350 = vmatpush1.bf16.msra.mxu0 0
        %2351 = vmatprep.mubr.bf16.mxu0 0
        %2352 = vmatmul.mubr.bf16.gmra.mrb[0].mxu0 %v2314
        %v2353 = vpop.f32.mrb[0].mxu0
        %v2354 = vadd.f32 0.0, %v2353
        %v2355 = vpop.f32.mrb[0].mxu0
        %v2356 = vpop.f32.mrb[0].mxu0
        %v2357 = vpop.f32.mrb[0].mxu0
        %2358 = vdwg.mxu0
        %2360 = vrot.lane.b32.xlu0 %v2249, 120
        %v2361 = vpop.permute.xlu0 %2360
        %2363 = vrot.lane.b32.xlu0 %v2250, 120
        %v2364 = vpop.permute.xlu0 %2363
        %v2366 = vsel %vm1776, %v2361, 0
        %v2369 = vsel %vm1776, %v2364, 0
        %2371 = vmatprep.subr.bf16.mxu0 0
        %2372 = vmatpush1.bf16.xpose.msra.mxu0 %v2369
        %2373 = vmatprep.subr.bf16.mxu0 0
        %2374 = vmatpush1.bf16.xpose.msra.mxu0 0
        %2375 = vmatprep.subr.bf16.mxu0 0
        %2376 = vmatpush1.bf16.xpose.msra.mxu0 0
        %2377 = vmatprep.subr.bf16.mxu0 0
        %2378 = vmatpush1.bf16.xpose.msra.mxu0 0
        %2379 = vmatprep.subr.bf16.mxu0 0
        %2380 = vmatpush1.bf16.xpose.msra.mxu0 0
        %2381 = vmatprep.subr.bf16.mxu0 0
        %2382 = vmatpush1.bf16.xpose.msra.mxu0 0
        %2383 = vmatprep.subr.bf16.mxu0 0
        %2384 = vmatpush1.bf16.xpose.msra.mxu0 0
        %2385 = vmatprep.subr.bf16.mxu0 0
        %2386 = vmatpush1.bf16.xpose.msra.mxu0 0
        %2387 = vmatprep.subr.bf16.mxu0 0
        %2388 = vmatpush1.bf16.xpose.msra.mxu0 0
        %2389 = vmatprep.subr.bf16.mxu0 0
        %2390 = vmatpush1.bf16.xpose.msra.mxu0 0
        %2391 = vmatprep.subr.bf16.mxu0 0
        %2392 = vmatpush1.bf16.xpose.msra.mxu0 0
        %2393 = vmatprep.subr.bf16.mxu0 0
        %2394 = vmatpush1.bf16.xpose.msra.mxu0 0
        %2395 = vmatprep.subr.bf16.mxu0 0
        %2396 = vmatpush1.bf16.xpose.msra.mxu0 0
        %2397 = vmatprep.subr.bf16.mxu0 0
        %2398 = vmatpush1.bf16.xpose.msra.mxu0 0
        %2399 = vmatprep.subr.bf16.mxu0 0
        %2400 = vmatpush1.bf16.xpose.msra.mxu0 0
        %2401 = vmatprep.subr.bf16.mxu0 0
        %2402 = vmatpush1.bf16.xpose.msra.mxu0 0
        %2403 = vmatprep.mubr.bf16.mxu0 0
        %2404 = vmatmul.mubr.bf16.gmra.mrb[0].mxu0 %v2366
        %v2405 = vpop.f32.mrb[0].mxu0
        %v2406 = vadd.f32 0.0, %v2405
        %v2407 = vpop.f32.mrb[0].mxu0
        %v2408 = vpop.f32.mrb[0].mxu0
        %v2409 = vpop.f32.mrb[0].mxu0
        %2410 = vdwg.mxu0
        %v2411 = vmul.f32 %v2406, 0.35355338
        %v2412 = vsel %vm2246, %v2411, -1e+30
        %v2413 = vsel %vm1776, %v2412, -inf
        %2414 = vmax.xlane.f32.xlu0 %v2413
        %v2415 = vpop.xlane.xlu0 %2414
        %v2416 = vsub.f32 %v2412, %v2415
        %v2417 = vmul.f32 %v2416, 1.442695
        %v2418 = vpow.pop %v2417
        %v2419 = vsel %vm1776, %v2418, 0.0
        %2420 = vadd.xlane.f32.xlu0 %v2419
        %v2421 = vpop.xlane.xlu0 %2420
        %v2422 = vrcp.pop %v2421
        %v2423 = vmul.f32 %v2418, %v2422
        %v2424 = vmul.f32 %v2423, %v2248
        %v2425 = vpack.c.bf16 %v2424, %v2424
        %2427 = vrot.lane.b32.xlu0 %v2251, 120
        %v2428 = vpop.permute.xlu0 %2427
        %v2430 = vsel %vm1776, %v2425, 0
        %v2433 = vsel %vm1841, %v2428, 0
        %2435 = vmatprep.subr.bf16.mxu0 0
        %2436 = vmatpush1.bf16.msra.mxu0 %v2433
        %2437 = vmatprep.subr.bf16.mxu0 0
        %2438 = vmatpush1.bf16.msra.mxu0 0
        %2439 = vmatprep.subr.bf16.mxu0 0
        %2440 = vmatpush1.bf16.msra.mxu0 0
        %2441 = vmatprep.subr.bf16.mxu0 0
        %2442 = vmatpush1.bf16.msra.mxu0 0
        %2443 = vmatprep.subr.bf16.mxu0 0
        %2444 = vmatpush1.bf16.msra.mxu0 0
        %2445 = vmatprep.subr.bf16.mxu0 0
        %2446 = vmatpush1.bf16.msra.mxu0 0
        %2447 = vmatprep.subr.bf16.mxu0 0
        %2448 = vmatpush1.bf16.msra.mxu0 0
        %2449 = vmatprep.subr.bf16.mxu0 0
        %2450 = vmatpush1.bf16.msra.mxu0 0
        %2451 = vmatprep.subr.bf16.mxu0 0
        %2452 = vmatpush1.bf16.msra.mxu0 0
        %2453 = vmatprep.subr.bf16.mxu0 0
        %2454 = vmatpush1.bf16.msra.mxu0 0
        %2455 = vmatprep.subr.bf16.mxu0 0
        %2456 = vmatpush1.bf16.msra.mxu0 0
        %2457 = vmatprep.subr.bf16.mxu0 0
        %2458 = vmatpush1.bf16.msra.mxu0 0
        %2459 = vmatprep.subr.bf16.mxu0 0
        %2460 = vmatpush1.bf16.msra.mxu0 0
        %2461 = vmatprep.subr.bf16.mxu0 0
        %2462 = vmatpush1.bf16.msra.mxu0 0
        %2463 = vmatprep.subr.bf16.mxu0 0
        %2464 = vmatpush1.bf16.msra.mxu0 0
        %2465 = vmatprep.subr.bf16.mxu0 0
        %2466 = vmatpush1.bf16.msra.mxu0 0
        %2467 = vmatprep.mubr.bf16.mxu0 0
        %2468 = vmatmul.mubr.bf16.gmra.mrb[0].mxu0 %v2430
        %v2469 = vpop.f32.mrb[0].mxu0
        %v2470 = vadd.f32 0.0, %v2469
        %v2471 = vpop.f32.mrb[0].mxu0
        %v2472 = vpop.f32.mrb[0].mxu0
        %v2473 = vpop.f32.mrb[0].mxu0
        %2474 = vdwg.mxu0
        %2475 = vrot.lane.b32.xlu0 %v2249, 112
        %v2476 = vpop.permute.xlu0 %2475
        %2477 = vrot.lane.b32.xlu0 %v2250, 112
        %v2478 = vpop.permute.xlu0 %2477
        %v2480 = vsel %vm1776, %v2476, 0
        %v2483 = vsel %vm1776, %v2478, 0
        %2485 = vmatprep.subr.bf16.mxu0 0
        %2486 = vmatpush1.bf16.xpose.msra.mxu0 %v2483
        %2487 = vmatprep.subr.bf16.mxu0 0
        %2488 = vmatpush1.bf16.xpose.msra.mxu0 0
        %2489 = vmatprep.subr.bf16.mxu0 0
        %2490 = vmatpush1.bf16.xpose.msra.mxu0 0
        %2491 = vmatprep.subr.bf16.mxu0 0
        %2492 = vmatpush1.bf16.xpose.msra.mxu0 0
        %2493 = vmatprep.subr.bf16.mxu0 0
        %2494 = vmatpush1.bf16.xpose.msra.mxu0 0
        %2495 = vmatprep.subr.bf16.mxu0 0
        %2496 = vmatpush1.bf16.xpose.msra.mxu0 0
        %2497 = vmatprep.subr.bf16.mxu0 0
        %2498 = vmatpush1.bf16.xpose.msra.mxu0 0
        %2499 = vmatprep.subr.bf16.mxu0 0
        %2500 = vmatpush1.bf16.xpose.msra.mxu0 0
        %2501 = vmatprep.subr.bf16.mxu0 0
        %2502 = vmatpush1.bf16.xpose.msra.mxu0 0
        %2503 = vmatprep.subr.bf16.mxu0 0
        %2504 = vmatpush1.bf16.xpose.msra.mxu0 0
        %2505 = vmatprep.subr.bf16.mxu0 0
        %2506 = vmatpush1.bf16.xpose.msra.mxu0 0
        %2507 = vmatprep.subr.bf16.mxu0 0
        %2508 = vmatpush1.bf16.xpose.msra.mxu0 0
        %2509 = vmatprep.subr.bf16.mxu0 0
        %2510 = vmatpush1.bf16.xpose.msra.mxu0 0
        %2511 = vmatprep.subr.bf16.mxu0 0
        %2512 = vmatpush1.bf16.xpose.msra.mxu0 0
        %2513 = vmatprep.subr.bf16.mxu0 0
        %2514 = vmatpush1.bf16.xpose.msra.mxu0 0
        %2515 = vmatprep.subr.bf16.mxu0 0
        %2516 = vmatpush1.bf16.xpose.msra.mxu0 0
        %2517 = vmatprep.mubr.bf16.mxu0 0
        %2518 = vmatmul.mubr.bf16.gmra.mrb[0].mxu0 %v2480
        %v2519 = vpop.f32.mrb[0].mxu0
        %v2520 = vadd.f32 0.0, %v2519
        %v2521 = vpop.f32.mrb[0].mxu0
        %v2522 = vpop.f32.mrb[0].mxu0
        %v2523 = vpop.f32.mrb[0].mxu0
        %2524 = vdwg.mxu0
        %v2525 = vmul.f32 %v2520, 0.35355338
        %v2526 = vsel %vm2246, %v2525, -1e+30
        %v2527 = vsel %vm1776, %v2526, -inf
        %2528 = vmax.xlane.f32.xlu0 %v2527
        %v2529 = vpop.xlane.xlu0 %2528
        %v2530 = vsub.f32 %v2526, %v2529
        %v2531 = vmul.f32 %v2530, 1.442695
        %v2532 = vpow.pop %v2531
        %v2533 = vsel %vm1776, %v2532, 0.0
        %2534 = vadd.xlane.f32.xlu0 %v2533
        %v2535 = vpop.xlane.xlu0 %2534
        %v2536 = vrcp.pop %v2535
        %v2537 = vmul.f32 %v2532, %v2536
        %v2538 = vmul.f32 %v2537, %v2248
        %v2539 = vpack.c.bf16 %v2538, %v2538
        %2540 = vrot.lane.b32.xlu0 %v2251, 112
        %v2541 = vpop.permute.xlu0 %2540
        %v2543 = vsel %vm1776, %v2539, 0
        %v2546 = vsel %vm1841, %v2541, 0
        %2548 = vmatprep.subr.bf16.mxu0 0
        %2549 = vmatpush1.bf16.msra.mxu0 %v2546
        %2550 = vmatprep.subr.bf16.mxu0 0
        %2551 = vmatpush1.bf16.msra.mxu0 0
        %2552 = vmatprep.subr.bf16.mxu0 0
        %2553 = vmatpush1.bf16.msra.mxu0 0
        %2554 = vmatprep.subr.bf16.mxu0 0
        %2555 = vmatpush1.bf16.msra.mxu0 0
        %2556 = vmatprep.subr.bf16.mxu0 0
        %2557 = vmatpush1.bf16.msra.mxu0 0
        %2558 = vmatprep.subr.bf16.mxu0 0
        %2559 = vmatpush1.bf16.msra.mxu0 0
        %2560 = vmatprep.subr.bf16.mxu0 0
        %2561 = vmatpush1.bf16.msra.mxu0 0
        %2562 = vmatprep.subr.bf16.mxu0 0
        %2563 = vmatpush1.bf16.msra.mxu0 0
        %2564 = vmatprep.subr.bf16.mxu0 0
        %2565 = vmatpush1.bf16.msra.mxu0 0
        %2566 = vmatprep.subr.bf16.mxu0 0
        %2567 = vmatpush1.bf16.msra.mxu0 0
        %2568 = vmatprep.subr.bf16.mxu0 0
        %2569 = vmatpush1.bf16.msra.mxu0 0
        %2570 = vmatprep.subr.bf16.mxu0 0
        %2571 = vmatpush1.bf16.msra.mxu0 0
        %2572 = vmatprep.subr.bf16.mxu0 0
        %2573 = vmatpush1.bf16.msra.mxu0 0
        %2574 = vmatprep.subr.bf16.mxu0 0
        %2575 = vmatpush1.bf16.msra.mxu0 0
        %2576 = vmatprep.subr.bf16.mxu0 0
        %2577 = vmatpush1.bf16.msra.mxu0 0
        %2578 = vmatprep.subr.bf16.mxu0 0
        %2579 = vmatpush1.bf16.msra.mxu0 0
        %2580 = vmatprep.mubr.bf16.mxu0 0
        %2581 = vmatmul.mubr.bf16.gmra.mrb[0].mxu0 %v2543
        %v2582 = vpop.f32.mrb[0].mxu0
        %v2583 = vadd.f32 0.0, %v2582
        %v2584 = vpop.f32.mrb[0].mxu0
        %v2585 = vpop.f32.mrb[0].mxu0
        %v2586 = vpop.f32.mrb[0].mxu0
        %2587 = vdwg.mxu0
        %2588 = vrot.lane.b32.xlu0 %v2249, 104
        %v2589 = vpop.permute.xlu0 %2588
        %2590 = vrot.lane.b32.xlu0 %v2250, 104
        %v2591 = vpop.permute.xlu0 %2590
        %v2593 = vsel %vm1776, %v2589, 0
        %v2596 = vsel %vm1776, %v2591, 0
        %2598 = vmatprep.subr.bf16.mxu0 0
        %2599 = vmatpush1.bf16.xpose.msra.mxu0 %v2596
        %2600 = vmatprep.subr.bf16.mxu0 0
        %2601 = vmatpush1.bf16.xpose.msra.mxu0 0
        %2602 = vmatprep.subr.bf16.mxu0 0
        %2603 = vmatpush1.bf16.xpose.msra.mxu0 0
        %2604 = vmatprep.subr.bf16.mxu0 0
        %2605 = vmatpush1.bf16.xpose.msra.mxu0 0
        %2606 = vmatprep.subr.bf16.mxu0 0
        %2607 = vmatpush1.bf16.xpose.msra.mxu0 0
        %2608 = vmatprep.subr.bf16.mxu0 0
        %2609 = vmatpush1.bf16.xpose.msra.mxu0 0
        %2610 = vmatprep.subr.bf16.mxu0 0
        %2611 = vmatpush1.bf16.xpose.msra.mxu0 0
        %2612 = vmatprep.subr.bf16.mxu0 0
        %2613 = vmatpush1.bf16.xpose.msra.mxu0 0
        %2614 = vmatprep.subr.bf16.mxu0 0
        %2615 = vmatpush1.bf16.xpose.msra.mxu0 0
        %2616 = vmatprep.subr.bf16.mxu0 0
        %2617 = vmatpush1.bf16.xpose.msra.mxu0 0
        %2618 = vmatprep.subr.bf16.mxu0 0
        %2619 = vmatpush1.bf16.xpose.msra.mxu0 0
        %2620 = vmatprep.subr.bf16.mxu0 0
        %2621 = vmatpush1.bf16.xpose.msra.mxu0 0
        %2622 = vmatprep.subr.bf16.mxu0 0
        %2623 = vmatpush1.bf16.xpose.msra.mxu0 0
        %2624 = vmatprep.subr.bf16.mxu0 0
        %2625 = vmatpush1.bf16.xpose.msra.mxu0 0
        %2626 = vmatprep.subr.bf16.mxu0 0
        %2627 = vmatpush1.bf16.xpose.msra.mxu0 0
        %2628 = vmatprep.subr.bf16.mxu0 0
        %2629 = vmatpush1.bf16.xpose.msra.mxu0 0
        %2630 = vmatprep.mubr.bf16.mxu0 0
        %2631 = vmatmul.mubr.bf16.gmra.mrb[0].mxu0 %v2593
        %v2632 = vpop.f32.mrb[0].mxu0
        %v2633 = vadd.f32 0.0, %v2632
        %v2634 = vpop.f32.mrb[0].mxu0
        %v2635 = vpop.f32.mrb[0].mxu0
        %v2636 = vpop.f32.mrb[0].mxu0
        %2637 = vdwg.mxu0
        %v2638 = vmul.f32 %v2633, 0.35355338
        %v2639 = vsel %vm2246, %v2638, -1e+30
        %v2640 = vsel %vm1776, %v2639, -inf
        %2641 = vmax.xlane.f32.xlu0 %v2640
        %v2642 = vpop.xlane.xlu0 %2641
        %v2643 = vsub.f32 %v2639, %v2642
        %v2644 = vmul.f32 %v2643, 1.442695
        %v2645 = vpow.pop %v2644
        %v2646 = vsel %vm1776, %v2645, 0.0
        %2647 = vadd.xlane.f32.xlu0 %v2646
        %v2648 = vpop.xlane.xlu0 %2647
        %v2649 = vrcp.pop %v2648
        %v2650 = vmul.f32 %v2645, %v2649
        %v2651 = vmul.f32 %v2650, %v2248
        %v2652 = vpack.c.bf16 %v2651, %v2651
        %2653 = vrot.lane.b32.xlu0 %v2251, 104
        %v2654 = vpop.permute.xlu0 %2653
        %v2656 = vsel %vm1776, %v2652, 0
        %v2659 = vsel %vm1841, %v2654, 0
        %2661 = vmatprep.subr.bf16.mxu0 0
        %2662 = vmatpush1.bf16.msra.mxu0 %v2659
        %2663 = vmatprep.subr.bf16.mxu0 0
        %2664 = vmatpush1.bf16.msra.mxu0 0
        %2665 = vmatprep.subr.bf16.mxu0 0
        %2666 = vmatpush1.bf16.msra.mxu0 0
        %2667 = vmatprep.subr.bf16.mxu0 0
        %2668 = vmatpush1.bf16.msra.mxu0 0
        %2669 = vmatprep.subr.bf16.mxu0 0
        %2670 = vmatpush1.bf16.msra.mxu0 0
        %2671 = vmatprep.subr.bf16.mxu0 0
        %2672 = vmatpush1.bf16.msra.mxu0 0
        %2673 = vmatprep.subr.bf16.mxu0 0
        %2674 = vmatpush1.bf16.msra.mxu0 0
        %2675 = vmatprep.subr.bf16.mxu0 0
        %2676 = vmatpush1.bf16.msra.mxu0 0
        %2677 = vmatprep.subr.bf16.mxu0 0
        %2678 = vmatpush1.bf16.msra.mxu0 0
        %2679 = vmatprep.subr.bf16.mxu0 0
        %2680 = vmatpush1.bf16.msra.mxu0 0
        %2681 = vmatprep.subr.bf16.mxu0 0
        %2682 = vmatpush1.bf16.msra.mxu0 0
        %2683 = vmatprep.subr.bf16.mxu0 0
        %2684 = vmatpush1.bf16.msra.mxu0 0
        %2685 = vmatprep.subr.bf16.mxu0 0
        %2686 = vmatpush1.bf16.msra.mxu0 0
        %2687 = vmatprep.subr.bf16.mxu0 0
        %2688 = vmatpush1.bf16.msra.mxu0 0
        %2689 = vmatprep.subr.bf16.mxu0 0
        %2690 = vmatpush1.bf16.msra.mxu0 0
        %2691 = vmatprep.subr.bf16.mxu0 0
        %2692 = vmatpush1.bf16.msra.mxu0 0
        %2693 = vmatprep.mubr.bf16.mxu0 0
        %2694 = vmatmul.mubr.bf16.gmra.mrb[0].mxu0 %v2656
        %v2695 = vpop.f32.mrb[0].mxu0
        %v2696 = vadd.f32 0.0, %v2695
        %v2697 = vpop.f32.mrb[0].mxu0
        %v2698 = vpop.f32.mrb[0].mxu0
        %v2699 = vpop.f32.mrb[0].mxu0
        %2700 = vdwg.mxu0
        %2702 = vrot.lane.b32.xlu0 %v2470, 8
        %v2703 = vpop.permute.xlu0 %2702
        %2706 = vrot.lane.b32.xlu0 %v2583, 16
        %v2707 = vpop.permute.xlu0 %2706
        %2710 = vrot.lane.b32.xlu0 %v2696, 24
        %v2711 = vpop.permute.xlu0 %2710
        %v2713 = vsel %vm1776, %v2354, %v2703
        %v2714 = vsel %vm2240, %v2713, %v2707
        %v2715 = vsel %vm2242, %v2714, %v2711
        %v2716 = vpack.c.bf16 %v2715, %v2243
        %v2717 = vld [vmem:[%s1381] sm:$0xf]
        %v2718 = vld [vmem:[%s1381 + $0x4] sm:$0xf]
        %v2719 = vld [vmem:[%s1381 + $0x8] sm:$0xf]
        %v2720 = vld [vmem:[%s1381 + $0xc] sm:$0xf]
        %v2725 = vunpack.c.l.b16 %v2717
        %v2726 = vunpack.c.l.b16 %v2718
        %v2727 = vunpack.c.l.b16 %v2719
        %v2728 = vunpack.c.l.b16 %v2720
        %v2729 = vpack.c.b16 %v2726, %v2725
        %v2730 = vpack.c.b16 %v2728, %v2727
        %v2734 = vsel %vm1526, %v2716, 0
        %2736 = vmatprep.subr.bf16.mxu0 0
        %2737 = vmatpush1.bf16.msra.mxu0 %v2729
        %2738 = vmatprep.subr.bf16.mxu0 0
        %2739 = vmatpush1.bf16.msra.mxu0 %v2730
        %2740 = vmatprep.subr.bf16.mxu0 0
        %2741 = vmatpush1.bf16.msra.mxu0 0
        %2742 = vmatprep.subr.bf16.mxu0 0
        %2743 = vmatpush1.bf16.msra.mxu0 0
        %2744 = vmatprep.subr.bf16.mxu0 0
        %2745 = vmatpush1.bf16.msra.mxu0 0
        %2746 = vmatprep.subr.bf16.mxu0 0
        %2747 = vmatpush1.bf16.msra.mxu0 0
        %2748 = vmatprep.subr.bf16.mxu0 0
        %2749 = vmatpush1.bf16.msra.mxu0 0
        %2750 = vmatprep.subr.bf16.mxu0 0
        %2751 = vmatpush1.bf16.msra.mxu0 0
        %2752 = vmatprep.subr.bf16.mxu0 0
        %2753 = vmatpush1.bf16.msra.mxu0 0
        %2754 = vmatprep.subr.bf16.mxu0 0
        %2755 = vmatpush1.bf16.msra.mxu0 0
        %2756 = vmatprep.subr.bf16.mxu0 0
        %2757 = vmatpush1.bf16.msra.mxu0 0
        %2758 = vmatprep.subr.bf16.mxu0 0
        %2759 = vmatpush1.bf16.msra.mxu0 0
        %2760 = vmatprep.subr.bf16.mxu0 0
        %2761 = vmatpush1.bf16.msra.mxu0 0
        %2762 = vmatprep.subr.bf16.mxu0 0
        %2763 = vmatpush1.bf16.msra.mxu0 0
        %2764 = vmatprep.subr.bf16.mxu0 0
        %2765 = vmatpush1.bf16.msra.mxu0 0
        %2766 = vmatprep.subr.bf16.mxu0 0
        %2767 = vmatpush1.bf16.msra.mxu0 0
        %2768 = vmatprep.mubr.bf16.mxu0 0
        %2769 = vmatmul.mubr.bf16.gmra.mrb[0].mxu0 %v2734
        %v2770 = vpop.f32.mrb[0].mxu0
        %v2771 = vadd.f32 0.0, %v2770
        %v2772 = vpop.f32.mrb[0].mxu0
        %v2773 = vpop.f32.mrb[0].mxu0
        %v2774 = vadd.f32 0.0, %v2773
        %v2775 = vpop.f32.mrb[0].mxu0
        %2776 = vdwg.mxu0
        %v2777 = vadd.f32 %v1522, %v2771
        %v2778 = vadd.f32 %v1523, %v2774
        %v2779 = vld [vmem:[%s1384] sm:$0x1]
        %v2781 = vlaneseq
        %v2782 = vshrl.u32 %v2781, 7
        %v2783 = vsub.s32 0, %v2782
        %v2784 = vrot.slane %v2779, %v2783
        %v2786 = vadd.f32 %v2777, %v2784
        %v2787 = vadd.f32 %v2778, %v2784
        %v2788 = vld [vmem:[%s1202] sm:$0x1]
        %v2789 = vld [vmem:[%s1210] sm:$0x1]
        %v2790 = vsel %vm1526, %v2786, 0.0
        %2791 = vadd.xlane.f32.xlu0 %v2790
        %v2792 = vpop.xlane.xlu0 %2791
        %v2793 = vsel %vm1526, %v2787, 0.0
        %2794 = vadd.xlane.f32.xlu0 %v2793
        %v2795 = vpop.xlane.xlu0 %2794
        %v2796 = vmul.f32 %v2792, %v1533
        %v2797 = vmul.f32 %v2795, %v1533
        %v2798 = vsub.f32 %v2786, %v2796
        %v2799 = vsub.f32 %v2787, %v2797
        %v2800 = vmul.f32 %v2798, %v2798
        %v2801 = vmul.f32 %v2799, %v2799
        %v2802 = vsel %vm1526, %v2800, 0.0
        %2803 = vadd.xlane.f32.xlu0 %v2802
        %v2804 = vpop.xlane.xlu0 %2803
        %v2805 = vsel %vm1526, %v2801, 0.0
        %2806 = vadd.xlane.f32.xlu0 %v2805
        %v2807 = vpop.xlane.xlu0 %2806
        %v2808 = vmul.f32 %v2804, %v1533
        %v2809 = vmul.f32 %v2807, %v1533
        %v2810 = vadd.f32 %v2808, 1e-12
        %v2811 = vadd.f32 %v2809, 1e-12
        %v2812 = vrsqrt.pop %v2810
        %v2813 = vrsqrt.pop %v2811
        %v2814 = vmul.f32 %v2798, %v2812
        %v2815 = vmul.f32 %v2799, %v2813
        %v2817 = vlaneseq
        %v2818 = vshrl.u32 %v2817, 7
        %v2819 = vsub.s32 0, %v2818
        %v2820 = vrot.slane %v2788, %v2819
        %v2822 = vmul.f32 %v2814, %v2820
        %v2823 = vmul.f32 %v2815, %v2820
        %v2825 = vlaneseq
        %v2826 = vshrl.u32 %v2825, 7
        %v2827 = vsub.s32 0, %v2826
        %v2828 = vrot.slane %v2789, %v2827
        %v2830 = vadd.f32 %v2822, %v2828
        %v2831 = vadd.f32 %v2823, %v2828
        %v2832 = vpack.c.bf16 %v2831, %v2830
        %v2833 = vld [vmem:[%s1389] sm:$0xf]
        %v2834 = vld [vmem:[%s1389 + $0x4] sm:$0xf]
        %v2835 = vld [vmem:[%s1389 + $0x8] sm:$0xf]
        %v2836 = vld [vmem:[%s1389 + $0xc] sm:$0xf]
        %v2837 = vld [vmem:[%s1218] sm:$0x1]
        %v2839 = vlaneseq
        %v2840 = vshrl.u32 %v2839, 7
        %v2841 = vsub.s32 0, %v2840
        %v2842 = vrot.slane %v2837, %v2841
        %v2848 = vunpack.c.l.b16 %v2833
        %v2849 = vunpack.c.l.b16 %v2834
        %v2850 = vunpack.c.l.b16 %v2835
        %v2851 = vunpack.c.l.b16 %v2836
        %v2852 = vpack.c.b16 %v2849, %v2848
        %v2853 = vpack.c.b16 %v2851, %v2850
        %v2857 = vsel %vm1526, %v2832, 0
        %2859 = vmatprep.subr.bf16.mxu0 0
        %2860 = vmatpush1.bf16.msra.mxu0 %v2852
        %2861 = vmatprep.subr.bf16.mxu0 0
        %2862 = vmatpush1.bf16.msra.mxu0 %v2853
        %2863 = vmatprep.subr.bf16.mxu0 0
        %2864 = vmatpush1.bf16.msra.mxu0 0
        %2865 = vmatprep.subr.bf16.mxu0 0
        %2866 = vmatpush1.bf16.msra.mxu0 0
        %2867 = vmatprep.subr.bf16.mxu0 0
        %2868 = vmatpush1.bf16.msra.mxu0 0
        %2869 = vmatprep.subr.bf16.mxu0 0
        %2870 = vmatpush1.bf16.msra.mxu0 0
        %2871 = vmatprep.subr.bf16.mxu0 0
        %2872 = vmatpush1.bf16.msra.mxu0 0
        %2873 = vmatprep.subr.bf16.mxu0 0
        %2874 = vmatpush1.bf16.msra.mxu0 0
        %2875 = vmatprep.subr.bf16.mxu0 0
        %2876 = vmatpush1.bf16.msra.mxu0 0
        %2877 = vmatprep.subr.bf16.mxu0 0
        %2878 = vmatpush1.bf16.msra.mxu0 0
        %2879 = vmatprep.subr.bf16.mxu0 0
        %2880 = vmatpush1.bf16.msra.mxu0 0
        %2881 = vmatprep.subr.bf16.mxu0 0
        %2882 = vmatpush1.bf16.msra.mxu0 0
        %2883 = vmatprep.subr.bf16.mxu0 0
        %2884 = vmatpush1.bf16.msra.mxu0 0
        %2885 = vmatprep.subr.bf16.mxu0 0
        %2886 = vmatpush1.bf16.msra.mxu0 0
        %2887 = vmatprep.subr.bf16.mxu0 0
        %2888 = vmatpush1.bf16.msra.mxu0 0
        %2889 = vmatprep.subr.bf16.mxu0 0
        %2890 = vmatpush1.bf16.msra.mxu0 0
        %2891 = vmatprep.mubr.bf16.mxu0 0
        %2892 = vmatmul.mubr.bf16.gmra.mrb[0].mxu0 %v2857
        %v2893 = vpop.f32.mrb[0].mxu0
        %v2894 = vadd.f32 %v2842, %v2893
        %v2895 = vpop.f32.mrb[0].mxu0
        %v2896 = vpop.f32.mrb[0].mxu0
        %v2897 = vadd.f32 %v2842, %v2896
        %v2898 = vpop.f32.mrb[0].mxu0
        %2899 = vdwg.mxu0
        %v2900 = vmax.f32 %v2894, 0.0
        %v2901 = vmax.f32 %v2897, 0.0
        %v2902 = vpack.c.bf16 %v2901, %v2900
        %v2903 = vld [vmem:[%s1394] sm:$0xf]
        %v2904 = vld [vmem:[%s1394 + $0x4] sm:$0xf]
        %v2905 = vld [vmem:[%s1394 + $0x8] sm:$0xf]
        %v2906 = vld [vmem:[%s1394 + $0xc] sm:$0xf]
        %v2907 = vld [vmem:[%s1394 + $0x10] sm:$0xf]
        %v2908 = vld [vmem:[%s1394 + $0x14] sm:$0xf]
        %v2909 = vld [vmem:[%s1394 + $0x18] sm:$0xf]
        %v2910 = vld [vmem:[%s1394 + $0x1c] sm:$0xf]
        %v2919 = vunpack.c.l.b16 %v2903
        %v2920 = vunpack.c.l.b16 %v2904
        %v2921 = vunpack.c.l.b16 %v2905
        %v2922 = vunpack.c.l.b16 %v2906
        %v2923 = vunpack.c.l.b16 %v2907
        %v2924 = vunpack.c.l.b16 %v2908
        %v2925 = vunpack.c.l.b16 %v2909
        %v2926 = vunpack.c.l.b16 %v2910
        %v2927 = vpack.c.b16 %v2920, %v2919
        %v2928 = vpack.c.b16 %v2922, %v2921
        %v2929 = vpack.c.b16 %v2924, %v2923
        %v2930 = vpack.c.b16 %v2926, %v2925
        %vm2935 = vcmask 523264
        %v2937 = vsel %vm2935, %v2902, 0
        %2939 = vmatprep.subr.bf16.mxu0 0
        %2940 = vmatpush1.bf16.msra.mxu0 %v2927
        %2941 = vmatprep.subr.bf16.mxu0 0
        %2942 = vmatpush1.bf16.msra.mxu0 %v2928
        %2943 = vmatprep.subr.bf16.mxu0 0
        %2944 = vmatpush1.bf16.msra.mxu0 %v2929
        %2945 = vmatprep.subr.bf16.mxu0 0
        %2946 = vmatpush1.bf16.msra.mxu0 %v2930
        %2947 = vmatprep.subr.bf16.mxu0 0
        %2948 = vmatpush1.bf16.msra.mxu0 0
        %2949 = vmatprep.subr.bf16.mxu0 0
        %2950 = vmatpush1.bf16.msra.mxu0 0
        %2951 = vmatprep.subr.bf16.mxu0 0
        %2952 = vmatpush1.bf16.msra.mxu0 0
        %2953 = vmatprep.subr.bf16.mxu0 0
        %2954 = vmatpush1.bf16.msra.mxu0 0
        %2955 = vmatprep.subr.bf16.mxu0 0
        %2956 = vmatpush1.bf16.msra.mxu0 0
        %2957 = vmatprep.subr.bf16.mxu0 0
        %2958 = vmatpush1.bf16.msra.mxu0 0
        %2959 = vmatprep.subr.bf16.mxu0 0
        %2960 = vmatpush1.bf16.msra.mxu0 0
        %2961 = vmatprep.subr.bf16.mxu0 0
        %2962 = vmatpush1.bf16.msra.mxu0 0
        %2963 = vmatprep.subr.bf16.mxu0 0
        %2964 = vmatpush1.bf16.msra.mxu0 0
        %2965 = vmatprep.subr.bf16.mxu0 0
        %2966 = vmatpush1.bf16.msra.mxu0 0
        %2967 = vmatprep.subr.bf16.mxu0 0
        %2968 = vmatpush1.bf16.msra.mxu0 0
        %2969 = vmatprep.subr.bf16.mxu0 0
        %2970 = vmatpush1.bf16.msra.mxu0 0
        %2971 = vmatprep.mubr.bf16.mxu0 0
        %2972 = vmatmul.mubr.bf16.gmra.mrb[0].mxu0 %v2937
        %v2973 = vpop.f32.mrb[0].mxu0
        %v2974 = vadd.f32 0.0, %v2973
        %v2975 = vpop.f32.mrb[0].mxu0
        %v2976 = vpop.f32.mrb[0].mxu0
        %v2977 = vadd.f32 0.0, %v2976
        %v2978 = vpop.f32.mrb[0].mxu0
        %2979 = vdwg.mxu0
        %v2980 = vadd.f32 %v2786, %v2974
        %v2981 = vadd.f32 %v2787, %v2977
        %v2982 = vld [vmem:[%s1226] sm:$0x1]
        %v2984 = vlaneseq
        %v2985 = vshrl.u32 %v2984, 7
        %v2986 = vsub.s32 0, %v2985
        %v2987 = vrot.slane %v2982, %v2986
        %v2989 = vadd.f32 %v2980, %v2987
        %v2990 = vadd.f32 %v2981, %v2987
        %2991 = vst.msk [vmem:[#allocation2] sm:$0xff] %vm1526, %v2989
        %2992 = vst.msk [vmem:[#allocation2 + $0x8] sm:$0xff] %vm1526, %v2990
        %p2993 = scmp.eq.s32.totalorder %s85, 1
        // Predicated region
        $region201: #{tpu_custom_call.1} parent=135 // pred_check
          %p2994 = pneg %p2993
        $region202: #{tpu_custom_call.1} parent=135 // pred_check_branch
          %2996 = sbr.rel (%p2994) target = $region204
        $region203: #{tpu_custom_call.1} parent=135 // pred_region
          %v2997 = vld [vmem:[%s47] sm:$0x1]
          %v2998 = vld [vmem:[%s49] sm:$0x1]
          %v2999 = vsel %vm1526, %v2989, 0.0
          %3000 = vadd.xlane.f32.xlu0 %v2999
          %v3001 = vpop.xlane.xlu0 %3000
          %v3002 = vsel %vm1526, %v2990, 0.0
          %3003 = vadd.xlane.f32.xlu0 %v3002
          %v3004 = vpop.xlane.xlu0 %3003
          %v3005 = vmul.f32 %v3001, %v1533
          %v3006 = vmul.f32 %v3004, %v1533
          %v3007 = vsub.f32 %v2989, %v3005
          %v3008 = vsub.f32 %v2990, %v3006
          %v3009 = vmul.f32 %v3007, %v3007
          %v3010 = vmul.f32 %v3008, %v3008
          %v3011 = vsel %vm1526, %v3009, 0.0
          %3012 = vadd.xlane.f32.xlu0 %v3011
          %v3013 = vpop.xlane.xlu0 %3012
          %v3014 = vsel %vm1526, %v3010, 0.0
          %3015 = vadd.xlane.f32.xlu0 %v3014
          %v3016 = vpop.xlane.xlu0 %3015
          %v3017 = vmul.f32 %v3013, %v1533
          %v3018 = vmul.f32 %v3016, %v1533
          %v3019 = vadd.f32 %v3017, 1e-12
          %v3020 = vadd.f32 %v3018, 1e-12
          %v3021 = vrsqrt.pop %v3019
          %v3022 = vrsqrt.pop %v3020
          %v3023 = vmul.f32 %v3007, %v3021
          %v3024 = vmul.f32 %v3008, %v3022
          %v3026 = vlaneseq
          %v3027 = vshrl.u32 %v3026, 7
          %v3028 = vsub.s32 0, %v3027
          %v3029 = vrot.slane %v2997, %v3028
          %v3031 = vmul.f32 %v3023, %v3029
          %v3032 = vmul.f32 %v3024, %v3029
          %v3034 = vlaneseq
          %v3035 = vshrl.u32 %v3034, 7
          %v3036 = vsub.s32 0, %v3035
          %v3037 = vrot.slane %v2998, %v3036
          %v3039 = vadd.f32 %v3031, %v3037
          %v3040 = vadd.f32 %v3032, %v3037
          %v3041 = vpack.c.bf16 %v3040, %v3039
          %v3042 = vld [vmem:[%s51] sm:$0xf]
          %v3043 = vld [vmem:[%s51 + $0x4] sm:$0xf]
          %v3044 = vld [vmem:[%s51 + $0x8] sm:$0xf]
          %v3045 = vld [vmem:[%s51 + $0xc] sm:$0xf]
          %v3046 = vld [vmem:[%s53] sm:$0x1]
          %v3048 = vlaneseq
          %v3049 = vshrl.u32 %v3048, 7
          %v3050 = vsub.s32 0, %v3049
          %v3051 = vrot.slane %v3046, %v3050
          %v3057 = vunpack.c.l.b16 %v3042
          %v3058 = vunpack.c.l.b16 %v3043
          %v3059 = vunpack.c.l.b16 %v3044
          %v3060 = vunpack.c.l.b16 %v3045
          %v3061 = vpack.c.b16 %v3058, %v3057
          %v3062 = vpack.c.b16 %v3060, %v3059
          %v3066 = vsel %vm1526, %v3041, 0
          %3068 = vmatprep.subr.bf16.mxu0 0
          %3069 = vmatpush1.bf16.msra.mxu0 %v3061
          %3070 = vmatprep.subr.bf16.mxu0 0
          %3071 = vmatpush1.bf16.msra.mxu0 %v3062
          %3072 = vmatprep.subr.bf16.mxu0 0
          %3073 = vmatpush1.bf16.msra.mxu0 0
          %3074 = vmatprep.subr.bf16.mxu0 0
          %3075 = vmatpush1.bf16.msra.mxu0 0
          %3076 = vmatprep.subr.bf16.mxu0 0
          %3077 = vmatpush1.bf16.msra.mxu0 0
          %3078 = vmatprep.subr.bf16.mxu0 0
          %3079 = vmatpush1.bf16.msra.mxu0 0
          %3080 = vmatprep.subr.bf16.mxu0 0
          %3081 = vmatpush1.bf16.msra.mxu0 0
          %3082 = vmatprep.subr.bf16.mxu0 0
          %3083 = vmatpush1.bf16.msra.mxu0 0
          %3084 = vmatprep.subr.bf16.mxu0 0
          %3085 = vmatpush1.bf16.msra.mxu0 0
          %3086 = vmatprep.subr.bf16.mxu0 0
          %3087 = vmatpush1.bf16.msra.mxu0 0
          %3088 = vmatprep.subr.bf16.mxu0 0
          %3089 = vmatpush1.bf16.msra.mxu0 0
          %3090 = vmatprep.subr.bf16.mxu0 0
          %3091 = vmatpush1.bf16.msra.mxu0 0
          %3092 = vmatprep.subr.bf16.mxu0 0
          %3093 = vmatpush1.bf16.msra.mxu0 0
          %3094 = vmatprep.subr.bf16.mxu0 0
          %3095 = vmatpush1.bf16.msra.mxu0 0
          %3096 = vmatprep.subr.bf16.mxu0 0
          %3097 = vmatpush1.bf16.msra.mxu0 0
          %3098 = vmatprep.subr.bf16.mxu0 0
          %3099 = vmatpush1.bf16.msra.mxu0 0
          %3100 = vmatprep.mubr.bf16.mxu0 0
          %3101 = vmatmul.mubr.bf16.gmra.mrb[0].mxu0 %v3066
          %v3102 = vpop.f32.mrb[0].mxu0
          %v3103 = vadd.f32 %v3051, %v3102
          %v3104 = vpop.f32.mrb[0].mxu0
          %v3105 = vpop.f32.mrb[0].mxu0
          %v3106 = vadd.f32 %v3051, %v3105
          %v3107 = vpop.f32.mrb[0].mxu0
          %3108 = vdwg.mxu0
          %v3109 = vtanh.pop %v3103
          %v3110 = vtanh.pop %v3106
          %v3111 = vld [vmem:[%s55] sm:$0x1]
          %v3113 = vlaneseq
          %v3114 = vshrl.u32 %v3113, 7
          %v3115 = vsub.s32 0, %v3114
          %v3116 = vrot.slane %v3111, %v3115
          %v3118 = vmul.f32 %v3109, %v3116
          %v3119 = vmul.f32 %v3110, %v3116
          %v3120 = vsel %vm1526, %v3118, 0.0
          %3121 = vadd.xlane.f32.xlu0 %v3120
          %v3122 = vpop.xlane.xlu0 %3121
          %v3123 = vsel %vm1526, %v3119, 0.0
          %3124 = vadd.xlane.f32.xlu0 %v3123
          %v3125 = vpop.xlane.xlu0 %3124
          %v3126 = vlaneseq
          %v3127 = vshrl.u32 %v3126, 7
          %s3128 = sld [smem:[#allocation4]]
          %v3129 = vstv %s3128
          %vm3130 = vcmp.lt.s32.totalorder %v3127, %v3129
          %v3131 = vsel %vm3130, %v3122, -1e+30
          %v3132 = vrot.slane %v3131, 4
          %v3133 = vmax.f32 %v3131, %v3132
          %v3134 = vrot.slane %v3133, 2
          %v3135 = vmax.f32 %v3133, %v3134
          %v3136 = vrot.slane %v3135, 1
          %v3137 = vmax.f32 %v3135, %v3136
          %v3138 = vsub.f32 %v3131, %v3137
          %v3139 = vmul.f32 %v3138, 1.442695
          %v3140 = vpow.pop %v3139
          %v3141 = vrot.slane %v3140, 4
          %v3142 = vadd.f32 %v3140, %v3141
          %v3143 = vrot.slane %v3142, 2
          %v3144 = vadd.f32 %v3142, %v3143
          %v3145 = vrot.slane %v3144, 1
          %v3146 = vadd.f32 %v3144, %v3145
          %v3147 = vrcp.pop %v3146
          %v3148 = vmul.f32 %v3140, %v3147
          %v3149 = vsel %vm3130, 1, 0
          %v3150 = vcvt.s32.f32 %v3149
          %v3151 = vmul.f32 %v3148, %v3150
          %v3152 = vmul.f32 %v3151, %v3039
          %v3153 = vsel %vm1526, %v3152, 0.0
          %v3154 = vrot.slane %v3153, 4
          %v3155 = vadd.f32 %v3153, %v3154
          %v3156 = vrot.slane %v3155, 2
          %v3157 = vadd.f32 %v3155, %v3156
          %v3158 = vrot.slane %v3157, 1
          %v3159 = vadd.f32 %v3157, %v3158
          %s3160 = sld [smem:[#allocation4 + $0x1]]
          %v3161 = vstv %s3160
          %vm3162 = vcmp.lt.s32.totalorder %v3127, %v3161
          %v3163 = vsel %vm3162, %v3125, -1e+30
          %v3164 = vrot.slane %v3163, 4
          %v3165 = vmax.f32 %v3163, %v3164
          %v3166 = vrot.slane %v3165, 2
          %v3167 = vmax.f32 %v3165, %v3166
          %v3168 = vrot.slane %v3167, 1
          %v3169 = vmax.f32 %v3167, %v3168
          %v3170 = vsub.f32 %v3163, %v3169
          %v3171 = vmul.f32 %v3170, 1.442695
          %v3172 = vpow.pop %v3171
          %v3173 = vrot.slane %v3172, 4
          %v3174 = vadd.f32 %v3172, %v3173
          %v3175 = vrot.slane %v3174, 2
          %v3176 = vadd.f32 %v3174, %v3175
          %v3177 = vrot.slane %v3176, 1
          %v3178 = vadd.f32 %v3176, %v3177
          %v3179 = vrcp.pop %v3178
          %v3180 = vmul.f32 %v3172, %v3179
          %v3181 = vsel %vm3162, 1, 0
          %v3182 = vcvt.s32.f32 %v3181
          %v3183 = vmul.f32 %v3180, %v3182
          %v3184 = vmul.f32 %v3183, %v3040
          %v3185 = vsel %vm1526, %v3184, 0.0
          %v3186 = vrot.slane %v3185, 4
          %v3187 = vadd.f32 %v3185, %v3186
          %v3188 = vrot.slane %v3187, 2
          %v3189 = vadd.f32 %v3187, %v3188
          %v3190 = vrot.slane %v3189, 1
          %v3191 = vadd.f32 %v3189, %v3190
          %vm3192 = vcmask 1040384
          %v3193 = vsel %vm3192, %v3159, %v3191
          %vm3194 = vcmask 254976
          %3195 = vst.msk [vmem:[#allocation25] sm:$0x3] %vm3194, %v3193
          %v3196 = vld [vmem:[%s57] sm:$0xff]
          %v3197 = vld [vmem:[%s57 + $0x8] sm:$0xff]
          %v3198 = vld [vmem:[%s57 + $0x10] sm:$0xff]
          %v3199 = vld [vmem:[%s57 + $0x18] sm:$0xff]
          %v3200 = vld [vmem:[%s59] sm:$0x1]
          %v3202 = vlaneseq
          %v3203 = vshrl.u32 %v3202, 7
          %v3204 = vsub.s32 0, %v3203
          %v3205 = vrot.slane %v3200, %v3204
          %v3208 = vsel %vm1526, %v3193, 0
          %3210 = vmatprep.subr.mxu0 0.0
          %3211 = vmatpush1.msra.mxu0 %v3196
          %3212 = vmatprep.subr.mxu0 0.0
          %3213 = vmatpush1.msra.mxu0 %v3197
          %3214 = vmatprep.subr.mxu0 0.0
          %3215 = vmatpush1.msra.mxu0 %v3198
          %3216 = vmatprep.subr.mxu0 0.0
          %3217 = vmatpush1.msra.mxu0 %v3199
          %3218 = vmatprep.subr.mxu0 0.0
          %3219 = vmatpush1.msra.mxu0 0.0
          %3220 = vmatprep.subr.mxu0 0.0
          %3221 = vmatpush1.msra.mxu0 0.0
          %3222 = vmatprep.subr.mxu0 0.0
          %3223 = vmatpush1.msra.mxu0 0.0
          %3224 = vmatprep.subr.mxu0 0.0
          %3225 = vmatpush1.msra.mxu0 0.0
          %3226 = vmatprep.subr.mxu0 0.0
          %3227 = vmatpush1.msra.mxu0 0.0
          %3228 = vmatprep.subr.mxu0 0.0
          %3229 = vmatpush1.msra.mxu0 0.0
          %3230 = vmatprep.subr.mxu0 0.0
          %3231 = vmatpush1.msra.mxu0 0.0
          %3232 = vmatprep.subr.mxu0 0.0
          %3233 = vmatpush1.msra.mxu0 0.0
          %3234 = vmatprep.subr.mxu0 0.0
          %3235 = vmatpush1.msra.mxu0 0.0
          %3236 = vmatprep.subr.mxu0 0.0
          %3237 = vmatpush1.msra.mxu0 0.0
          %3238 = vmatprep.subr.mxu0 0.0
          %3239 = vmatpush1.msra.mxu0 0.0
          %3240 = vmatprep.subr.mxu0 0.0
          %3241 = vmatpush1.msra.mxu0 0.0
          %3242 = vmatprep.subr.mxu0 0.0
          %3243 = vmatpush1.msra.mxu0 0.0
          %3244 = vmatprep.subr.mxu0 0.0
          %3245 = vmatpush1.msra.mxu0 0.0
          %3246 = vmatprep.subr.mxu0 0.0
          %3247 = vmatpush1.msra.mxu0 0.0
          %3248 = vmatprep.subr.mxu0 0.0
          %3249 = vmatpush1.msra.mxu0 0.0
          %3250 = vmatprep.subr.mxu0 0.0
          %3251 = vmatpush1.msra.mxu0 0.0
          %3252 = vmatprep.subr.mxu0 0.0
          %3253 = vmatpush1.msra.mxu0 0.0
          %3254 = vmatprep.subr.mxu0 0.0
          %3255 = vmatpush1.msra.mxu0 0.0
          %3256 = vmatprep.subr.mxu0 0.0
          %3257 = vmatpush1.msra.mxu0 0.0
          %3258 = vmatprep.subr.mxu0 0.0
          %3259 = vmatpush1.msra.mxu0 0.0
          %3260 = vmatprep.subr.mxu0 0.0
          %3261 = vmatpush1.msra.mxu0 0.0
          %3262 = vmatprep.subr.mxu0 0.0
          %3263 = vmatpush1.msra.mxu0 0.0
          %3264 = vmatprep.subr.mxu0 0.0
          %3265 = vmatpush1.msra.mxu0 0.0
          %3266 = vmatprep.subr.mxu0 0.0
          %3267 = vmatpush1.msra.mxu0 0.0
          %3268 = vmatprep.subr.mxu0 0.0
          %3269 = vmatpush1.msra.mxu0 0.0
          %3270 = vmatprep.subr.mxu0 0.0
          %3271 = vmatpush1.msra.mxu0 0.0
          %3272 = vmatprep.subr.mxu0 0.0
          %3273 = vmatpush1.msra.mxu0 0.0
          %3274 = vmatprep.mubr.f32.mxu0 0.0
          %3275 = vmatmul.mubr.f32.gmra.mrb[0].mxu0 %v3208
          %v3276 = vpop.f32.mrb[0].mxu0
          %v3277 = vadd.f32 %v3205, %v3276
          %v3278 = vpop.f32.mrb[0].mxu0
          %3279 = vdwg.mxu0
          %vm3280 = vcmask 33792
          %3281 = vst.msk [vmem:[#allocation26] sm:$0x3] %vm3280, %v3277
        $region204: #{tpu_custom_call.1} parent=135 // pred_fallthru
          _
        // Predicated region
        $region205: #{tpu_custom_call.1} parent=135 // pred_check
          %p3282 = pneg %p787
        $region206: #{tpu_custom_call.1} parent=135 // pred_check_branch
          %3284 = sbr.rel (%p3282) target = $region208
        $region207: #{tpu_custom_call.1} parent=135 // pred_region
          %s3286 = ssub.s32 32, 32
          %3287 = vsyncadd [#allocation7], %s3286
          %s3289 = sshll.u32 [#allocation25], 4
          %s3290 = int_to_ptr.vmem [resolvable:$true] %s3289
          %3292 = dma.vmem_to_hbm [thread:$0]  %s3290, 32, %s61, [#allocation7]
        $region208: #{tpu_custom_call.1} parent=135 // pred_fallthru
          _
        // Predicated region
        $region209: #{tpu_custom_call.1} parent=135 // pred_check
          %p3293 = pneg %p808
        $region210: #{tpu_custom_call.1} parent=135 // pred_check_branch
          %3295 = sbr.rel (%p3293) target = $region212
        $region211: #{tpu_custom_call.1} parent=135 // pred_region
          %s3297 = ssub.s32 32, 32
          %3298 = vsyncadd [#allocation27], %s3297
          %s3300 = sshll.u32 [#allocation26], 4
          %s3301 = int_to_ptr.vmem [resolvable:$true] %s3300
          %3303 = dma.vmem_to_hbm [thread:$0]  %s3301, 32, %s63, [#allocation27]
        $region212: #{tpu_custom_call.1} parent=135 // pred_fallthru
          _
        // Predicated region
        $region213: #{tpu_custom_call.1} parent=135 // pred_check
          %p3304 = pneg %p787
        $region214: #{tpu_custom_call.1} parent=135 // pred_check_branch
          %3306 = sbr.rel (%p3304) target = $region216
        $region215: #{tpu_custom_call.1} parent=135 // pred_region
          %3307 = dma.done [#allocation7], 32
        $region216: #{tpu_custom_call.1} parent=135 // pred_fallthru
          _
        // Predicated region
        $region217: #{tpu_custom_call.1} parent=135 // pred_check
          %p3308 = pneg %p808
        $region218: #{tpu_custom_call.1} parent=135 // pred_check_branch
          %3310 = sbr.rel (%p3308) target = $region220
        $region219: #{tpu_custom_call.1} parent=135 // pred_region
          %3311 = dma.done [#allocation27], 32
        $region220: #{tpu_custom_call.1} parent=135 // pred_fallthru
          _
      $region136: #{tpu_custom_call.1} parent=5 // pred_fallthru
        _
      %p3312 = scmp.le.s32.totalorder 2, %s80
      // Predicated region
      $region221: #{tpu_custom_call.1} parent=5 // pred_check
        %p3313 = pneg %p3312
      $region222: #{tpu_custom_call.1} parent=5 // pred_check_branch
        %3315 = sbr.rel (%p3313) target = $region224
      $region223: #{tpu_custom_call.1} parent=5 // pred_region
        %s3316 = ssub.s32 %s80, 2
      $region224: #{tpu_custom_call.1} parent=5 // pred_fallthru
        _
    $region6: #{tpu_custom_call.1} parent=1 // loop_footer
      %s84 = sadd.s32 1, %s80
    $region7: #{tpu_custom_call.1} parent=1 // loop_footer_branch
      %79 = sbr.rel target = $region3
    $region8: #{tpu_custom_call.1} parent=1 // loop_exit
      _
    %3317 = vsyncpa [#allocation6], 1
    %s3318 = scalar_lea.sflag [#allocation6], 1
    %3319 = vsyncpa %s3318, 1
    %3320 = vsyncpa [#allocation9], 1
    %3321 = vsyncpa [#allocation12], 1
    %3322 = vsyncpa [#allocation15], 1
    %3323 = vsyncpa [#allocation7], 1
    %s3324 = scalar_lea.sflag [#allocation7], 1
    %3325 = vsyncpa %s3324, 1
    %3326 = vsyncpa [#allocation27], 1

</llo_original>
